<compile_context>
chip_gen: v7x
topology: tpu7x:2x2x1
jax: 0.10.0
libtpu: 0.0.40
codegen_flags: <defaults>
</compile_context>

<pallas_src>
import functools

import jax
import jax.numpy as jnp
from jax.experimental import pallas as pl
from jax.experimental.pallas import tpu as pltpu

N_FEATURES = 256   # encoder feature width (densenet121 uses 1024; kept small)
PROJ_DIM = 128     # projector output dim (as in the module)
KH = KW = 3        # conv stem kernel size

TILE_B = 8         # batch tile: full 8-sublane output slabs; small enough that
                   # realistic fused batches (>=16) give >=2 parallel blocks
                   # so both v7x TensorCores are used.
MAX_TILE_P = 512   # spatial-patch tile cap (gridded reduction axis)
K_PAD = 32         # padded im2col contraction width (27 -> 32; was 128)


def _fused_kernel(patches_ref, wstem_ref, w1_ref, w2_ref, h_ref, z_ref,
                  acc_ref, *, inv_p):
    """Fused encoder-proxy + projector, gridded over (batch tile, P tile).

    patches: (TILE_B, TILE_P, K_PAD) bf16 im2col patch tile
    wstem:   (K_PAD, F)  bf16 conv-stem weights (resident)
    w1:      (F, F)      bf16 projector linear 1 (resident)
    w2:      (F, 128)    bf16 projector linear 2 (resident)
    h_out:   (TILE_B, F) f32 encoder features
    z_out:   (TILE_B, 128) f32 projector outputs
    acc:     (TILE_B, F) f32 pooling-sum accumulator (VMEM scratch)
    """
    p_idx = pl.program_id(1)

    @pl.when(p_idx == 0)
    def _():
        acc_ref[...] = jnp.zeros_like(acc_ref)

    tb, tp, kp = patches_ref.shape
    # Conv stem: one flattened (tb*tp, kp) x (kp, F) bf16 MXU matmul, f32 acc.
    s = jnp.dot(patches_ref[...].reshape(tb * tp, kp), wstem_ref[...],
                preferred_element_type=jnp.float32)
    s = jnp.maximum(s, 0.0)                       # ReLU in f32 on the VPU
    # Partial global-average-pool sum for this P tile into the f32 accumulator.
    # (Zero-padded P rows are neutral because ReLU(0)=0 and there is no bias.)
    acc_ref[...] += jnp.sum(s.reshape(tb, tp, -1), axis=1)

    @pl.when(p_idx == pl.num_programs(1) - 1)
    def _():
        h = acc_ref[...] * inv_p                  # finish the mean (true P)
        h_ref[...] = h.astype(h_ref.dtype)
        # Projector: Linear(F,F,no bias) -> ReLU -> Linear(F,128,no bias)
        a = jnp.maximum(
            jnp.dot(h.astype(w1_ref.dtype), w1_ref[...],
                    preferred_element_type=jnp.float32), 0.0)
        z = jnp.dot(a.astype(w2_ref.dtype), w2_ref[...],
                    preferred_element_type=jnp.float32)
        z_ref[...] = z.astype(z_ref.dtype)


def _im2col_bf16(x_nchw):
    """(B, C, H, W) NCHW -> (B, H*W, C*KH*KW) bf16 patches, SAME pad, stride 1.

    Casts to bf16 FIRST so the padded/shifted patch tensor is only ever written
    once, in bf16 (half the HBM bytes of the old pad-in-f32-then-cast path).
    """
    x = x_nchw.astype(jnp.bfloat16)
    B, C, H, W = x.shape
    xp = jnp.pad(x, ((0, 0), (0, 0), (1, 1), (1, 1)))
    cols = []
    for dh in range(KH):
        for dw in range(KW):
            cols.append(xp[:, :, dh:dh + H, dw:dw + W])        # (B, C, H, W)
    patches = jnp.stack(cols, axis=2)                          # (B, C, KH*KW, H, W)
    patches = patches.transpose(0, 3, 4, 1, 2)                 # (B, H, W, C, KH*KW)
    return patches.reshape(B, H * W, C * KH * KW)


def encode_and_project(x_nchw, params):
    """Runs the fused Pallas kernel on a (fused-view) batch. Returns (h, z)."""
    # TODO(synk): im2col still materializes ~9x the image in HBM; the next step
    # is to DMA the raw spatially-padded NCHW image (halo BlockSpec / pl.ANY)
    # and build the 9 shifted taps inside the kernel.
    patches = _im2col_bf16(x_nchw)                             # (B2, P, K) bf16
    B2, P, K = patches.shape
    assert K <= K_PAD

    b_pad = pl.cdiv(B2, TILE_B) * TILE_B
    if P <= MAX_TILE_P:
        tile_p = max(8, pl.cdiv(P, 8) * 8)                     # one full-P block
        p_pad = tile_p
    else:
        tile_p = MAX_TILE_P
        p_pad = pl.cdiv(P, tile_p) * tile_p

    patches = jnp.pad(
        patches, ((0, b_pad - B2), (0, p_pad - P), (0, K_PAD - K)))

    w_stem = jnp.pad(params["w_stem"].astype(jnp.bfloat16),
                     ((0, K_PAD - K), (0, 0)))
    w1 = params["w1"].astype(jnp.bfloat16)
    w2 = params["w2"].astype(jnp.bfloat16)

    grid = (b_pad // TILE_B, p_pad // tile_p)

    flops = (2 * b_pad * p_pad * K_PAD * N_FEATURES
             + 2 * b_pad * (N_FEATURES * N_FEATURES + N_FEATURES * PROJ_DIM))
    bytes_accessed = (patches.size * 2 + w_stem.size * 2 + w1.size * 2
                      + w2.size * 2 + b_pad * (N_FEATURES + PROJ_DIM) * 4)

    kernel = functools.partial(_fused_kernel, inv_p=1.0 / float(P))

    h, z = pl.pallas_call(
        kernel,
        out_shape=(
            jax.ShapeDtypeStruct((b_pad, N_FEATURES), jnp.float32),
            jax.ShapeDtypeStruct((b_pad, PROJ_DIM), jnp.float32),
        ),
        grid_spec=pltpu.PrefetchScalarGridSpec(
            num_scalar_prefetch=0,
            grid=grid,
            in_specs=[
                # Last block dim K_PAD=32 equals the full array dim -> legal;
                # HBM reads stay dense (no 27->128 zero-lane traffic).
                pl.BlockSpec((TILE_B, tile_p, K_PAD), lambda b, p: (b, p, 0)),
                pl.BlockSpec((K_PAD, N_FEATURES), lambda b, p: (0, 0)),
                pl.BlockSpec((N_FEATURES, N_FEATURES), lambda b, p: (0, 0)),
                pl.BlockSpec((N_FEATURES, PROJ_DIM), lambda b, p: (0, 0)),
            ],
            out_specs=(
                pl.BlockSpec((TILE_B, N_FEATURES), lambda b, p: (b, 0)),
                pl.BlockSpec((TILE_B, PROJ_DIM), lambda b, p: (b, 0)),
            ),
            scratch_shapes=[pltpu.VMEM((TILE_B, N_FEATURES), jnp.float32)],
        ),
        compiler_params=pltpu.CompilerParams(
            # P (reduction) axis must stay innermost for the acc init/finalize.
            dimension_semantics=("parallel", "arbitrary"),
            # ~4 MiB actually used; explicit limit mainly for v5e's 16 MiB
            # default scoped VMEM, and still well under v7x's 64 MiB physical.
            vmem_limit_bytes=32 * 1024 * 1024,
        ),
        cost_estimate=pl.CostEstimate(
            flops=flops, transcendentals=0, bytes_accessed=bytes_accessed),
    )(patches, w_stem, w1, w2)
    return h[:B2], z[:B2]


def create_model_forward(x_i, x_j, params):
    """Mirrors CreateModel.forward: returns (h_i, h_j, z_i, z_j)."""
    B = x_i.shape[0]
    x = jnp.concatenate([x_i, x_j], axis=0)       # fuse both views into one call
    h, z = encode_and_project(x, params)
    return h[:B], h[B:], z[:B], z[B:]


def init_params(key, in_channels):
    k0, k1, k2 = jax.random.split(key, 3)
    kdim = in_channels * KH * KW
    return {
        "w_stem": jax.random.normal(k0, (kdim, N_FEATURES), jnp.float32)
                  * (1.0 / jnp.sqrt(kdim)),
        "w1": jax.random.normal(k1, (N_FEATURES, N_FEATURES), jnp.float32)
              * (1.0 / jnp.sqrt(N_FEATURES)),
        "w2": jax.random.normal(k2, (N_FEATURES, PROJ_DIM), jnp.float32)
              * (1.0 / jnp.sqrt(N_FEATURES)),
    }


if __name__ == "__main__":
    key = jax.random.PRNGKey(0)
    kx, ky, kp = jax.random.split(key, 3)

    B, C, H, W = 2, 3, 16, 16          # NCHW, like the PyTorch module
    x_i = jax.random.normal(kx, (B, C, H, W), jnp.float32)
    x_j = jax.random.normal(ky, (B, C, H, W), jnp.float32)
    params = init_params(kp, C)

    fwd = jax.jit(create_model_forward)
    h_i, h_j, z_i, z_j = fwd(x_i, x_j, params)
    jax.block_until_ready((h_i, h_j, z_i, z_j))

    # Sanity checks on shapes and against a pure-JAX reference that mirrors the
    # kernel's bf16 operand rounding (accumulation stays f32 in both).
    assert h_i.shape == (B, N_FEATURES) and h_j.shape == (B, N_FEATURES)
    assert z_i.shape == (B, PROJ_DIM) and z_j.shape == (B, PROJ_DIM)

    def ref_encode_project(x):
        bf = lambda a: a.astype(jnp.bfloat16).astype(jnp.float32)
        p = _im2col_bf16(x).astype(jnp.float32)
        s = jnp.maximum(
            jnp.einsum("bpk,kf->bpf", p, bf(params["w_stem"]),
                       preferred_element_type=jnp.float32), 0.0)
        h = jnp.mean(s, axis=1)
        a = jnp.maximum(
            jnp.einsum("bf,fg->bg", bf(h), bf(params["w1"]),
                       preferred_element_type=jnp.float32), 0.0)
        z = jnp.einsum("bf,fg->bg", bf(a), bf(params["w2"]),
                       preferred_element_type=jnp.float32)
        return h, z

    rh_i, rz_i = ref_encode_project(x_i)
    rh_j, rz_j = ref_encode_project(x_j)
    assert jnp.allclose(h_i, rh_i, atol=1e-3, rtol=1e-3)
    assert jnp.allclose(z_i, rz_i, atol=1e-3, rtol=1e-3)
    assert jnp.allclose(h_j, rh_j, atol=1e-3, rtol=1e-3)
    assert jnp.allclose(z_j, rz_j, atol=1e-3, rtol=1e-3)

    print("KERNEL_OK")
</pallas_src>

<mosaic_0001>
module attributes {stable_mosaic.version = 11 : i64} {
  func.func @_fused_kernel(%arg0: i32, %arg1: i32, %arg2: memref<8x256x32xbf16, #tpu.memory_space<vmem>>, %arg3: memref<32x256xbf16, #tpu.memory_space<vmem>>, %arg4: memref<256x256xbf16, #tpu.memory_space<vmem>>, %arg5: memref<256x128xbf16, #tpu.memory_space<vmem>>, %arg6: memref<8x256xf32, #tpu.memory_space<vmem>>, %arg7: memref<8x128xf32, #tpu.memory_space<vmem>>, %arg8: memref<8x256xf32, #tpu.memory_space<vmem>>) attributes {dimension_semantics = [#tpu.dimension_semantics<parallel>, #tpu.dimension_semantics<arbitrary>], iteration_bounds = array<i64: 1, 1>, scalar_prefetch = 0 : i64, scratch_operands = 1 : i64, tpu.core_type = #tpu.core_type<tc>, window_params = [{transform_indices = @transform_0, window_bounds = array<i64: 8, 256, 32>}, {pipeline_mode = #tpu.pipeline_mode<synchronous>, transform_indices = @transform_1, window_bounds = array<i64: 32, 256>}, {pipeline_mode = #tpu.pipeline_mode<synchronous>, transform_indices = @transform_2, window_bounds = array<i64: 256, 256>}, {pipeline_mode = #tpu.pipeline_mode<synchronous>, transform_indices = @transform_3, window_bounds = array<i64: 256, 128>}, {transform_indices = @transform_4, window_bounds = array<i64: 8, 256>}, {transform_indices = @transform_5, window_bounds = array<i64: 8, 128>}]} {
    %c0_i32 = arith.constant 0 : i32
    %0 = arith.cmpi eq, %arg1, %c0_i32 : i32
    %1 = arith.extui %0 : i1 to i32
    %c0_i32_0 = arith.constant 0 : i32
    %2 = arith.cmpi ne, %1, %c0_i32_0 : i32
    scf.if %2 {
      %cst_13 = arith.constant 0.000000e+00 : f32
      %17 = vector.broadcast %cst_13 : f32 to vector<8x256xf32>
      %c0_14 = arith.constant 0 : index
      %c0_15 = arith.constant 0 : index
      %18 = vector.load %arg8[%c0_14, %c0_15] : memref<8x256xf32, #tpu.memory_space<vmem>>, vector<8x256xf32>
      tpu.vector_store %arg8[%c0_14, %c0_15], %17 {strides = array<i32>} : memref<8x256xf32, #tpu.memory_space<vmem>>, vector<8x256xf32>,
    } else {
    }
    %c0 = arith.constant 0 : index
    %c0_1 = arith.constant 0 : index
    %c0_2 = arith.constant 0 : index
    %3 = vector.load %arg2[%c0, %c0_1, %c0_2] : memref<8x256x32xbf16, #tpu.memory_space<vmem>>, vector<8x256x32xbf16>
    %4 = vector.shape_cast %3 : vector<8x256x32xbf16> to vector<2048x32xbf16>
    %c0_3 = arith.constant 0 : index
    %c0_4 = arith.constant 0 : index
    %5 = vector.load %arg3[%c0_3, %c0_4] : memref<32x256xbf16, #tpu.memory_space<vmem>>, vector<32x256xbf16>
    %cst = arith.constant dense<0.000000e+00> : vector<2048x256xf32>
    %6 = tpu.matmul %4, %5, %cst {dimension_numbers = #tpu.dot_dimension_numbers<[1], [0], [0], [1], [0, 0, 1, 1], [], []>} : vector<2048x32xbf16>, vector<32x256xbf16>, vector<2048x256xf32> -> vector<2048x256xf32>
    %cst_5 = arith.constant 0.000000e+00 : f32
    %7 = vector.broadcast %cst_5 : f32 to vector<2048x256xf32>
    %8 = arith.maximumf %6, %7 : vector<2048x256xf32>
    %c0_6 = arith.constant 0 : index
    %c0_7 = arith.constant 0 : index
    %9 = vector.load %arg8[%c0_6, %c0_7] : memref<8x256xf32, #tpu.memory_space<vmem>>, vector<8x256xf32>
    %10 = vector.shape_cast %8 : vector<2048x256xf32> to vector<8x256x256xf32>
    %cst_8 = arith.constant dense<0.000000e+00> : vector<8x256xf32>
    %11 = vector.multi_reduction <add>, %10, %cst_8 [1] : vector<8x256x256xf32> to vector<8x256xf32>
    %12 = arith.addf %9, %11 : vector<8x256xf32>
    %c0_9 = arith.constant 0 : index
    %c0_10 = arith.constant 0 : index
    %13 = vector.load %arg8[%c0_9, %c0_10] : memref<8x256xf32, #tpu.memory_space<vmem>>, vector<8x256xf32>
    tpu.vector_store %arg8[%c0_9, %c0_10], %12 {strides = array<i32>} : memref<8x256xf32, #tpu.memory_space<vmem>>, vector<8x256xf32>,
    %c0_i32_11 = arith.constant 0 : i32
    %14 = arith.cmpi eq, %arg1, %c0_i32_11 : i32
    %15 = arith.extui %14 : i1 to i32
    %c0_i32_12 = arith.constant 0 : i32
    %16 = arith.cmpi ne, %15, %c0_i32_12 : i32
    scf.if %16 {
      %c0_13 = arith.constant 0 : index
      %c0_14 = arith.constant 0 : index
      %17 = vector.load %arg8[%c0_13, %c0_14] : memref<8x256xf32, #tpu.memory_space<vmem>>, vector<8x256xf32>
      %cst_15 = arith.constant 3.906250e-03 : f32
      %18 = vector.broadcast %cst_15 : f32 to vector<8x256xf32>
      %19 = arith.mulf %17, %18 : vector<8x256xf32>
      %c0_16 = arith.constant 0 : index
      %c0_17 = arith.constant 0 : index
      %20 = vector.load %arg6[%c0_16, %c0_17] : memref<8x256xf32, #tpu.memory_space<vmem>>, vector<8x256xf32>
      tpu.vector_store %arg6[%c0_16, %c0_17], %19 {strides = array<i32>} : memref<8x256xf32, #tpu.memory_space<vmem>>, vector<8x256xf32>,
      %21 = arith.truncf %19 : vector<8x256xf32> to vector<8x256xbf16>
      %c0_18 = arith.constant 0 : index
      %c0_19 = arith.constant 0 : index
      %22 = vector.load %arg4[%c0_18, %c0_19] : memref<256x256xbf16, #tpu.memory_space<vmem>>, vector<256x256xbf16>
      %cst_20 = arith.constant dense<0.000000e+00> : vector<8x256xf32>
      %23 = tpu.matmul %21, %22, %cst_20 {dimension_numbers = #tpu.dot_dimension_numbers<[1], [0], [0], [1], [0, 0, 1, 1], [], []>} : vector<8x256xbf16>, vector<256x256xbf16>, vector<8x256xf32> -> vector<8x256xf32>
      %cst_21 = arith.constant 0.000000e+00 : f32
      %24 = vector.broadcast %cst_21 : f32 to vector<8x256xf32>
      %25 = arith.maximumf %23, %24 : vector<8x256xf32>
      %26 = arith.truncf %25 : vector<8x256xf32> to vector<8x256xbf16>
      %c0_22 = arith.constant 0 : index
      %c0_23 = arith.constant 0 : index
      %27 = vector.load %arg5[%c0_22, %c0_23] : memref<256x128xbf16, #tpu.memory_space<vmem>>, vector<256x128xbf16>
      %cst_24 = arith.constant dense<0.000000e+00> : vector<8x128xf32>
      %28 = tpu.matmul %26, %27, %cst_24 {dimension_numbers = #tpu.dot_dimension_numbers<[1], [0], [0], [1], [0, 0, 1, 1], [], []>} : vector<8x256xbf16>, vector<256x128xbf16>, vector<8x128xf32> -> vector<8x128xf32>
      %c0_25 = arith.constant 0 : index
      %c0_26 = arith.constant 0 : index
      %29 = vector.load %arg7[%c0_25, %c0_26] : memref<8x128xf32, #tpu.memory_space<vmem>>, vector<8x128xf32>
      tpu.vector_store %arg7[%c0_25, %c0_26], %28 {strides = array<i32>} : memref<8x128xf32, #tpu.memory_space<vmem>>, vector<8x128xf32>,
    } else {
    }
    return
  }
  func.func @transform_0(%arg0: i32, %arg1: i32) -> (i32, i32, i32) {
    %c0_i32 = arith.constant 0 : i32
    %c0_i32_0 = arith.constant 0 : i32
    return %arg0, %arg1, %c0_i32 : i32, i32, i32
  }
  func.func @transform_1(%arg0: i32, %arg1: i32) -> (i32, i32) {
    %c0_i32 = arith.constant 0 : i32
    %c0_i32_0 = arith.constant 0 : i32
    %c0_i32_1 = arith.constant 0 : i32
    return %c0_i32, %c0_i32_0 : i32, i32
  }
  func.func @transform_2(%arg0: i32, %arg1: i32) -> (i32, i32) {
    %c0_i32 = arith.constant 0 : i32
    %c0_i32_0 = arith.constant 0 : i32
    %c0_i32_1 = arith.constant 0 : i32
    return %c0_i32, %c0_i32_0 : i32, i32
  }
  func.func @transform_3(%arg0: i32, %arg1: i32) -> (i32, i32) {
    %c0_i32 = arith.constant 0 : i32
    %c0_i32_0 = arith.constant 0 : i32
    %c0_i32_1 = arith.constant 0 : i32
    return %c0_i32, %c0_i32_0 : i32, i32
  }
  func.func @transform_4(%arg0: i32, %arg1: i32) -> (i32, i32) {
    %c0_i32 = arith.constant 0 : i32
    %c0_i32_0 = arith.constant 0 : i32
    return %arg0, %c0_i32 : i32, i32
  }
  func.func @transform_5(%arg0: i32, %arg1: i32) -> (i32, i32) {
    %c0_i32 = arith.constant 0 : i32
    %c0_i32_0 = arith.constant 0 : i32
    return %arg0, %c0_i32 : i32, i32
  }
}

</mosaic_0001>

<llo_original>
// kernel: create_model_forward.1
$region0: #{create_model_forward.1}
  #allocation0 [shape = 'u32[]', space=smem, size = 0x4, offset = 0x4, fixed_abs, tag = 'smem constant byte address 0x4 - core index']
  #allocation1 [shape = 'u32[144,128]{1,0:T(1,128)}', space=vmem, size = 0x12000, scoped, tag = 'internal scratch']
  #allocation2 [shape = 'f32[8,256]{1,0:T(8,128)}', space=vmem, size = 0x2000, scoped, tag = 'scratch operand']
  %s0 = inlined_call_operand.vmem [shape: bf16[8,256,32], index: 0, kind: input, shape index: {}]
  %s1 = inlined_call_operand.vmem [shape: bf16[32,256], index: 1, kind: input, shape index: {}]
  %s2 = inlined_call_operand.vmem [shape: bf16[256,256], index: 2, kind: input, shape index: {}]
  %s3 = inlined_call_operand.vmem [shape: bf16[256,128], index: 3, kind: input, shape index: {}]
  %s4 = inlined_call_operand.vmem [shape: f32[8,256], index: 4, kind: output, shape index: {0}]
  %s5 = inlined_call_operand.vmem [shape: f32[8,128], index: 5, kind: output, shape index: {1}]
  %6 = xla_tuple %s4, %s5
  %s7 = sld [smem:[#allocation0]]
  $region42: #{create_model_forward.1} parent=0
    _
  %s9 = ssub.s32 1, %s7
  %s10 = scalar_select 0, %s9, %s7
  // Predicated region
  $region2: #{create_model_forward.1} parent=0 // pred_check
    _
  $region3: #{create_model_forward.1} parent=0 // pred_check_branch
    %12 = sbr.rel (0) target = $region5
  $region4: #{create_model_forward.1} parent=0 // pred_region
    _
  $region5: #{create_model_forward.1} parent=0 // pred_fallthru
    _
  // Predicated region
  $region6: #{create_model_forward.1} parent=0 // pred_check
    _
  $region7: #{create_model_forward.1} parent=0 // pred_check_branch
    %14 = sbr.rel (0) target = $region9
  $region8: #{create_model_forward.1} parent=0 // pred_region
    _
  $region9: #{create_model_forward.1} parent=0 // pred_fallthru
    _
  // Predicated region
  $region10: #{create_model_forward.1} parent=0 // pred_check
    _
  $region11: #{create_model_forward.1} parent=0 // pred_check_branch
    %16 = sbr.rel (0) target = $region13
  $region12: #{create_model_forward.1} parent=0 // pred_region
    _
  $region13: #{create_model_forward.1} parent=0 // pred_fallthru
    _
  // Predicated region
  $region14: #{create_model_forward.1} parent=0 // pred_check
    _
  $region15: #{create_model_forward.1} parent=0 // pred_check_branch
    %18 = sbr.rel (0) target = $region17
  $region16: #{create_model_forward.1} parent=0 // pred_region
    _
  $region17: #{create_model_forward.1} parent=0 // pred_fallthru
    _
  %p20 = scmp.eq.s32.totalorder 0, 0
  // Predicated region
  $region18: #{create_model_forward.1} parent=0 // pred_check
    %p21 = pneg %p20
  $region19: #{create_model_forward.1} parent=0 // pred_check_branch
    %23 = sbr.rel (%p21) target = $region21
  $region20: #{create_model_forward.1} parent=0 // pred_region
    %24 = vst [vmem:[#allocation2] sm:$0xff] 0.0
    %25 = vst [vmem:[#allocation2 + $0x8] sm:$0xff] 0.0
  $region21: #{create_model_forward.1} parent=0 // pred_fallthru
    _
  %v26 = vld [vmem:[%s0] sm:$0xf]
  %v27 = vld [vmem:[%s0 + $0x4] sm:$0xf]
  %v28 = vld [vmem:[%s0 + $0x8] sm:$0xf]
  %v29 = vld [vmem:[%s0 + $0xc] sm:$0xf]
  %v30 = vld [vmem:[%s0 + $0x10] sm:$0xf]
  %v31 = vld [vmem:[%s0 + $0x14] sm:$0xf]
  %v32 = vld [vmem:[%s0 + $0x18] sm:$0xf]
  %v33 = vld [vmem:[%s0 + $0x1c] sm:$0xf]
  %v34 = vld [vmem:[%s0 + $0x20] sm:$0xf]
  %v35 = vld [vmem:[%s0 + $0x24] sm:$0xf]
  %v36 = vld [vmem:[%s0 + $0x28] sm:$0xf]
  %v37 = vld [vmem:[%s0 + $0x2c] sm:$0xf]
  %v38 = vld [vmem:[%s0 + $0x30] sm:$0xf]
  %v39 = vld [vmem:[%s0 + $0x34] sm:$0xf]
  %v40 = vld [vmem:[%s0 + $0x38] sm:$0xf]
  %v41 = vld [vmem:[%s0 + $0x3c] sm:$0xf]
  %v42 = vld [vmem:[%s0 + $0x40] sm:$0xf]
  %v43 = vld [vmem:[%s0 + $0x44] sm:$0xf]
  %v44 = vld [vmem:[%s0 + $0x48] sm:$0xf]
  %v45 = vld [vmem:[%s0 + $0x4c] sm:$0xf]
  %v46 = vld [vmem:[%s0 + $0x50] sm:$0xf]
  %v47 = vld [vmem:[%s0 + $0x54] sm:$0xf]
  %v48 = vld [vmem:[%s0 + $0x58] sm:$0xf]
  %v49 = vld [vmem:[%s0 + $0x5c] sm:$0xf]
  %v50 = vld [vmem:[%s0 + $0x60] sm:$0xf]
  %v51 = vld [vmem:[%s0 + $0x64] sm:$0xf]
  %v52 = vld [vmem:[%s0 + $0x68] sm:$0xf]
  %v53 = vld [vmem:[%s0 + $0x6c] sm:$0xf]
  %v54 = vld [vmem:[%s0 + $0x70] sm:$0xf]
  %v55 = vld [vmem:[%s0 + $0x74] sm:$0xf]
  %v56 = vld [vmem:[%s0 + $0x78] sm:$0xf]
  %v57 = vld [vmem:[%s0 + $0x7c] sm:$0xf]
  %v58 = vld [vmem:[%s0 + $0x80] sm:$0xf]
  %v59 = vld [vmem:[%s0 + $0x84] sm:$0xf]
  %v60 = vld [vmem:[%s0 + $0x88] sm:$0xf]
  %v61 = vld [vmem:[%s0 + $0x8c] sm:$0xf]
  %v62 = vld [vmem:[%s0 + $0x90] sm:$0xf]
  %v63 = vld [vmem:[%s0 + $0x94] sm:$0xf]
  %v64 = vld [vmem:[%s0 + $0x98] sm:$0xf]
  %v65 = vld [vmem:[%s0 + $0x9c] sm:$0xf]
  %v66 = vld [vmem:[%s0 + $0xa0] sm:$0xf]
  %v67 = vld [vmem:[%s0 + $0xa4] sm:$0xf]
  %v68 = vld [vmem:[%s0 + $0xa8] sm:$0xf]
  %v69 = vld [vmem:[%s0 + $0xac] sm:$0xf]
  %v70 = vld [vmem:[%s0 + $0xb0] sm:$0xf]
  %v71 = vld [vmem:[%s0 + $0xb4] sm:$0xf]
  %v72 = vld [vmem:[%s0 + $0xb8] sm:$0xf]
  %v73 = vld [vmem:[%s0 + $0xbc] sm:$0xf]
  %v74 = vld [vmem:[%s0 + $0xc0] sm:$0xf]
  %v75 = vld [vmem:[%s0 + $0xc4] sm:$0xf]
  %v76 = vld [vmem:[%s0 + $0xc8] sm:$0xf]
  %v77 = vld [vmem:[%s0 + $0xcc] sm:$0xf]
  %v78 = vld [vmem:[%s0 + $0xd0] sm:$0xf]
  %v79 = vld [vmem:[%s0 + $0xd4] sm:$0xf]
  %v80 = vld [vmem:[%s0 + $0xd8] sm:$0xf]
  %v81 = vld [vmem:[%s0 + $0xdc] sm:$0xf]
  %v82 = vld [vmem:[%s0 + $0xe0] sm:$0xf]
  %v83 = vld [vmem:[%s0 + $0xe4] sm:$0xf]
  %v84 = vld [vmem:[%s0 + $0xe8] sm:$0xf]
  %v85 = vld [vmem:[%s0 + $0xec] sm:$0xf]
  %v86 = vld [vmem:[%s0 + $0xf0] sm:$0xf]
  %v87 = vld [vmem:[%s0 + $0xf4] sm:$0xf]
  %v88 = vld [vmem:[%s0 + $0xf8] sm:$0xf]
  %v89 = vld [vmem:[%s0 + $0xfc] sm:$0xf]
  %v90 = vld [vmem:[%s0 + $0x100] sm:$0xf]
  %v91 = vld [vmem:[%s0 + $0x104] sm:$0xf]
  %v92 = vld [vmem:[%s0 + $0x108] sm:$0xf]
  %v93 = vld [vmem:[%s0 + $0x10c] sm:$0xf]
  %v94 = vld [vmem:[%s0 + $0x110] sm:$0xf]
  %v95 = vld [vmem:[%s0 + $0x114] sm:$0xf]
  %v96 = vld [vmem:[%s0 + $0x118] sm:$0xf]
  %v97 = vld [vmem:[%s0 + $0x11c] sm:$0xf]
  %v98 = vld [vmem:[%s0 + $0x120] sm:$0xf]
  %v99 = vld [vmem:[%s0 + $0x124] sm:$0xf]
  %v100 = vld [vmem:[%s0 + $0x128] sm:$0xf]
  %v101 = vld [vmem:[%s0 + $0x12c] sm:$0xf]
  %v102 = vld [vmem:[%s0 + $0x130] sm:$0xf]
  %v103 = vld [vmem:[%s0 + $0x134] sm:$0xf]
  %v104 = vld [vmem:[%s0 + $0x138] sm:$0xf]
  %v105 = vld [vmem:[%s0 + $0x13c] sm:$0xf]
  %v106 = vld [vmem:[%s0 + $0x140] sm:$0xf]
  %v107 = vld [vmem:[%s0 + $0x144] sm:$0xf]
  %v108 = vld [vmem:[%s0 + $0x148] sm:$0xf]
  %v109 = vld [vmem:[%s0 + $0x14c] sm:$0xf]
  %v110 = vld [vmem:[%s0 + $0x150] sm:$0xf]
  %v111 = vld [vmem:[%s0 + $0x154] sm:$0xf]
  %v112 = vld [vmem:[%s0 + $0x158] sm:$0xf]
  %v113 = vld [vmem:[%s0 + $0x15c] sm:$0xf]
  %v114 = vld [vmem:[%s0 + $0x160] sm:$0xf]
  %v115 = vld [vmem:[%s0 + $0x164] sm:$0xf]
  %v116 = vld [vmem:[%s0 + $0x168] sm:$0xf]
  %v117 = vld [vmem:[%s0 + $0x16c] sm:$0xf]
  %v118 = vld [vmem:[%s0 + $0x170] sm:$0xf]
  %v119 = vld [vmem:[%s0 + $0x174] sm:$0xf]
  %v120 = vld [vmem:[%s0 + $0x178] sm:$0xf]
  %v121 = vld [vmem:[%s0 + $0x17c] sm:$0xf]
  %v122 = vld [vmem:[%s0 + $0x180] sm:$0xf]
  %v123 = vld [vmem:[%s0 + $0x184] sm:$0xf]
  %v124 = vld [vmem:[%s0 + $0x188] sm:$0xf]
  %v125 = vld [vmem:[%s0 + $0x18c] sm:$0xf]
  %v126 = vld [vmem:[%s0 + $0x190] sm:$0xf]
  %v127 = vld [vmem:[%s0 + $0x194] sm:$0xf]
  %v128 = vld [vmem:[%s0 + $0x198] sm:$0xf]
  %v129 = vld [vmem:[%s0 + $0x19c] sm:$0xf]
  %v130 = vld [vmem:[%s0 + $0x1a0] sm:$0xf]
  %v131 = vld [vmem:[%s0 + $0x1a4] sm:$0xf]
  %v132 = vld [vmem:[%s0 + $0x1a8] sm:$0xf]
  %v133 = vld [vmem:[%s0 + $0x1ac] sm:$0xf]
  %v134 = vld [vmem:[%s0 + $0x1b0] sm:$0xf]
  %v135 = vld [vmem:[%s0 + $0x1b4] sm:$0xf]
  %v136 = vld [vmem:[%s0 + $0x1b8] sm:$0xf]
  %v137 = vld [vmem:[%s0 + $0x1bc] sm:$0xf]
  %v138 = vld [vmem:[%s0 + $0x1c0] sm:$0xf]
  %v139 = vld [vmem:[%s0 + $0x1c4] sm:$0xf]
  %v140 = vld [vmem:[%s0 + $0x1c8] sm:$0xf]
  %v141 = vld [vmem:[%s0 + $0x1cc] sm:$0xf]
  %v142 = vld [vmem:[%s0 + $0x1d0] sm:$0xf]
  %v143 = vld [vmem:[%s0 + $0x1d4] sm:$0xf]
  %v144 = vld [vmem:[%s0 + $0x1d8] sm:$0xf]
  %v145 = vld [vmem:[%s0 + $0x1dc] sm:$0xf]
  %v146 = vld [vmem:[%s0 + $0x1e0] sm:$0xf]
  %v147 = vld [vmem:[%s0 + $0x1e4] sm:$0xf]
  %v148 = vld [vmem:[%s0 + $0x1e8] sm:$0xf]
  %v149 = vld [vmem:[%s0 + $0x1ec] sm:$0xf]
  %v150 = vld [vmem:[%s0 + $0x1f0] sm:$0xf]
  %v151 = vld [vmem:[%s0 + $0x1f4] sm:$0xf]
  %v152 = vld [vmem:[%s0 + $0x1f8] sm:$0xf]
  %v153 = vld [vmem:[%s0 + $0x1fc] sm:$0xf]
  %v154 = vld [vmem:[%s0 + $0x200] sm:$0xf]
  %v155 = vld [vmem:[%s0 + $0x204] sm:$0xf]
  %v156 = vld [vmem:[%s0 + $0x208] sm:$0xf]
  %v157 = vld [vmem:[%s0 + $0x20c] sm:$0xf]
  %v158 = vld [vmem:[%s0 + $0x210] sm:$0xf]
  %v159 = vld [vmem:[%s0 + $0x214] sm:$0xf]
  %v160 = vld [vmem:[%s0 + $0x218] sm:$0xf]
  %v161 = vld [vmem:[%s0 + $0x21c] sm:$0xf]
  %v162 = vld [vmem:[%s0 + $0x220] sm:$0xf]
  %v163 = vld [vmem:[%s0 + $0x224] sm:$0xf]
  %v164 = vld [vmem:[%s0 + $0x228] sm:$0xf]
  %v165 = vld [vmem:[%s0 + $0x22c] sm:$0xf]
  %v166 = vld [vmem:[%s0 + $0x230] sm:$0xf]
  %v167 = vld [vmem:[%s0 + $0x234] sm:$0xf]
  %v168 = vld [vmem:[%s0 + $0x238] sm:$0xf]
  %v169 = vld [vmem:[%s0 + $0x23c] sm:$0xf]
  %v170 = vld [vmem:[%s0 + $0x240] sm:$0xf]
  %v171 = vld [vmem:[%s0 + $0x244] sm:$0xf]
  %v172 = vld [vmem:[%s0 + $0x248] sm:$0xf]
  %v173 = vld [vmem:[%s0 + $0x24c] sm:$0xf]
  %v174 = vld [vmem:[%s0 + $0x250] sm:$0xf]
  %v175 = vld [vmem:[%s0 + $0x254] sm:$0xf]
  %v176 = vld [vmem:[%s0 + $0x258] sm:$0xf]
  %v177 = vld [vmem:[%s0 + $0x25c] sm:$0xf]
  %v178 = vld [vmem:[%s0 + $0x260] sm:$0xf]
  %v179 = vld [vmem:[%s0 + $0x264] sm:$0xf]
  %v180 = vld [vmem:[%s0 + $0x268] sm:$0xf]
  %v181 = vld [vmem:[%s0 + $0x26c] sm:$0xf]
  %v182 = vld [vmem:[%s0 + $0x270] sm:$0xf]
  %v183 = vld [vmem:[%s0 + $0x274] sm:$0xf]
  %v184 = vld [vmem:[%s0 + $0x278] sm:$0xf]
  %v185 = vld [vmem:[%s0 + $0x27c] sm:$0xf]
  %v186 = vld [vmem:[%s0 + $0x280] sm:$0xf]
  %v187 = vld [vmem:[%s0 + $0x284] sm:$0xf]
  %v188 = vld [vmem:[%s0 + $0x288] sm:$0xf]
  %v189 = vld [vmem:[%s0 + $0x28c] sm:$0xf]
  %v190 = vld [vmem:[%s0 + $0x290] sm:$0xf]
  %v191 = vld [vmem:[%s0 + $0x294] sm:$0xf]
  %v192 = vld [vmem:[%s0 + $0x298] sm:$0xf]
  %v193 = vld [vmem:[%s0 + $0x29c] sm:$0xf]
  %v194 = vld [vmem:[%s0 + $0x2a0] sm:$0xf]
  %v195 = vld [vmem:[%s0 + $0x2a4] sm:$0xf]
  %v196 = vld [vmem:[%s0 + $0x2a8] sm:$0xf]
  %v197 = vld [vmem:[%s0 + $0x2ac] sm:$0xf]
  %v198 = vld [vmem:[%s0 + $0x2b0] sm:$0xf]
  %v199 = vld [vmem:[%s0 + $0x2b4] sm:$0xf]
  %v200 = vld [vmem:[%s0 + $0x2b8] sm:$0xf]
  %v201 = vld [vmem:[%s0 + $0x2bc] sm:$0xf]
  %v202 = vld [vmem:[%s0 + $0x2c0] sm:$0xf]
  %v203 = vld [vmem:[%s0 + $0x2c4] sm:$0xf]
  %v204 = vld [vmem:[%s0 + $0x2c8] sm:$0xf]
  %v205 = vld [vmem:[%s0 + $0x2cc] sm:$0xf]
  %v206 = vld [vmem:[%s0 + $0x2d0] sm:$0xf]
  %v207 = vld [vmem:[%s0 + $0x2d4] sm:$0xf]
  %v208 = vld [vmem:[%s0 + $0x2d8] sm:$0xf]
  %v209 = vld [vmem:[%s0 + $0x2dc] sm:$0xf]
  %v210 = vld [vmem:[%s0 + $0x2e0] sm:$0xf]
  %v211 = vld [vmem:[%s0 + $0x2e4] sm:$0xf]
  %v212 = vld [vmem:[%s0 + $0x2e8] sm:$0xf]
  %v213 = vld [vmem:[%s0 + $0x2ec] sm:$0xf]
  %v214 = vld [vmem:[%s0 + $0x2f0] sm:$0xf]
  %v215 = vld [vmem:[%s0 + $0x2f4] sm:$0xf]
  %v216 = vld [vmem:[%s0 + $0x2f8] sm:$0xf]
  %v217 = vld [vmem:[%s0 + $0x2fc] sm:$0xf]
  %v218 = vld [vmem:[%s0 + $0x300] sm:$0xf]
  %v219 = vld [vmem:[%s0 + $0x304] sm:$0xf]
  %v220 = vld [vmem:[%s0 + $0x308] sm:$0xf]
  %v221 = vld [vmem:[%s0 + $0x30c] sm:$0xf]
  %v222 = vld [vmem:[%s0 + $0x310] sm:$0xf]
  %v223 = vld [vmem:[%s0 + $0x314] sm:$0xf]
  %v224 = vld [vmem:[%s0 + $0x318] sm:$0xf]
  %v225 = vld [vmem:[%s0 + $0x31c] sm:$0xf]
  %v226 = vld [vmem:[%s0 + $0x320] sm:$0xf]
  %v227 = vld [vmem:[%s0 + $0x324] sm:$0xf]
  %v228 = vld [vmem:[%s0 + $0x328] sm:$0xf]
  %v229 = vld [vmem:[%s0 + $0x32c] sm:$0xf]
  %v230 = vld [vmem:[%s0 + $0x330] sm:$0xf]
  %v231 = vld [vmem:[%s0 + $0x334] sm:$0xf]
  %v232 = vld [vmem:[%s0 + $0x338] sm:$0xf]
  %v233 = vld [vmem:[%s0 + $0x33c] sm:$0xf]
  %v234 = vld [vmem:[%s0 + $0x340] sm:$0xf]
  %v235 = vld [vmem:[%s0 + $0x344] sm:$0xf]
  %v236 = vld [vmem:[%s0 + $0x348] sm:$0xf]
  %v237 = vld [vmem:[%s0 + $0x34c] sm:$0xf]
  %v238 = vld [vmem:[%s0 + $0x350] sm:$0xf]
  %v239 = vld [vmem:[%s0 + $0x354] sm:$0xf]
  %v240 = vld [vmem:[%s0 + $0x358] sm:$0xf]
  %v241 = vld [vmem:[%s0 + $0x35c] sm:$0xf]
  %v242 = vld [vmem:[%s0 + $0x360] sm:$0xf]
  %v243 = vld [vmem:[%s0 + $0x364] sm:$0xf]
  %v244 = vld [vmem:[%s0 + $0x368] sm:$0xf]
  %v245 = vld [vmem:[%s0 + $0x36c] sm:$0xf]
  %v246 = vld [vmem:[%s0 + $0x370] sm:$0xf]
  %v247 = vld [vmem:[%s0 + $0x374] sm:$0xf]
  %v248 = vld [vmem:[%s0 + $0x378] sm:$0xf]
  %v249 = vld [vmem:[%s0 + $0x37c] sm:$0xf]
  %v250 = vld [vmem:[%s0 + $0x380] sm:$0xf]
  %v251 = vld [vmem:[%s0 + $0x384] sm:$0xf]
  %v252 = vld [vmem:[%s0 + $0x388] sm:$0xf]
  %v253 = vld [vmem:[%s0 + $0x38c] sm:$0xf]
  %v254 = vld [vmem:[%s0 + $0x390] sm:$0xf]
  %v255 = vld [vmem:[%s0 + $0x394] sm:$0xf]
  %v256 = vld [vmem:[%s0 + $0x398] sm:$0xf]
  %v257 = vld [vmem:[%s0 + $0x39c] sm:$0xf]
  %v258 = vld [vmem:[%s0 + $0x3a0] sm:$0xf]
  %v259 = vld [vmem:[%s0 + $0x3a4] sm:$0xf]
  %v260 = vld [vmem:[%s0 + $0x3a8] sm:$0xf]
  %v261 = vld [vmem:[%s0 + $0x3ac] sm:$0xf]
  %v262 = vld [vmem:[%s0 + $0x3b0] sm:$0xf]
  %v263 = vld [vmem:[%s0 + $0x3b4] sm:$0xf]
  %v264 = vld [vmem:[%s0 + $0x3b8] sm:$0xf]
  %v265 = vld [vmem:[%s0 + $0x3bc] sm:$0xf]
  %v266 = vld [vmem:[%s0 + $0x3c0] sm:$0xf]
  %v267 = vld [vmem:[%s0 + $0x3c4] sm:$0xf]
  %v268 = vld [vmem:[%s0 + $0x3c8] sm:$0xf]
  %v269 = vld [vmem:[%s0 + $0x3cc] sm:$0xf]
  %v270 = vld [vmem:[%s0 + $0x3d0] sm:$0xf]
  %v271 = vld [vmem:[%s0 + $0x3d4] sm:$0xf]
  %v272 = vld [vmem:[%s0 + $0x3d8] sm:$0xf]
  %v273 = vld [vmem:[%s0 + $0x3dc] sm:$0xf]
  %v274 = vld [vmem:[%s0 + $0x3e0] sm:$0xf]
  %v275 = vld [vmem:[%s0 + $0x3e4] sm:$0xf]
  %v276 = vld [vmem:[%s0 + $0x3e8] sm:$0xf]
  %v277 = vld [vmem:[%s0 + $0x3ec] sm:$0xf]
  %v278 = vld [vmem:[%s0 + $0x3f0] sm:$0xf]
  %v279 = vld [vmem:[%s0 + $0x3f4] sm:$0xf]
  %v280 = vld [vmem:[%s0 + $0x3f8] sm:$0xf]
  %v281 = vld [vmem:[%s0 + $0x3fc] sm:$0xf]
  %v282 = vld [vmem:[%s1] sm:$0xff]
  %v283 = vld [vmem:[%s1 + $0x8] sm:$0xff]
  %v284 = vld [vmem:[%s1 + $0x10] sm:$0xff]
  %v285 = vld [vmem:[%s1 + $0x18] sm:$0xff]
  %v542 = vunpack.c.l.b16 %v26
  %v543 = vunpack.c.l.b16 %v27
  %v544 = vunpack.c.l.b16 %v28
  %v545 = vunpack.c.l.b16 %v29
  %v546 = vunpack.c.l.b16 %v30
  %v547 = vunpack.c.l.b16 %v31
  %v548 = vunpack.c.l.b16 %v32
  %v549 = vunpack.c.l.b16 %v33
  %v550 = vunpack.c.l.b16 %v34
  %v551 = vunpack.c.l.b16 %v35
  %v552 = vunpack.c.l.b16 %v36
  %v553 = vunpack.c.l.b16 %v37
  %v554 = vunpack.c.l.b16 %v38
  %v555 = vunpack.c.l.b16 %v39
  %v556 = vunpack.c.l.b16 %v40
  %v557 = vunpack.c.l.b16 %v41
  %v558 = vunpack.c.l.b16 %v42
  %v559 = vunpack.c.l.b16 %v43
  %v560 = vunpack.c.l.b16 %v44
  %v561 = vunpack.c.l.b16 %v45
  %v562 = vunpack.c.l.b16 %v46
  %v563 = vunpack.c.l.b16 %v47
  %v564 = vunpack.c.l.b16 %v48
  %v565 = vunpack.c.l.b16 %v49
  %v566 = vunpack.c.l.b16 %v50
  %v567 = vunpack.c.l.b16 %v51
  %v568 = vunpack.c.l.b16 %v52
  %v569 = vunpack.c.l.b16 %v53
  %v570 = vunpack.c.l.b16 %v54
  %v571 = vunpack.c.l.b16 %v55
  %v572 = vunpack.c.l.b16 %v56
  %v573 = vunpack.c.l.b16 %v57
  %v574 = vunpack.c.l.b16 %v58
  %v575 = vunpack.c.l.b16 %v59
  %v576 = vunpack.c.l.b16 %v60
  %v577 = vunpack.c.l.b16 %v61
  %v578 = vunpack.c.l.b16 %v62
  %v579 = vunpack.c.l.b16 %v63
  %v580 = vunpack.c.l.b16 %v64
  %v581 = vunpack.c.l.b16 %v65
  %v582 = vunpack.c.l.b16 %v66
  %v583 = vunpack.c.l.b16 %v67
  %v584 = vunpack.c.l.b16 %v68
  %v585 = vunpack.c.l.b16 %v69
  %v586 = vunpack.c.l.b16 %v70
  %v587 = vunpack.c.l.b16 %v71
  %v588 = vunpack.c.l.b16 %v72
  %v589 = vunpack.c.l.b16 %v73
  %v590 = vunpack.c.l.b16 %v74
  %v591 = vunpack.c.l.b16 %v75
  %v592 = vunpack.c.l.b16 %v76
  %v593 = vunpack.c.l.b16 %v77
  %v594 = vunpack.c.l.b16 %v78
  %v595 = vunpack.c.l.b16 %v79
  %v596 = vunpack.c.l.b16 %v80
  %v597 = vunpack.c.l.b16 %v81
  %v598 = vunpack.c.l.b16 %v82
  %v599 = vunpack.c.l.b16 %v83
  %v600 = vunpack.c.l.b16 %v84
  %v601 = vunpack.c.l.b16 %v85
  %v602 = vunpack.c.l.b16 %v86
  %v603 = vunpack.c.l.b16 %v87
  %v604 = vunpack.c.l.b16 %v88
  %v605 = vunpack.c.l.b16 %v89
  %v606 = vunpack.c.l.b16 %v90
  %v607 = vunpack.c.l.b16 %v91
  %v608 = vunpack.c.l.b16 %v92
  %v609 = vunpack.c.l.b16 %v93
  %v610 = vunpack.c.l.b16 %v94
  %v611 = vunpack.c.l.b16 %v95
  %v612 = vunpack.c.l.b16 %v96
  %v613 = vunpack.c.l.b16 %v97
  %v614 = vunpack.c.l.b16 %v98
  %v615 = vunpack.c.l.b16 %v99
  %v616 = vunpack.c.l.b16 %v100
  %v617 = vunpack.c.l.b16 %v101
  %v618 = vunpack.c.l.b16 %v102
  %v619 = vunpack.c.l.b16 %v103
  %v620 = vunpack.c.l.b16 %v104
  %v621 = vunpack.c.l.b16 %v105
  %v622 = vunpack.c.l.b16 %v106
  %v623 = vunpack.c.l.b16 %v107
  %v624 = vunpack.c.l.b16 %v108
  %v625 = vunpack.c.l.b16 %v109
  %v626 = vunpack.c.l.b16 %v110
  %v627 = vunpack.c.l.b16 %v111
  %v628 = vunpack.c.l.b16 %v112
  %v629 = vunpack.c.l.b16 %v113
  %v630 = vunpack.c.l.b16 %v114
  %v631 = vunpack.c.l.b16 %v115
  %v632 = vunpack.c.l.b16 %v116
  %v633 = vunpack.c.l.b16 %v117
  %v634 = vunpack.c.l.b16 %v118
  %v635 = vunpack.c.l.b16 %v119
  %v636 = vunpack.c.l.b16 %v120
  %v637 = vunpack.c.l.b16 %v121
  %v638 = vunpack.c.l.b16 %v122
  %v639 = vunpack.c.l.b16 %v123
  %v640 = vunpack.c.l.b16 %v124
  %v641 = vunpack.c.l.b16 %v125
  %v642 = vunpack.c.l.b16 %v126
  %v643 = vunpack.c.l.b16 %v127
  %v644 = vunpack.c.l.b16 %v128
  %v645 = vunpack.c.l.b16 %v129
  %v646 = vunpack.c.l.b16 %v130
  %v647 = vunpack.c.l.b16 %v131
  %v648 = vunpack.c.l.b16 %v132
  %v649 = vunpack.c.l.b16 %v133
  %v650 = vunpack.c.l.b16 %v134
  %v651 = vunpack.c.l.b16 %v135
  %v652 = vunpack.c.l.b16 %v136
  %v653 = vunpack.c.l.b16 %v137
  %v654 = vunpack.c.l.b16 %v138
  %v655 = vunpack.c.l.b16 %v139
  %v656 = vunpack.c.l.b16 %v140
  %v657 = vunpack.c.l.b16 %v141
  %v658 = vunpack.c.l.b16 %v142
  %v659 = vunpack.c.l.b16 %v143
  %v660 = vunpack.c.l.b16 %v144
  %v661 = vunpack.c.l.b16 %v145
  %v662 = vunpack.c.l.b16 %v146
  %v663 = vunpack.c.l.b16 %v147
  %v664 = vunpack.c.l.b16 %v148
  %v665 = vunpack.c.l.b16 %v149
  %v666 = vunpack.c.l.b16 %v150
  %v667 = vunpack.c.l.b16 %v151
  %v668 = vunpack.c.l.b16 %v152
  %v669 = vunpack.c.l.b16 %v153
  %v670 = vunpack.c.l.b16 %v154
  %v671 = vunpack.c.l.b16 %v155
  %v672 = vunpack.c.l.b16 %v156
  %v673 = vunpack.c.l.b16 %v157
  %v674 = vunpack.c.l.b16 %v158
  %v675 = vunpack.c.l.b16 %v159
  %v676 = vunpack.c.l.b16 %v160
  %v677 = vunpack.c.l.b16 %v161
  %v678 = vunpack.c.l.b16 %v162
  %v679 = vunpack.c.l.b16 %v163
  %v680 = vunpack.c.l.b16 %v164
  %v681 = vunpack.c.l.b16 %v165
  %v682 = vunpack.c.l.b16 %v166
  %v683 = vunpack.c.l.b16 %v167
  %v684 = vunpack.c.l.b16 %v168
  %v685 = vunpack.c.l.b16 %v169
  %v686 = vunpack.c.l.b16 %v170
  %v687 = vunpack.c.l.b16 %v171
  %v688 = vunpack.c.l.b16 %v172
  %v689 = vunpack.c.l.b16 %v173
  %v690 = vunpack.c.l.b16 %v174
  %v691 = vunpack.c.l.b16 %v175
  %v692 = vunpack.c.l.b16 %v176
  %v693 = vunpack.c.l.b16 %v177
  %v694 = vunpack.c.l.b16 %v178
  %v695 = vunpack.c.l.b16 %v179
  %v696 = vunpack.c.l.b16 %v180
  %v697 = vunpack.c.l.b16 %v181
  %v698 = vunpack.c.l.b16 %v182
  %v699 = vunpack.c.l.b16 %v183
  %v700 = vunpack.c.l.b16 %v184
  %v701 = vunpack.c.l.b16 %v185
  %v702 = vunpack.c.l.b16 %v186
  %v703 = vunpack.c.l.b16 %v187
  %v704 = vunpack.c.l.b16 %v188
  %v705 = vunpack.c.l.b16 %v189
  %v706 = vunpack.c.l.b16 %v190
  %v707 = vunpack.c.l.b16 %v191
  %v708 = vunpack.c.l.b16 %v192
  %v709 = vunpack.c.l.b16 %v193
  %v710 = vunpack.c.l.b16 %v194
  %v711 = vunpack.c.l.b16 %v195
  %v712 = vunpack.c.l.b16 %v196
  %v713 = vunpack.c.l.b16 %v197
  %v714 = vunpack.c.l.b16 %v198
  %v715 = vunpack.c.l.b16 %v199
  %v716 = vunpack.c.l.b16 %v200
  %v717 = vunpack.c.l.b16 %v201
  %v718 = vunpack.c.l.b16 %v202
  %v719 = vunpack.c.l.b16 %v203
  %v720 = vunpack.c.l.b16 %v204
  %v721 = vunpack.c.l.b16 %v205
  %v722 = vunpack.c.l.b16 %v206
  %v723 = vunpack.c.l.b16 %v207
  %v724 = vunpack.c.l.b16 %v208
  %v725 = vunpack.c.l.b16 %v209
  %v726 = vunpack.c.l.b16 %v210
  %v727 = vunpack.c.l.b16 %v211
  %v728 = vunpack.c.l.b16 %v212
  %v729 = vunpack.c.l.b16 %v213
  %v730 = vunpack.c.l.b16 %v214
  %v731 = vunpack.c.l.b16 %v215
  %v732 = vunpack.c.l.b16 %v216
  %v733 = vunpack.c.l.b16 %v217
  %v734 = vunpack.c.l.b16 %v218
  %v735 = vunpack.c.l.b16 %v219
  %v736 = vunpack.c.l.b16 %v220
  %v737 = vunpack.c.l.b16 %v221
  %v738 = vunpack.c.l.b16 %v222
  %v739 = vunpack.c.l.b16 %v223
  %v740 = vunpack.c.l.b16 %v224
  %v741 = vunpack.c.l.b16 %v225
  %v742 = vunpack.c.l.b16 %v226
  %v743 = vunpack.c.l.b16 %v227
  %v744 = vunpack.c.l.b16 %v228
  %v745 = vunpack.c.l.b16 %v229
  %v746 = vunpack.c.l.b16 %v230
  %v747 = vunpack.c.l.b16 %v231
  %v748 = vunpack.c.l.b16 %v232
  %v749 = vunpack.c.l.b16 %v233
  %v750 = vunpack.c.l.b16 %v234
  %v751 = vunpack.c.l.b16 %v235
  %v752 = vunpack.c.l.b16 %v236
  %v753 = vunpack.c.l.b16 %v237
  %v754 = vunpack.c.l.b16 %v238
  %v755 = vunpack.c.l.b16 %v239
  %v756 = vunpack.c.l.b16 %v240
  %v757 = vunpack.c.l.b16 %v241
  %v758 = vunpack.c.l.b16 %v242
  %v759 = vunpack.c.l.b16 %v243
  %v760 = vunpack.c.l.b16 %v244
  %v761 = vunpack.c.l.b16 %v245
  %v762 = vunpack.c.l.b16 %v246
  %v763 = vunpack.c.l.b16 %v247
  %v764 = vunpack.c.l.b16 %v248
  %v765 = vunpack.c.l.b16 %v249
  %v766 = vunpack.c.l.b16 %v250
  %v767 = vunpack.c.l.b16 %v251
  %v768 = vunpack.c.l.b16 %v252
  %v769 = vunpack.c.l.b16 %v253
  %v770 = vunpack.c.l.b16 %v254
  %v771 = vunpack.c.l.b16 %v255
  %v772 = vunpack.c.l.b16 %v256
  %v773 = vunpack.c.l.b16 %v257
  %v774 = vunpack.c.l.b16 %v258
  %v775 = vunpack.c.l.b16 %v259
  %v776 = vunpack.c.l.b16 %v260
  %v777 = vunpack.c.l.b16 %v261
  %v778 = vunpack.c.l.b16 %v262
  %v779 = vunpack.c.l.b16 %v263
  %v780 = vunpack.c.l.b16 %v264
  %v781 = vunpack.c.l.b16 %v265
  %v782 = vunpack.c.l.b16 %v266
  %v783 = vunpack.c.l.b16 %v267
  %v784 = vunpack.c.l.b16 %v268
  %v785 = vunpack.c.l.b16 %v269
  %v786 = vunpack.c.l.b16 %v270
  %v787 = vunpack.c.l.b16 %v271
  %v788 = vunpack.c.l.b16 %v272
  %v789 = vunpack.c.l.b16 %v273
  %v790 = vunpack.c.l.b16 %v274
  %v791 = vunpack.c.l.b16 %v275
  %v792 = vunpack.c.l.b16 %v276
  %v793 = vunpack.c.l.b16 %v277
  %v794 = vunpack.c.l.b16 %v278
  %v795 = vunpack.c.l.b16 %v279
  %v796 = vunpack.c.l.b16 %v280
  %v797 = vunpack.c.l.b16 %v281
  %v798 = vpack.c.b16 %v543, %v542
  %v799 = vpack.c.b16 %v545, %v544
  %v800 = vpack.c.b16 %v547, %v546
  %v801 = vpack.c.b16 %v549, %v548
  %v802 = vpack.c.b16 %v551, %v550
  %v803 = vpack.c.b16 %v553, %v552
  %v804 = vpack.c.b16 %v555, %v554
  %v805 = vpack.c.b16 %v557, %v556
  %v806 = vpack.c.b16 %v559, %v558
  %v807 = vpack.c.b16 %v561, %v560
  %v808 = vpack.c.b16 %v563, %v562
  %v809 = vpack.c.b16 %v565, %v564
  %v810 = vpack.c.b16 %v567, %v566
  %v811 = vpack.c.b16 %v569, %v568
  %v812 = vpack.c.b16 %v571, %v570
  %v813 = vpack.c.b16 %v573, %v572
  %v814 = vpack.c.b16 %v575, %v574
  %v815 = vpack.c.b16 %v577, %v576
  %v816 = vpack.c.b16 %v579, %v578
  %v817 = vpack.c.b16 %v581, %v580
  %v818 = vpack.c.b16 %v583, %v582
  %v819 = vpack.c.b16 %v585, %v584
  %v820 = vpack.c.b16 %v587, %v586
  %v821 = vpack.c.b16 %v589, %v588
  %v822 = vpack.c.b16 %v591, %v590
  %v823 = vpack.c.b16 %v593, %v592
  %v824 = vpack.c.b16 %v595, %v594
  %v825 = vpack.c.b16 %v597, %v596
  %v826 = vpack.c.b16 %v599, %v598
  %v827 = vpack.c.b16 %v601, %v600
  %v828 = vpack.c.b16 %v603, %v602
  %v829 = vpack.c.b16 %v605, %v604
  %v830 = vpack.c.b16 %v607, %v606
  %v831 = vpack.c.b16 %v609, %v608
  %v832 = vpack.c.b16 %v611, %v610
  %v833 = vpack.c.b16 %v613, %v612
  %v834 = vpack.c.b16 %v615, %v614
  %v835 = vpack.c.b16 %v617, %v616
  %v836 = vpack.c.b16 %v619, %v618
  %v837 = vpack.c.b16 %v621, %v620
  %v838 = vpack.c.b16 %v623, %v622
  %v839 = vpack.c.b16 %v625, %v624
  %v840 = vpack.c.b16 %v627, %v626
  %v841 = vpack.c.b16 %v629, %v628
  %v842 = vpack.c.b16 %v631, %v630
  %v843 = vpack.c.b16 %v633, %v632
  %v844 = vpack.c.b16 %v635, %v634
  %v845 = vpack.c.b16 %v637, %v636
  %v846 = vpack.c.b16 %v639, %v638
  %v847 = vpack.c.b16 %v641, %v640
  %v848 = vpack.c.b16 %v643, %v642
  %v849 = vpack.c.b16 %v645, %v644
  %v850 = vpack.c.b16 %v647, %v646
  %v851 = vpack.c.b16 %v649, %v648
  %v852 = vpack.c.b16 %v651, %v650
  %v853 = vpack.c.b16 %v653, %v652
  %v854 = vpack.c.b16 %v655, %v654
  %v855 = vpack.c.b16 %v657, %v656
  %v856 = vpack.c.b16 %v659, %v658
  %v857 = vpack.c.b16 %v661, %v660
  %v858 = vpack.c.b16 %v663, %v662
  %v859 = vpack.c.b16 %v665, %v664
  %v860 = vpack.c.b16 %v667, %v666
  %v861 = vpack.c.b16 %v669, %v668
  %v862 = vpack.c.b16 %v671, %v670
  %v863 = vpack.c.b16 %v673, %v672
  %v864 = vpack.c.b16 %v675, %v674
  %v865 = vpack.c.b16 %v677, %v676
  %v866 = vpack.c.b16 %v679, %v678
  %v867 = vpack.c.b16 %v681, %v680
  %v868 = vpack.c.b16 %v683, %v682
  %v869 = vpack.c.b16 %v685, %v684
  %v870 = vpack.c.b16 %v687, %v686
  %v871 = vpack.c.b16 %v689, %v688
  %v872 = vpack.c.b16 %v691, %v690
  %v873 = vpack.c.b16 %v693, %v692
  %v874 = vpack.c.b16 %v695, %v694
  %v875 = vpack.c.b16 %v697, %v696
  %v876 = vpack.c.b16 %v699, %v698
  %v877 = vpack.c.b16 %v701, %v700
  %v878 = vpack.c.b16 %v703, %v702
  %v879 = vpack.c.b16 %v705, %v704
  %v880 = vpack.c.b16 %v707, %v706
  %v881 = vpack.c.b16 %v709, %v708
  %v882 = vpack.c.b16 %v711, %v710
  %v883 = vpack.c.b16 %v713, %v712
  %v884 = vpack.c.b16 %v715, %v714
  %v885 = vpack.c.b16 %v717, %v716
  %v886 = vpack.c.b16 %v719, %v718
  %v887 = vpack.c.b16 %v721, %v720
  %v888 = vpack.c.b16 %v723, %v722
  %v889 = vpack.c.b16 %v725, %v724
  %v890 = vpack.c.b16 %v727, %v726
  %v891 = vpack.c.b16 %v729, %v728
  %v892 = vpack.c.b16 %v731, %v730
  %v893 = vpack.c.b16 %v733, %v732
  %v894 = vpack.c.b16 %v735, %v734
  %v895 = vpack.c.b16 %v737, %v736
  %v896 = vpack.c.b16 %v739, %v738
  %v897 = vpack.c.b16 %v741, %v740
  %v898 = vpack.c.b16 %v743, %v742
  %v899 = vpack.c.b16 %v745, %v744
  %v900 = vpack.c.b16 %v747, %v746
  %v901 = vpack.c.b16 %v749, %v748
  %v902 = vpack.c.b16 %v751, %v750
  %v903 = vpack.c.b16 %v753, %v752
  %v904 = vpack.c.b16 %v755, %v754
  %v905 = vpack.c.b16 %v757, %v756
  %v906 = vpack.c.b16 %v759, %v758
  %v907 = vpack.c.b16 %v761, %v760
  %v908 = vpack.c.b16 %v763, %v762
  %v909 = vpack.c.b16 %v765, %v764
  %v910 = vpack.c.b16 %v767, %v766
  %v911 = vpack.c.b16 %v769, %v768
  %v912 = vpack.c.b16 %v771, %v770
  %v913 = vpack.c.b16 %v773, %v772
  %v914 = vpack.c.b16 %v775, %v774
  %v915 = vpack.c.b16 %v777, %v776
  %v916 = vpack.c.b16 %v779, %v778
  %v917 = vpack.c.b16 %v781, %v780
  %v918 = vpack.c.b16 %v783, %v782
  %v919 = vpack.c.b16 %v785, %v784
  %v920 = vpack.c.b16 %v787, %v786
  %v921 = vpack.c.b16 %v789, %v788
  %v922 = vpack.c.b16 %v791, %v790
  %v923 = vpack.c.b16 %v793, %v792
  %v924 = vpack.c.b16 %v795, %v794
  %v925 = vpack.c.b16 %v797, %v796
  %v930 = vunpack.c.l.b16 %v282
  %v931 = vunpack.c.h.b16 %v282
  %v932 = vunpack.c.l.b16 %v283
  %v933 = vunpack.c.h.b16 %v283
  %v934 = vunpack.c.l.b16 %v284
  %v935 = vunpack.c.h.b16 %v284
  %v936 = vunpack.c.l.b16 %v285
  %v937 = vunpack.c.h.b16 %v285
  %v938 = vpack.c.b16 %v932, %v930
  %v939 = vpack.c.b16 %v933, %v931
  %v940 = vpack.c.b16 %v936, %v934
  %v941 = vpack.c.b16 %v937, %v935
  %vm946 = vcmask 261120
  %v948 = vsel %vm946, %v798, 0
  %v951 = vsel %vm946, %v799, 0
  %v954 = vsel %vm946, %v800, 0
  %v957 = vsel %vm946, %v801, 0
  %v960 = vsel %vm946, %v802, 0
  %v963 = vsel %vm946, %v803, 0
  %v966 = vsel %vm946, %v804, 0
  %v969 = vsel %vm946, %v805, 0
  %v972 = vsel %vm946, %v806, 0
  %v975 = vsel %vm946, %v807, 0
  %v978 = vsel %vm946, %v808, 0
  %v981 = vsel %vm946, %v809, 0
  %v984 = vsel %vm946, %v810, 0
  %v987 = vsel %vm946, %v811, 0
  %v990 = vsel %vm946, %v812, 0
  %v993 = vsel %vm946, %v813, 0
  %v996 = vsel %vm946, %v814, 0
  %v999 = vsel %vm946, %v815, 0
  %v1002 = vsel %vm946, %v816, 0
  %v1005 = vsel %vm946, %v817, 0
  %v1008 = vsel %vm946, %v818, 0
  %v1011 = vsel %vm946, %v819, 0
  %v1014 = vsel %vm946, %v820, 0
  %v1017 = vsel %vm946, %v821, 0
  %v1020 = vsel %vm946, %v822, 0
  %v1023 = vsel %vm946, %v823, 0
  %v1026 = vsel %vm946, %v824, 0
  %v1029 = vsel %vm946, %v825, 0
  %v1032 = vsel %vm946, %v826, 0
  %v1035 = vsel %vm946, %v827, 0
  %v1038 = vsel %vm946, %v828, 0
  %v1041 = vsel %vm946, %v829, 0
  %v1044 = vsel %vm946, %v830, 0
  %v1047 = vsel %vm946, %v831, 0
  %v1050 = vsel %vm946, %v832, 0
  %v1053 = vsel %vm946, %v833, 0
  %v1056 = vsel %vm946, %v834, 0
  %v1059 = vsel %vm946, %v835, 0
  %v1062 = vsel %vm946, %v836, 0
  %v1065 = vsel %vm946, %v837, 0
  %v1068 = vsel %vm946, %v838, 0
  %v1071 = vsel %vm946, %v839, 0
  %v1074 = vsel %vm946, %v840, 0
  %v1077 = vsel %vm946, %v841, 0
  %v1080 = vsel %vm946, %v842, 0
  %v1083 = vsel %vm946, %v843, 0
  %v1086 = vsel %vm946, %v844, 0
  %v1089 = vsel %vm946, %v845, 0
  %v1092 = vsel %vm946, %v846, 0
  %v1095 = vsel %vm946, %v847, 0
  %v1098 = vsel %vm946, %v848, 0
  %v1101 = vsel %vm946, %v849, 0
  %v1104 = vsel %vm946, %v850, 0
  %v1107 = vsel %vm946, %v851, 0
  %v1110 = vsel %vm946, %v852, 0
  %v1113 = vsel %vm946, %v853, 0
  %v1116 = vsel %vm946, %v854, 0
  %v1119 = vsel %vm946, %v855, 0
  %v1122 = vsel %vm946, %v856, 0
  %v1125 = vsel %vm946, %v857, 0
  %v1128 = vsel %vm946, %v858, 0
  %v1131 = vsel %vm946, %v859, 0
  %v1134 = vsel %vm946, %v860, 0
  %v1137 = vsel %vm946, %v861, 0
  %v1140 = vsel %vm946, %v862, 0
  %v1143 = vsel %vm946, %v863, 0
  %v1146 = vsel %vm946, %v864, 0
  %v1149 = vsel %vm946, %v865, 0
  %v1152 = vsel %vm946, %v866, 0
  %v1155 = vsel %vm946, %v867, 0
  %v1158 = vsel %vm946, %v868, 0
  %v1161 = vsel %vm946, %v869, 0
  %v1164 = vsel %vm946, %v870, 0
  %v1167 = vsel %vm946, %v871, 0
  %v1170 = vsel %vm946, %v872, 0
  %v1173 = vsel %vm946, %v873, 0
  %v1176 = vsel %vm946, %v874, 0
  %v1179 = vsel %vm946, %v875, 0
  %v1182 = vsel %vm946, %v876, 0
  %v1185 = vsel %vm946, %v877, 0
  %v1188 = vsel %vm946, %v878, 0
  %v1191 = vsel %vm946, %v879, 0
  %v1194 = vsel %vm946, %v880, 0
  %v1197 = vsel %vm946, %v881, 0
  %v1200 = vsel %vm946, %v882, 0
  %v1203 = vsel %vm946, %v883, 0
  %v1206 = vsel %vm946, %v884, 0
  %v1209 = vsel %vm946, %v885, 0
  %v1212 = vsel %vm946, %v886, 0
  %v1215 = vsel %vm946, %v887, 0
  %v1218 = vsel %vm946, %v888, 0
  %v1221 = vsel %vm946, %v889, 0
  %v1224 = vsel %vm946, %v890, 0
  %v1227 = vsel %vm946, %v891, 0
  %v1230 = vsel %vm946, %v892, 0
  %v1233 = vsel %vm946, %v893, 0
  %v1236 = vsel %vm946, %v894, 0
  %v1239 = vsel %vm946, %v895, 0
  %v1242 = vsel %vm946, %v896, 0
  %v1245 = vsel %vm946, %v897, 0
  %v1248 = vsel %vm946, %v898, 0
  %v1251 = vsel %vm946, %v899, 0
  %v1254 = vsel %vm946, %v900, 0
  %v1257 = vsel %vm946, %v901, 0
  %v1260 = vsel %vm946, %v902, 0
  %v1263 = vsel %vm946, %v903, 0
  %v1266 = vsel %vm946, %v904, 0
  %v1269 = vsel %vm946, %v905, 0
  %v1272 = vsel %vm946, %v906, 0
  %v1275 = vsel %vm946, %v907, 0
  %v1278 = vsel %vm946, %v908, 0
  %v1281 = vsel %vm946, %v909, 0
  %v1284 = vsel %vm946, %v910, 0
  %v1287 = vsel %vm946, %v911, 0
  %v1290 = vsel %vm946, %v912, 0
  %v1293 = vsel %vm946, %v913, 0
  %v1296 = vsel %vm946, %v914, 0
  %v1299 = vsel %vm946, %v915, 0
  %v1302 = vsel %vm946, %v916, 0
  %v1305 = vsel %vm946, %v917, 0
  %v1308 = vsel %vm946, %v918, 0
  %v1311 = vsel %vm946, %v919, 0
  %v1314 = vsel %vm946, %v920, 0
  %v1317 = vsel %vm946, %v921, 0
  %v1320 = vsel %vm946, %v922, 0
  %v1323 = vsel %vm946, %v923, 0
  %v1326 = vsel %vm946, %v924, 0
  %v1329 = vsel %vm946, %v925, 0
  %1331 = vmatprep.subr.bf16.mxu0 %v939
  %1332 = vmatpush1.bf16.msra.mxu0 %v938
  %1333 = vmatprep.subr.bf16.mxu0 %v941
  %1334 = vmatpush1.bf16.msra.mxu0 %v940
  %1335 = vmatprep.subr.bf16.mxu0 0
  %1336 = vmatpush1.bf16.msra.mxu0 0
  %1337 = vmatprep.subr.bf16.mxu0 0
  %1338 = vmatpush1.bf16.msra.mxu0 0
  %1339 = vmatprep.subr.bf16.mxu0 0
  %1340 = vmatpush1.bf16.msra.mxu0 0
  %1341 = vmatprep.subr.bf16.mxu0 0
  %1342 = vmatpush1.bf16.msra.mxu0 0
  %1343 = vmatprep.subr.bf16.mxu0 0
  %1344 = vmatpush1.bf16.msra.mxu0 0
  %1345 = vmatprep.subr.bf16.mxu0 0
  %1346 = vmatpush1.bf16.msra.mxu0 0
  %1347 = vmatprep.subr.bf16.mxu0 0
  %1348 = vmatpush1.bf16.msra.mxu0 0
  %1349 = vmatprep.subr.bf16.mxu0 0
  %1350 = vmatpush1.bf16.msra.mxu0 0
  %1351 = vmatprep.subr.bf16.mxu0 0
  %1352 = vmatpush1.bf16.msra.mxu0 0
  %1353 = vmatprep.subr.bf16.mxu0 0
  %1354 = vmatpush1.bf16.msra.mxu0 0
  %1355 = vmatprep.subr.bf16.mxu0 0
  %1356 = vmatpush1.bf16.msra.mxu0 0
  %1357 = vmatprep.subr.bf16.mxu0 0
  %1358 = vmatpush1.bf16.msra.mxu0 0
  %1359 = vmatprep.subr.bf16.mxu0 0
  %1360 = vmatpush1.bf16.msra.mxu0 0
  %1361 = vmatprep.subr.bf16.mxu0 0
  %1362 = vmatpush1.bf16.msra.mxu0 0
  %1363 = vmatprep.mubr.bf16.mxu0 0
  %1364 = vmatmul.mubr.bf16.gmra.mrb[0].mxu0 %v948
  %v1365 = vpop.f32.mrb[0].mxu0
  %v1366 = vadd.f32 0.0, %v1365
  %v1367 = vpop.f32.mrb[0].mxu0
  %v1368 = vadd.f32 0.0, %v1367
  %v1369 = vpop.f32.mrb[0].mxu0
  %v1370 = vadd.f32 0.0, %v1369
  %v1371 = vpop.f32.mrb[0].mxu0
  %v1372 = vadd.f32 0.0, %v1371
  %1373 = vmatprep.mubr.bf16.mxu0 0
  %1374 = vmatmul.mubr.bf16.gmra.mrb[0].mxu0 %v951
  %v1375 = vpop.f32.mrb[0].mxu0
  %v1376 = vadd.f32 0.0, %v1375
  %v1377 = vpop.f32.mrb[0].mxu0
  %v1378 = vadd.f32 0.0, %v1377
  %v1379 = vpop.f32.mrb[0].mxu0
  %v1380 = vadd.f32 0.0, %v1379
  %v1381 = vpop.f32.mrb[0].mxu0
  %v1382 = vadd.f32 0.0, %v1381
  %1383 = vmatprep.mubr.bf16.mxu0 0
  %1384 = vmatmul.mubr.bf16.gmra.mrb[0].mxu0 %v954
  %v1385 = vpop.f32.mrb[0].mxu0
  %v1386 = vadd.f32 0.0, %v1385
  %v1387 = vpop.f32.mrb[0].mxu0
  %v1388 = vadd.f32 0.0, %v1387
  %v1389 = vpop.f32.mrb[0].mxu0
  %v1390 = vadd.f32 0.0, %v1389
  %v1391 = vpop.f32.mrb[0].mxu0
  %v1392 = vadd.f32 0.0, %v1391
  %1393 = vmatprep.mubr.bf16.mxu0 0
  %1394 = vmatmul.mubr.bf16.gmra.mrb[0].mxu0 %v957
  %v1395 = vpop.f32.mrb[0].mxu0
  %v1396 = vadd.f32 0.0, %v1395
  %v1397 = vpop.f32.mrb[0].mxu0
  %v1398 = vadd.f32 0.0, %v1397
  %v1399 = vpop.f32.mrb[0].mxu0
  %v1400 = vadd.f32 0.0, %v1399
  %v1401 = vpop.f32.mrb[0].mxu0
  %v1402 = vadd.f32 0.0, %v1401
  %1403 = vmatprep.mubr.bf16.mxu0 0
  %1404 = vmatmul.mubr.bf16.gmra.mrb[0].mxu0 %v960
  %v1405 = vpop.f32.mrb[0].mxu0
  %v1406 = vadd.f32 0.0, %v1405
  %v1407 = vpop.f32.mrb[0].mxu0
  %v1408 = vadd.f32 0.0, %v1407
  %v1409 = vpop.f32.mrb[0].mxu0
  %v1410 = vadd.f32 0.0, %v1409
  %v1411 = vpop.f32.mrb[0].mxu0
  %v1412 = vadd.f32 0.0, %v1411
  %1413 = vmatprep.mubr.bf16.mxu0 0
  %1414 = vmatmul.mubr.bf16.gmra.mrb[0].mxu0 %v963
  %v1415 = vpop.f32.mrb[0].mxu0
  %v1416 = vadd.f32 0.0, %v1415
  %v1417 = vpop.f32.mrb[0].mxu0
  %v1418 = vadd.f32 0.0, %v1417
  %v1419 = vpop.f32.mrb[0].mxu0
  %v1420 = vadd.f32 0.0, %v1419
  %v1421 = vpop.f32.mrb[0].mxu0
  %v1422 = vadd.f32 0.0, %v1421
  %1423 = vmatprep.mubr.bf16.mxu0 0
  %1424 = vmatmul.mubr.bf16.gmra.mrb[0].mxu0 %v966
  %v1425 = vpop.f32.mrb[0].mxu0
  %v1426 = vadd.f32 0.0, %v1425
  %v1427 = vpop.f32.mrb[0].mxu0
  %v1428 = vadd.f32 0.0, %v1427
  %v1429 = vpop.f32.mrb[0].mxu0
  %v1430 = vadd.f32 0.0, %v1429
  %v1431 = vpop.f32.mrb[0].mxu0
  %v1432 = vadd.f32 0.0, %v1431
  %1433 = vmatprep.mubr.bf16.mxu0 0
  %1434 = vmatmul.mubr.bf16.gmra.mrb[0].mxu0 %v969
  %v1435 = vpop.f32.mrb[0].mxu0
  %v1436 = vadd.f32 0.0, %v1435
  %v1437 = vpop.f32.mrb[0].mxu0
  %v1438 = vadd.f32 0.0, %v1437
  %v1439 = vpop.f32.mrb[0].mxu0
  %v1440 = vadd.f32 0.0, %v1439
  %v1441 = vpop.f32.mrb[0].mxu0
  %v1442 = vadd.f32 0.0, %v1441
  %1443 = vmatprep.mubr.bf16.mxu0 0
  %1444 = vmatmul.mubr.bf16.gmra.mrb[0].mxu0 %v972
  %v1445 = vpop.f32.mrb[0].mxu0
  %v1446 = vadd.f32 0.0, %v1445
  %v1447 = vpop.f32.mrb[0].mxu0
  %v1448 = vadd.f32 0.0, %v1447
  %v1449 = vpop.f32.mrb[0].mxu0
  %v1450 = vadd.f32 0.0, %v1449
  %v1451 = vpop.f32.mrb[0].mxu0
  %v1452 = vadd.f32 0.0, %v1451
  %1453 = vmatprep.mubr.bf16.mxu0 0
  %1454 = vmatmul.mubr.bf16.gmra.mrb[0].mxu0 %v975
  %v1455 = vpop.f32.mrb[0].mxu0
  %v1456 = vadd.f32 0.0, %v1455
  %v1457 = vpop.f32.mrb[0].mxu0
  %v1458 = vadd.f32 0.0, %v1457
  %v1459 = vpop.f32.mrb[0].mxu0
  %v1460 = vadd.f32 0.0, %v1459
  %v1461 = vpop.f32.mrb[0].mxu0
  %v1462 = vadd.f32 0.0, %v1461
  %1463 = vmatprep.mubr.bf16.mxu0 0
  %1464 = vmatmul.mubr.bf16.gmra.mrb[0].mxu0 %v978
  %v1465 = vpop.f32.mrb[0].mxu0
  %v1466 = vadd.f32 0.0, %v1465
  %v1467 = vpop.f32.mrb[0].mxu0
  %v1468 = vadd.f32 0.0, %v1467
  %v1469 = vpop.f32.mrb[0].mxu0
  %v1470 = vadd.f32 0.0, %v1469
  %v1471 = vpop.f32.mrb[0].mxu0
  %v1472 = vadd.f32 0.0, %v1471
  %1473 = vmatprep.mubr.bf16.mxu0 0
  %1474 = vmatmul.mubr.bf16.gmra.mrb[0].mxu0 %v981
  %v1475 = vpop.f32.mrb[0].mxu0
  %v1476 = vadd.f32 0.0, %v1475
  %v1477 = vpop.f32.mrb[0].mxu0
  %v1478 = vadd.f32 0.0, %v1477
  %v1479 = vpop.f32.mrb[0].mxu0
  %v1480 = vadd.f32 0.0, %v1479
  %v1481 = vpop.f32.mrb[0].mxu0
  %v1482 = vadd.f32 0.0, %v1481
  %1483 = vmatprep.mubr.bf16.mxu0 0
  %1484 = vmatmul.mubr.bf16.gmra.mrb[0].mxu0 %v984
  %v1485 = vpop.f32.mrb[0].mxu0
  %v1486 = vadd.f32 0.0, %v1485
  %v1487 = vpop.f32.mrb[0].mxu0
  %v1488 = vadd.f32 0.0, %v1487
  %v1489 = vpop.f32.mrb[0].mxu0
  %v1490 = vadd.f32 0.0, %v1489
  %v1491 = vpop.f32.mrb[0].mxu0
  %v1492 = vadd.f32 0.0, %v1491
  %1493 = vmatprep.mubr.bf16.mxu0 0
  %1494 = vmatmul.mubr.bf16.gmra.mrb[0].mxu0 %v987
  %v1495 = vpop.f32.mrb[0].mxu0
  %v1496 = vadd.f32 0.0, %v1495
  %v1497 = vpop.f32.mrb[0].mxu0
  %v1498 = vadd.f32 0.0, %v1497
  %v1499 = vpop.f32.mrb[0].mxu0
  %v1500 = vadd.f32 0.0, %v1499
  %v1501 = vpop.f32.mrb[0].mxu0
  %v1502 = vadd.f32 0.0, %v1501
  %1503 = vmatprep.mubr.bf16.mxu0 0
  %1504 = vmatmul.mubr.bf16.gmra.mrb[0].mxu0 %v990
  %v1505 = vpop.f32.mrb[0].mxu0
  %v1506 = vadd.f32 0.0, %v1505
  %v1507 = vpop.f32.mrb[0].mxu0
  %v1508 = vadd.f32 0.0, %v1507
  %v1509 = vpop.f32.mrb[0].mxu0
  %v1510 = vadd.f32 0.0, %v1509
  %v1511 = vpop.f32.mrb[0].mxu0
  %v1512 = vadd.f32 0.0, %v1511
  %1513 = vmatprep.mubr.bf16.mxu0 0
  %1514 = vmatmul.mubr.bf16.gmra.mrb[0].mxu0 %v993
  %v1515 = vpop.f32.mrb[0].mxu0
  %v1516 = vadd.f32 0.0, %v1515
  %v1517 = vpop.f32.mrb[0].mxu0
  %v1518 = vadd.f32 0.0, %v1517
  %v1519 = vpop.f32.mrb[0].mxu0
  %v1520 = vadd.f32 0.0, %v1519
  %v1521 = vpop.f32.mrb[0].mxu0
  %v1522 = vadd.f32 0.0, %v1521
  %1523 = vmatprep.mubr.bf16.mxu0 0
  %1524 = vmatmul.mubr.bf16.gmra.mrb[0].mxu0 %v996
  %v1525 = vpop.f32.mrb[0].mxu0
  %v1526 = vadd.f32 0.0, %v1525
  %v1527 = vpop.f32.mrb[0].mxu0
  %v1528 = vadd.f32 0.0, %v1527
  %v1529 = vpop.f32.mrb[0].mxu0
  %v1530 = vadd.f32 0.0, %v1529
  %v1531 = vpop.f32.mrb[0].mxu0
  %v1532 = vadd.f32 0.0, %v1531
  %1533 = vmatprep.mubr.bf16.mxu0 0
  %1534 = vmatmul.mubr.bf16.gmra.mrb[0].mxu0 %v999
  %v1535 = vpop.f32.mrb[0].mxu0
  %v1536 = vadd.f32 0.0, %v1535
  %v1537 = vpop.f32.mrb[0].mxu0
  %v1538 = vadd.f32 0.0, %v1537
  %v1539 = vpop.f32.mrb[0].mxu0
  %v1540 = vadd.f32 0.0, %v1539
  %v1541 = vpop.f32.mrb[0].mxu0
  %v1542 = vadd.f32 0.0, %v1541
  %1543 = vmatprep.mubr.bf16.mxu0 0
  %1544 = vmatmul.mubr.bf16.gmra.mrb[0].mxu0 %v1002
  %v1545 = vpop.f32.mrb[0].mxu0
  %v1546 = vadd.f32 0.0, %v1545
  %v1547 = vpop.f32.mrb[0].mxu0
  %v1548 = vadd.f32 0.0, %v1547
  %v1549 = vpop.f32.mrb[0].mxu0
  %v1550 = vadd.f32 0.0, %v1549
  %v1551 = vpop.f32.mrb[0].mxu0
  %v1552 = vadd.f32 0.0, %v1551
  %1553 = vmatprep.mubr.bf16.mxu0 0
  %1554 = vmatmul.mubr.bf16.gmra.mrb[0].mxu0 %v1005
  %v1555 = vpop.f32.mrb[0].mxu0
  %v1556 = vadd.f32 0.0, %v1555
  %v1557 = vpop.f32.mrb[0].mxu0
  %v1558 = vadd.f32 0.0, %v1557
  %v1559 = vpop.f32.mrb[0].mxu0
  %v1560 = vadd.f32 0.0, %v1559
  %v1561 = vpop.f32.mrb[0].mxu0
  %v1562 = vadd.f32 0.0, %v1561
  %1563 = vmatprep.mubr.bf16.mxu0 0
  %1564 = vmatmul.mubr.bf16.gmra.mrb[0].mxu0 %v1008
  %v1565 = vpop.f32.mrb[0].mxu0
  %v1566 = vadd.f32 0.0, %v1565
  %v1567 = vpop.f32.mrb[0].mxu0
  %v1568 = vadd.f32 0.0, %v1567
  %v1569 = vpop.f32.mrb[0].mxu0
  %v1570 = vadd.f32 0.0, %v1569
  %v1571 = vpop.f32.mrb[0].mxu0
  %v1572 = vadd.f32 0.0, %v1571
  %1573 = vmatprep.mubr.bf16.mxu0 0
  %1574 = vmatmul.mubr.bf16.gmra.mrb[0].mxu0 %v1011
  %v1575 = vpop.f32.mrb[0].mxu0
  %v1576 = vadd.f32 0.0, %v1575
  %v1577 = vpop.f32.mrb[0].mxu0
  %v1578 = vadd.f32 0.0, %v1577
  %v1579 = vpop.f32.mrb[0].mxu0
  %v1580 = vadd.f32 0.0, %v1579
  %v1581 = vpop.f32.mrb[0].mxu0
  %v1582 = vadd.f32 0.0, %v1581
  %1583 = vmatprep.mubr.bf16.mxu0 0
  %1584 = vmatmul.mubr.bf16.gmra.mrb[0].mxu0 %v1014
  %v1585 = vpop.f32.mrb[0].mxu0
  %v1586 = vadd.f32 0.0, %v1585
  %v1587 = vpop.f32.mrb[0].mxu0
  %v1588 = vadd.f32 0.0, %v1587
  %v1589 = vpop.f32.mrb[0].mxu0
  %v1590 = vadd.f32 0.0, %v1589
  %v1591 = vpop.f32.mrb[0].mxu0
  %v1592 = vadd.f32 0.0, %v1591
  %1593 = vmatprep.mubr.bf16.mxu0 0
  %1594 = vmatmul.mubr.bf16.gmra.mrb[0].mxu0 %v1017
  %v1595 = vpop.f32.mrb[0].mxu0
  %v1596 = vadd.f32 0.0, %v1595
  %v1597 = vpop.f32.mrb[0].mxu0
  %v1598 = vadd.f32 0.0, %v1597
  %v1599 = vpop.f32.mrb[0].mxu0
  %v1600 = vadd.f32 0.0, %v1599
  %v1601 = vpop.f32.mrb[0].mxu0
  %v1602 = vadd.f32 0.0, %v1601
  %1603 = vmatprep.mubr.bf16.mxu0 0
  %1604 = vmatmul.mubr.bf16.gmra.mrb[0].mxu0 %v1020
  %v1605 = vpop.f32.mrb[0].mxu0
  %v1606 = vadd.f32 0.0, %v1605
  %v1607 = vpop.f32.mrb[0].mxu0
  %v1608 = vadd.f32 0.0, %v1607
  %v1609 = vpop.f32.mrb[0].mxu0
  %v1610 = vadd.f32 0.0, %v1609
  %v1611 = vpop.f32.mrb[0].mxu0
  %v1612 = vadd.f32 0.0, %v1611
  %1613 = vmatprep.mubr.bf16.mxu0 0
  %1614 = vmatmul.mubr.bf16.gmra.mrb[0].mxu0 %v1023
  %v1615 = vpop.f32.mrb[0].mxu0
  %v1616 = vadd.f32 0.0, %v1615
  %v1617 = vpop.f32.mrb[0].mxu0
  %v1618 = vadd.f32 0.0, %v1617
  %v1619 = vpop.f32.mrb[0].mxu0
  %v1620 = vadd.f32 0.0, %v1619
  %v1621 = vpop.f32.mrb[0].mxu0
  %v1622 = vadd.f32 0.0, %v1621
  %1623 = vmatprep.mubr.bf16.mxu0 0
  %1624 = vmatmul.mubr.bf16.gmra.mrb[0].mxu0 %v1026
  %v1625 = vpop.f32.mrb[0].mxu0
  %v1626 = vadd.f32 0.0, %v1625
  %v1627 = vpop.f32.mrb[0].mxu0
  %v1628 = vadd.f32 0.0, %v1627
  %v1629 = vpop.f32.mrb[0].mxu0
  %v1630 = vadd.f32 0.0, %v1629
  %v1631 = vpop.f32.mrb[0].mxu0
  %v1632 = vadd.f32 0.0, %v1631
  %1633 = vmatprep.mubr.bf16.mxu0 0
  %1634 = vmatmul.mubr.bf16.gmra.mrb[0].mxu0 %v1029
  %v1635 = vpop.f32.mrb[0].mxu0
  %v1636 = vadd.f32 0.0, %v1635
  %v1637 = vpop.f32.mrb[0].mxu0
  %v1638 = vadd.f32 0.0, %v1637
  %v1639 = vpop.f32.mrb[0].mxu0
  %v1640 = vadd.f32 0.0, %v1639
  %v1641 = vpop.f32.mrb[0].mxu0
  %v1642 = vadd.f32 0.0, %v1641
  %1643 = vmatprep.mubr.bf16.mxu0 0
  %1644 = vmatmul.mubr.bf16.gmra.mrb[0].mxu0 %v1032
  %v1645 = vpop.f32.mrb[0].mxu0
  %v1646 = vadd.f32 0.0, %v1645
  %v1647 = vpop.f32.mrb[0].mxu0
  %v1648 = vadd.f32 0.0, %v1647
  %v1649 = vpop.f32.mrb[0].mxu0
  %v1650 = vadd.f32 0.0, %v1649
  %v1651 = vpop.f32.mrb[0].mxu0
  %v1652 = vadd.f32 0.0, %v1651
  %1653 = vmatprep.mubr.bf16.mxu0 0
  %1654 = vmatmul.mubr.bf16.gmra.mrb[0].mxu0 %v1035
  %v1655 = vpop.f32.mrb[0].mxu0
  %v1656 = vadd.f32 0.0, %v1655
  %v1657 = vpop.f32.mrb[0].mxu0
  %v1658 = vadd.f32 0.0, %v1657
  %v1659 = vpop.f32.mrb[0].mxu0
  %v1660 = vadd.f32 0.0, %v1659
  %v1661 = vpop.f32.mrb[0].mxu0
  %v1662 = vadd.f32 0.0, %v1661
  %1663 = vmatprep.mubr.bf16.mxu0 0
  %1664 = vmatmul.mubr.bf16.gmra.mrb[0].mxu0 %v1038
  %v1665 = vpop.f32.mrb[0].mxu0
  %v1666 = vadd.f32 0.0, %v1665
  %v1667 = vpop.f32.mrb[0].mxu0
  %v1668 = vadd.f32 0.0, %v1667
  %v1669 = vpop.f32.mrb[0].mxu0
  %v1670 = vadd.f32 0.0, %v1669
  %v1671 = vpop.f32.mrb[0].mxu0
  %v1672 = vadd.f32 0.0, %v1671
  %1673 = vmatprep.mubr.bf16.mxu0 0
  %1674 = vmatmul.mubr.bf16.gmra.mrb[0].mxu0 %v1041
  %v1675 = vpop.f32.mrb[0].mxu0
  %v1676 = vadd.f32 0.0, %v1675
  %v1677 = vpop.f32.mrb[0].mxu0
  %v1678 = vadd.f32 0.0, %v1677
  %v1679 = vpop.f32.mrb[0].mxu0
  %v1680 = vadd.f32 0.0, %v1679
  %v1681 = vpop.f32.mrb[0].mxu0
  %v1682 = vadd.f32 0.0, %v1681
  %1683 = vmatprep.mubr.bf16.mxu0 0
  %1684 = vmatmul.mubr.bf16.gmra.mrb[0].mxu0 %v1044
  %v1685 = vpop.f32.mrb[0].mxu0
  %v1686 = vadd.f32 0.0, %v1685
  %v1687 = vpop.f32.mrb[0].mxu0
  %v1688 = vadd.f32 0.0, %v1687
  %v1689 = vpop.f32.mrb[0].mxu0
  %v1690 = vadd.f32 0.0, %v1689
  %v1691 = vpop.f32.mrb[0].mxu0
  %v1692 = vadd.f32 0.0, %v1691
  %1693 = vmatprep.mubr.bf16.mxu0 0
  %1694 = vmatmul.mubr.bf16.gmra.mrb[0].mxu0 %v1047
  %v1695 = vpop.f32.mrb[0].mxu0
  %v1696 = vadd.f32 0.0, %v1695
  %v1697 = vpop.f32.mrb[0].mxu0
  %v1698 = vadd.f32 0.0, %v1697
  %v1699 = vpop.f32.mrb[0].mxu0
  %v1700 = vadd.f32 0.0, %v1699
  %v1701 = vpop.f32.mrb[0].mxu0
  %v1702 = vadd.f32 0.0, %v1701
  %1703 = vmatprep.mubr.bf16.mxu0 0
  %1704 = vmatmul.mubr.bf16.gmra.mrb[0].mxu0 %v1050
  %v1705 = vpop.f32.mrb[0].mxu0
  %v1706 = vadd.f32 0.0, %v1705
  %v1707 = vpop.f32.mrb[0].mxu0
  %v1708 = vadd.f32 0.0, %v1707
  %v1709 = vpop.f32.mrb[0].mxu0
  %v1710 = vadd.f32 0.0, %v1709
  %v1711 = vpop.f32.mrb[0].mxu0
  %v1712 = vadd.f32 0.0, %v1711
  %1713 = vmatprep.mubr.bf16.mxu0 0
  %1714 = vmatmul.mubr.bf16.gmra.mrb[0].mxu0 %v1053
  %v1715 = vpop.f32.mrb[0].mxu0
  %v1716 = vadd.f32 0.0, %v1715
  %v1717 = vpop.f32.mrb[0].mxu0
  %v1718 = vadd.f32 0.0, %v1717
  %v1719 = vpop.f32.mrb[0].mxu0
  %v1720 = vadd.f32 0.0, %v1719
  %v1721 = vpop.f32.mrb[0].mxu0
  %v1722 = vadd.f32 0.0, %v1721
  %1723 = vmatprep.mubr.bf16.mxu0 0
  %1724 = vmatmul.mubr.bf16.gmra.mrb[0].mxu0 %v1056
  %v1725 = vpop.f32.mrb[0].mxu0
  %v1726 = vadd.f32 0.0, %v1725
  %v1727 = vpop.f32.mrb[0].mxu0
  %v1728 = vadd.f32 0.0, %v1727
  %v1729 = vpop.f32.mrb[0].mxu0
  %v1730 = vadd.f32 0.0, %v1729
  %v1731 = vpop.f32.mrb[0].mxu0
  %v1732 = vadd.f32 0.0, %v1731
  %1733 = vmatprep.mubr.bf16.mxu0 0
  %1734 = vmatmul.mubr.bf16.gmra.mrb[0].mxu0 %v1059
  %v1735 = vpop.f32.mrb[0].mxu0
  %v1736 = vadd.f32 0.0, %v1735
  %v1737 = vpop.f32.mrb[0].mxu0
  %v1738 = vadd.f32 0.0, %v1737
  %v1739 = vpop.f32.mrb[0].mxu0
  %v1740 = vadd.f32 0.0, %v1739
  %v1741 = vpop.f32.mrb[0].mxu0
  %v1742 = vadd.f32 0.0, %v1741
  %1743 = vmatprep.mubr.bf16.mxu0 0
  %1744 = vmatmul.mubr.bf16.gmra.mrb[0].mxu0 %v1062
  %v1745 = vpop.f32.mrb[0].mxu0
  %v1746 = vadd.f32 0.0, %v1745
  %v1747 = vpop.f32.mrb[0].mxu0
  %v1748 = vadd.f32 0.0, %v1747
  %v1749 = vpop.f32.mrb[0].mxu0
  %v1750 = vadd.f32 0.0, %v1749
  %v1751 = vpop.f32.mrb[0].mxu0
  %v1752 = vadd.f32 0.0, %v1751
  %1753 = vmatprep.mubr.bf16.mxu0 0
  %1754 = vmatmul.mubr.bf16.gmra.mrb[0].mxu0 %v1065
  %v1755 = vpop.f32.mrb[0].mxu0
  %v1756 = vadd.f32 0.0, %v1755
  %v1757 = vpop.f32.mrb[0].mxu0
  %v1758 = vadd.f32 0.0, %v1757
  %v1759 = vpop.f32.mrb[0].mxu0
  %v1760 = vadd.f32 0.0, %v1759
  %v1761 = vpop.f32.mrb[0].mxu0
  %v1762 = vadd.f32 0.0, %v1761
  %1763 = vmatprep.mubr.bf16.mxu0 0
  %1764 = vmatmul.mubr.bf16.gmra.mrb[0].mxu0 %v1068
  %v1765 = vpop.f32.mrb[0].mxu0
  %v1766 = vadd.f32 0.0, %v1765
  %v1767 = vpop.f32.mrb[0].mxu0
  %v1768 = vadd.f32 0.0, %v1767
  %v1769 = vpop.f32.mrb[0].mxu0
  %v1770 = vadd.f32 0.0, %v1769
  %v1771 = vpop.f32.mrb[0].mxu0
  %v1772 = vadd.f32 0.0, %v1771
  %1773 = vmatprep.mubr.bf16.mxu0 0
  %1774 = vmatmul.mubr.bf16.gmra.mrb[0].mxu0 %v1071
  %v1775 = vpop.f32.mrb[0].mxu0
  %v1776 = vadd.f32 0.0, %v1775
  %v1777 = vpop.f32.mrb[0].mxu0
  %v1778 = vadd.f32 0.0, %v1777
  %v1779 = vpop.f32.mrb[0].mxu0
  %v1780 = vadd.f32 0.0, %v1779
  %v1781 = vpop.f32.mrb[0].mxu0
  %v1782 = vadd.f32 0.0, %v1781
  %1783 = vmatprep.mubr.bf16.mxu0 0
  %1784 = vmatmul.mubr.bf16.gmra.mrb[0].mxu0 %v1074
  %v1785 = vpop.f32.mrb[0].mxu0
  %v1786 = vadd.f32 0.0, %v1785
  %v1787 = vpop.f32.mrb[0].mxu0
  %v1788 = vadd.f32 0.0, %v1787
  %v1789 = vpop.f32.mrb[0].mxu0
  %v1790 = vadd.f32 0.0, %v1789
  %v1791 = vpop.f32.mrb[0].mxu0
  %v1792 = vadd.f32 0.0, %v1791
  %1793 = vmatprep.mubr.bf16.mxu0 0
  %1794 = vmatmul.mubr.bf16.gmra.mrb[0].mxu0 %v1077
  %v1795 = vpop.f32.mrb[0].mxu0
  %v1796 = vadd.f32 0.0, %v1795
  %v1797 = vpop.f32.mrb[0].mxu0
  %v1798 = vadd.f32 0.0, %v1797
  %v1799 = vpop.f32.mrb[0].mxu0
  %v1800 = vadd.f32 0.0, %v1799
  %v1801 = vpop.f32.mrb[0].mxu0
  %v1802 = vadd.f32 0.0, %v1801
  %1803 = vmatprep.mubr.bf16.mxu0 0
  %1804 = vmatmul.mubr.bf16.gmra.mrb[0].mxu0 %v1080
  %v1805 = vpop.f32.mrb[0].mxu0
  %v1806 = vadd.f32 0.0, %v1805
  %v1807 = vpop.f32.mrb[0].mxu0
  %v1808 = vadd.f32 0.0, %v1807
  %v1809 = vpop.f32.mrb[0].mxu0
  %v1810 = vadd.f32 0.0, %v1809
  %v1811 = vpop.f32.mrb[0].mxu0
  %v1812 = vadd.f32 0.0, %v1811
  %1813 = vmatprep.mubr.bf16.mxu0 0
  %1814 = vmatmul.mubr.bf16.gmra.mrb[0].mxu0 %v1083
  %v1815 = vpop.f32.mrb[0].mxu0
  %v1816 = vadd.f32 0.0, %v1815
  %v1817 = vpop.f32.mrb[0].mxu0
  %v1818 = vadd.f32 0.0, %v1817
  %v1819 = vpop.f32.mrb[0].mxu0
  %v1820 = vadd.f32 0.0, %v1819
  %v1821 = vpop.f32.mrb[0].mxu0
  %v1822 = vadd.f32 0.0, %v1821
  %1823 = vmatprep.mubr.bf16.mxu0 0
  %1824 = vmatmul.mubr.bf16.gmra.mrb[0].mxu0 %v1086
  %v1825 = vpop.f32.mrb[0].mxu0
  %v1826 = vadd.f32 0.0, %v1825
  %v1827 = vpop.f32.mrb[0].mxu0
  %v1828 = vadd.f32 0.0, %v1827
  %v1829 = vpop.f32.mrb[0].mxu0
  %v1830 = vadd.f32 0.0, %v1829
  %v1831 = vpop.f32.mrb[0].mxu0
  %v1832 = vadd.f32 0.0, %v1831
  %1833 = vmatprep.mubr.bf16.mxu0 0
  %1834 = vmatmul.mubr.bf16.gmra.mrb[0].mxu0 %v1089
  %v1835 = vpop.f32.mrb[0].mxu0
  %v1836 = vadd.f32 0.0, %v1835
  %v1837 = vpop.f32.mrb[0].mxu0
  %v1838 = vadd.f32 0.0, %v1837
  %v1839 = vpop.f32.mrb[0].mxu0
  %v1840 = vadd.f32 0.0, %v1839
  %v1841 = vpop.f32.mrb[0].mxu0
  %v1842 = vadd.f32 0.0, %v1841
  %1843 = vmatprep.mubr.bf16.mxu0 0
  %1844 = vmatmul.mubr.bf16.gmra.mrb[0].mxu0 %v1092
  %v1845 = vpop.f32.mrb[0].mxu0
  %v1846 = vadd.f32 0.0, %v1845
  %v1847 = vpop.f32.mrb[0].mxu0
  %v1848 = vadd.f32 0.0, %v1847
  %v1849 = vpop.f32.mrb[0].mxu0
  %v1850 = vadd.f32 0.0, %v1849
  %v1851 = vpop.f32.mrb[0].mxu0
  %v1852 = vadd.f32 0.0, %v1851
  %1853 = vmatprep.mubr.bf16.mxu0 0
  %1854 = vmatmul.mubr.bf16.gmra.mrb[0].mxu0 %v1095
  %v1855 = vpop.f32.mrb[0].mxu0
  %v1856 = vadd.f32 0.0, %v1855
  %v1857 = vpop.f32.mrb[0].mxu0
  %v1858 = vadd.f32 0.0, %v1857
  %v1859 = vpop.f32.mrb[0].mxu0
  %v1860 = vadd.f32 0.0, %v1859
  %v1861 = vpop.f32.mrb[0].mxu0
  %v1862 = vadd.f32 0.0, %v1861
  %1863 = vmatprep.mubr.bf16.mxu0 0
  %1864 = vmatmul.mubr.bf16.gmra.mrb[0].mxu0 %v1098
  %v1865 = vpop.f32.mrb[0].mxu0
  %v1866 = vadd.f32 0.0, %v1865
  %v1867 = vpop.f32.mrb[0].mxu0
  %v1868 = vadd.f32 0.0, %v1867
  %v1869 = vpop.f32.mrb[0].mxu0
  %v1870 = vadd.f32 0.0, %v1869
  %v1871 = vpop.f32.mrb[0].mxu0
  %v1872 = vadd.f32 0.0, %v1871
  %1873 = vmatprep.mubr.bf16.mxu0 0
  %1874 = vmatmul.mubr.bf16.gmra.mrb[0].mxu0 %v1101
  %v1875 = vpop.f32.mrb[0].mxu0
  %v1876 = vadd.f32 0.0, %v1875
  %v1877 = vpop.f32.mrb[0].mxu0
  %v1878 = vadd.f32 0.0, %v1877
  %v1879 = vpop.f32.mrb[0].mxu0
  %v1880 = vadd.f32 0.0, %v1879
  %v1881 = vpop.f32.mrb[0].mxu0
  %v1882 = vadd.f32 0.0, %v1881
  %1883 = vmatprep.mubr.bf16.mxu0 0
  %1884 = vmatmul.mubr.bf16.gmra.mrb[0].mxu0 %v1104
  %v1885 = vpop.f32.mrb[0].mxu0
  %v1886 = vadd.f32 0.0, %v1885
  %v1887 = vpop.f32.mrb[0].mxu0
  %v1888 = vadd.f32 0.0, %v1887
  %v1889 = vpop.f32.mrb[0].mxu0
  %v1890 = vadd.f32 0.0, %v1889
  %v1891 = vpop.f32.mrb[0].mxu0
  %v1892 = vadd.f32 0.0, %v1891
  %1893 = vmatprep.mubr.bf16.mxu0 0
  %1894 = vmatmul.mubr.bf16.gmra.mrb[0].mxu0 %v1107
  %v1895 = vpop.f32.mrb[0].mxu0
  %v1896 = vadd.f32 0.0, %v1895
  %v1897 = vpop.f32.mrb[0].mxu0
  %v1898 = vadd.f32 0.0, %v1897
  %v1899 = vpop.f32.mrb[0].mxu0
  %v1900 = vadd.f32 0.0, %v1899
  %v1901 = vpop.f32.mrb[0].mxu0
  %v1902 = vadd.f32 0.0, %v1901
  %1903 = vmatprep.mubr.bf16.mxu0 0
  %1904 = vmatmul.mubr.bf16.gmra.mrb[0].mxu0 %v1110
  %v1905 = vpop.f32.mrb[0].mxu0
  %v1906 = vadd.f32 0.0, %v1905
  %v1907 = vpop.f32.mrb[0].mxu0
  %v1908 = vadd.f32 0.0, %v1907
  %v1909 = vpop.f32.mrb[0].mxu0
  %v1910 = vadd.f32 0.0, %v1909
  %v1911 = vpop.f32.mrb[0].mxu0
  %v1912 = vadd.f32 0.0, %v1911
  %1913 = vmatprep.mubr.bf16.mxu0 0
  %1914 = vmatmul.mubr.bf16.gmra.mrb[0].mxu0 %v1113
  %v1915 = vpop.f32.mrb[0].mxu0
  %v1916 = vadd.f32 0.0, %v1915
  %v1917 = vpop.f32.mrb[0].mxu0
  %v1918 = vadd.f32 0.0, %v1917
  %v1919 = vpop.f32.mrb[0].mxu0
  %v1920 = vadd.f32 0.0, %v1919
  %v1921 = vpop.f32.mrb[0].mxu0
  %v1922 = vadd.f32 0.0, %v1921
  %1923 = vmatprep.mubr.bf16.mxu0 0
  %1924 = vmatmul.mubr.bf16.gmra.mrb[0].mxu0 %v1116
  %v1925 = vpop.f32.mrb[0].mxu0
  %v1926 = vadd.f32 0.0, %v1925
  %v1927 = vpop.f32.mrb[0].mxu0
  %v1928 = vadd.f32 0.0, %v1927
  %v1929 = vpop.f32.mrb[0].mxu0
  %v1930 = vadd.f32 0.0, %v1929
  %v1931 = vpop.f32.mrb[0].mxu0
  %v1932 = vadd.f32 0.0, %v1931
  %1933 = vmatprep.mubr.bf16.mxu0 0
  %1934 = vmatmul.mubr.bf16.gmra.mrb[0].mxu0 %v1119
  %v1935 = vpop.f32.mrb[0].mxu0
  %v1936 = vadd.f32 0.0, %v1935
  %v1937 = vpop.f32.mrb[0].mxu0
  %v1938 = vadd.f32 0.0, %v1937
  %v1939 = vpop.f32.mrb[0].mxu0
  %v1940 = vadd.f32 0.0, %v1939
  %v1941 = vpop.f32.mrb[0].mxu0
  %v1942 = vadd.f32 0.0, %v1941
  %1943 = vmatprep.mubr.bf16.mxu0 0
  %1944 = vmatmul.mubr.bf16.gmra.mrb[0].mxu0 %v1122
  %v1945 = vpop.f32.mrb[0].mxu0
  %v1946 = vadd.f32 0.0, %v1945
  %v1947 = vpop.f32.mrb[0].mxu0
  %v1948 = vadd.f32 0.0, %v1947
  %v1949 = vpop.f32.mrb[0].mxu0
  %v1950 = vadd.f32 0.0, %v1949
  %v1951 = vpop.f32.mrb[0].mxu0
  %v1952 = vadd.f32 0.0, %v1951
  %1953 = vmatprep.mubr.bf16.mxu0 0
  %1954 = vmatmul.mubr.bf16.gmra.mrb[0].mxu0 %v1125
  %v1955 = vpop.f32.mrb[0].mxu0
  %v1956 = vadd.f32 0.0, %v1955
  %v1957 = vpop.f32.mrb[0].mxu0
  %v1958 = vadd.f32 0.0, %v1957
  %v1959 = vpop.f32.mrb[0].mxu0
  %v1960 = vadd.f32 0.0, %v1959
  %v1961 = vpop.f32.mrb[0].mxu0
  %v1962 = vadd.f32 0.0, %v1961
  %1963 = vmatprep.mubr.bf16.mxu0 0
  %1964 = vmatmul.mubr.bf16.gmra.mrb[0].mxu0 %v1128
  %v1965 = vpop.f32.mrb[0].mxu0
  %v1966 = vadd.f32 0.0, %v1965
  %v1967 = vpop.f32.mrb[0].mxu0
  %v1968 = vadd.f32 0.0, %v1967
  %v1969 = vpop.f32.mrb[0].mxu0
  %v1970 = vadd.f32 0.0, %v1969
  %v1971 = vpop.f32.mrb[0].mxu0
  %v1972 = vadd.f32 0.0, %v1971
  %1973 = vmatprep.mubr.bf16.mxu0 0
  %1974 = vmatmul.mubr.bf16.gmra.mrb[0].mxu0 %v1131
  %v1975 = vpop.f32.mrb[0].mxu0
  %v1976 = vadd.f32 0.0, %v1975
  %v1977 = vpop.f32.mrb[0].mxu0
  %v1978 = vadd.f32 0.0, %v1977
  %v1979 = vpop.f32.mrb[0].mxu0
  %v1980 = vadd.f32 0.0, %v1979
  %v1981 = vpop.f32.mrb[0].mxu0
  %v1982 = vadd.f32 0.0, %v1981
  %1983 = vmatprep.mubr.bf16.mxu0 0
  %1984 = vmatmul.mubr.bf16.gmra.mrb[0].mxu0 %v1134
  %v1985 = vpop.f32.mrb[0].mxu0
  %v1986 = vadd.f32 0.0, %v1985
  %v1987 = vpop.f32.mrb[0].mxu0
  %v1988 = vadd.f32 0.0, %v1987
  %v1989 = vpop.f32.mrb[0].mxu0
  %v1990 = vadd.f32 0.0, %v1989
  %v1991 = vpop.f32.mrb[0].mxu0
  %v1992 = vadd.f32 0.0, %v1991
  %1993 = vmatprep.mubr.bf16.mxu0 0
  %1994 = vmatmul.mubr.bf16.gmra.mrb[0].mxu0 %v1137
  %v1995 = vpop.f32.mrb[0].mxu0
  %v1996 = vadd.f32 0.0, %v1995
  %v1997 = vpop.f32.mrb[0].mxu0
  %v1998 = vadd.f32 0.0, %v1997
  %v1999 = vpop.f32.mrb[0].mxu0
  %v2000 = vadd.f32 0.0, %v1999
  %v2001 = vpop.f32.mrb[0].mxu0
  %v2002 = vadd.f32 0.0, %v2001
  %2003 = vmatprep.mubr.bf16.mxu0 0
  %2004 = vmatmul.mubr.bf16.gmra.mrb[0].mxu0 %v1140
  %v2005 = vpop.f32.mrb[0].mxu0
  %v2006 = vadd.f32 0.0, %v2005
  %v2007 = vpop.f32.mrb[0].mxu0
  %v2008 = vadd.f32 0.0, %v2007
  %v2009 = vpop.f32.mrb[0].mxu0
  %v2010 = vadd.f32 0.0, %v2009
  %v2011 = vpop.f32.mrb[0].mxu0
  %v2012 = vadd.f32 0.0, %v2011
  %2013 = vmatprep.mubr.bf16.mxu0 0
  %2014 = vmatmul.mubr.bf16.gmra.mrb[0].mxu0 %v1143
  %v2015 = vpop.f32.mrb[0].mxu0
  %v2016 = vadd.f32 0.0, %v2015
  %v2017 = vpop.f32.mrb[0].mxu0
  %v2018 = vadd.f32 0.0, %v2017
  %v2019 = vpop.f32.mrb[0].mxu0
  %v2020 = vadd.f32 0.0, %v2019
  %v2021 = vpop.f32.mrb[0].mxu0
  %v2022 = vadd.f32 0.0, %v2021
  %2023 = vmatprep.mubr.bf16.mxu0 0
  %2024 = vmatmul.mubr.bf16.gmra.mrb[0].mxu0 %v1146
  %v2025 = vpop.f32.mrb[0].mxu0
  %v2026 = vadd.f32 0.0, %v2025
  %v2027 = vpop.f32.mrb[0].mxu0
  %v2028 = vadd.f32 0.0, %v2027
  %v2029 = vpop.f32.mrb[0].mxu0
  %v2030 = vadd.f32 0.0, %v2029
  %v2031 = vpop.f32.mrb[0].mxu0
  %v2032 = vadd.f32 0.0, %v2031
  %2033 = vmatprep.mubr.bf16.mxu0 0
  %2034 = vmatmul.mubr.bf16.gmra.mrb[0].mxu0 %v1149
  %v2035 = vpop.f32.mrb[0].mxu0
  %v2036 = vadd.f32 0.0, %v2035
  %v2037 = vpop.f32.mrb[0].mxu0
  %v2038 = vadd.f32 0.0, %v2037
  %v2039 = vpop.f32.mrb[0].mxu0
  %v2040 = vadd.f32 0.0, %v2039
  %v2041 = vpop.f32.mrb[0].mxu0
  %v2042 = vadd.f32 0.0, %v2041
  %2043 = vmatprep.mubr.bf16.mxu0 0
  %2044 = vmatmul.mubr.bf16.gmra.mrb[0].mxu0 %v1152
  %v2045 = vpop.f32.mrb[0].mxu0
  %v2046 = vadd.f32 0.0, %v2045
  %v2047 = vpop.f32.mrb[0].mxu0
  %v2048 = vadd.f32 0.0, %v2047
  %v2049 = vpop.f32.mrb[0].mxu0
  %v2050 = vadd.f32 0.0, %v2049
  %v2051 = vpop.f32.mrb[0].mxu0
  %v2052 = vadd.f32 0.0, %v2051
  %2053 = vmatprep.mubr.bf16.mxu0 0
  %2054 = vmatmul.mubr.bf16.gmra.mrb[0].mxu0 %v1155
  %v2055 = vpop.f32.mrb[0].mxu0
  %v2056 = vadd.f32 0.0, %v2055
  %v2057 = vpop.f32.mrb[0].mxu0
  %v2058 = vadd.f32 0.0, %v2057
  %v2059 = vpop.f32.mrb[0].mxu0
  %v2060 = vadd.f32 0.0, %v2059
  %v2061 = vpop.f32.mrb[0].mxu0
  %v2062 = vadd.f32 0.0, %v2061
  %2063 = vmatprep.mubr.bf16.mxu0 0
  %2064 = vmatmul.mubr.bf16.gmra.mrb[0].mxu0 %v1158
  %v2065 = vpop.f32.mrb[0].mxu0
  %v2066 = vadd.f32 0.0, %v2065
  %v2067 = vpop.f32.mrb[0].mxu0
  %v2068 = vadd.f32 0.0, %v2067
  %v2069 = vpop.f32.mrb[0].mxu0
  %v2070 = vadd.f32 0.0, %v2069
  %v2071 = vpop.f32.mrb[0].mxu0
  %v2072 = vadd.f32 0.0, %v2071
  %2073 = vmatprep.mubr.bf16.mxu0 0
  %2074 = vmatmul.mubr.bf16.gmra.mrb[0].mxu0 %v1161
  %v2075 = vpop.f32.mrb[0].mxu0
  %v2076 = vadd.f32 0.0, %v2075
  %v2077 = vpop.f32.mrb[0].mxu0
  %v2078 = vadd.f32 0.0, %v2077
  %v2079 = vpop.f32.mrb[0].mxu0
  %v2080 = vadd.f32 0.0, %v2079
  %v2081 = vpop.f32.mrb[0].mxu0
  %v2082 = vadd.f32 0.0, %v2081
  %2083 = vmatprep.mubr.bf16.mxu0 0
  %2084 = vmatmul.mubr.bf16.gmra.mrb[0].mxu0 %v1164
  %v2085 = vpop.f32.mrb[0].mxu0
  %v2086 = vadd.f32 0.0, %v2085
  %v2087 = vpop.f32.mrb[0].mxu0
  %v2088 = vadd.f32 0.0, %v2087
  %v2089 = vpop.f32.mrb[0].mxu0
  %v2090 = vadd.f32 0.0, %v2089
  %v2091 = vpop.f32.mrb[0].mxu0
  %v2092 = vadd.f32 0.0, %v2091
  %2093 = vmatprep.mubr.bf16.mxu0 0
  %2094 = vmatmul.mubr.bf16.gmra.mrb[0].mxu0 %v1167
  %v2095 = vpop.f32.mrb[0].mxu0
  %v2096 = vadd.f32 0.0, %v2095
  %v2097 = vpop.f32.mrb[0].mxu0
  %v2098 = vadd.f32 0.0, %v2097
  %v2099 = vpop.f32.mrb[0].mxu0
  %v2100 = vadd.f32 0.0, %v2099
  %v2101 = vpop.f32.mrb[0].mxu0
  %v2102 = vadd.f32 0.0, %v2101
  %2103 = vmatprep.mubr.bf16.mxu0 0
  %2104 = vmatmul.mubr.bf16.gmra.mrb[0].mxu0 %v1170
  %v2105 = vpop.f32.mrb[0].mxu0
  %v2106 = vadd.f32 0.0, %v2105
  %v2107 = vpop.f32.mrb[0].mxu0
  %v2108 = vadd.f32 0.0, %v2107
  %v2109 = vpop.f32.mrb[0].mxu0
  %v2110 = vadd.f32 0.0, %v2109
  %v2111 = vpop.f32.mrb[0].mxu0
  %v2112 = vadd.f32 0.0, %v2111
  %2113 = vmatprep.mubr.bf16.mxu0 0
  %2114 = vmatmul.mubr.bf16.gmra.mrb[0].mxu0 %v1173
  %v2115 = vpop.f32.mrb[0].mxu0
  %v2116 = vadd.f32 0.0, %v2115
  %v2117 = vpop.f32.mrb[0].mxu0
  %v2118 = vadd.f32 0.0, %v2117
  %v2119 = vpop.f32.mrb[0].mxu0
  %v2120 = vadd.f32 0.0, %v2119
  %v2121 = vpop.f32.mrb[0].mxu0
  %v2122 = vadd.f32 0.0, %v2121
  %2123 = vmatprep.mubr.bf16.mxu0 0
  %2124 = vmatmul.mubr.bf16.gmra.mrb[0].mxu0 %v1176
  %v2125 = vpop.f32.mrb[0].mxu0
  %v2126 = vadd.f32 0.0, %v2125
  %v2127 = vpop.f32.mrb[0].mxu0
  %v2128 = vadd.f32 0.0, %v2127
  %v2129 = vpop.f32.mrb[0].mxu0
  %v2130 = vadd.f32 0.0, %v2129
  %v2131 = vpop.f32.mrb[0].mxu0
  %v2132 = vadd.f32 0.0, %v2131
  %2133 = vmatprep.mubr.bf16.mxu0 0
  %2134 = vmatmul.mubr.bf16.gmra.mrb[0].mxu0 %v1179
  %v2135 = vpop.f32.mrb[0].mxu0
  %v2136 = vadd.f32 0.0, %v2135
  %v2137 = vpop.f32.mrb[0].mxu0
  %v2138 = vadd.f32 0.0, %v2137
  %v2139 = vpop.f32.mrb[0].mxu0
  %v2140 = vadd.f32 0.0, %v2139
  %v2141 = vpop.f32.mrb[0].mxu0
  %v2142 = vadd.f32 0.0, %v2141
  %2143 = vmatprep.mubr.bf16.mxu0 0
  %2144 = vmatmul.mubr.bf16.gmra.mrb[0].mxu0 %v1182
  %v2145 = vpop.f32.mrb[0].mxu0
  %v2146 = vadd.f32 0.0, %v2145
  %v2147 = vpop.f32.mrb[0].mxu0
  %v2148 = vadd.f32 0.0, %v2147
  %v2149 = vpop.f32.mrb[0].mxu0
  %v2150 = vadd.f32 0.0, %v2149
  %v2151 = vpop.f32.mrb[0].mxu0
  %v2152 = vadd.f32 0.0, %v2151
  %2153 = vmatprep.mubr.bf16.mxu0 0
  %2154 = vmatmul.mubr.bf16.gmra.mrb[0].mxu0 %v1185
  %v2155 = vpop.f32.mrb[0].mxu0
  %v2156 = vadd.f32 0.0, %v2155
  %v2157 = vpop.f32.mrb[0].mxu0
  %v2158 = vadd.f32 0.0, %v2157
  %v2159 = vpop.f32.mrb[0].mxu0
  %v2160 = vadd.f32 0.0, %v2159
  %v2161 = vpop.f32.mrb[0].mxu0
  %v2162 = vadd.f32 0.0, %v2161
  %2163 = vmatprep.mubr.bf16.mxu0 0
  %2164 = vmatmul.mubr.bf16.gmra.mrb[0].mxu0 %v1188
  %v2165 = vpop.f32.mrb[0].mxu0
  %v2166 = vadd.f32 0.0, %v2165
  %v2167 = vpop.f32.mrb[0].mxu0
  %v2168 = vadd.f32 0.0, %v2167
  %v2169 = vpop.f32.mrb[0].mxu0
  %v2170 = vadd.f32 0.0, %v2169
  %v2171 = vpop.f32.mrb[0].mxu0
  %v2172 = vadd.f32 0.0, %v2171
  %2173 = vmatprep.mubr.bf16.mxu0 0
  %2174 = vmatmul.mubr.bf16.gmra.mrb[0].mxu0 %v1191
  %v2175 = vpop.f32.mrb[0].mxu0
  %v2176 = vadd.f32 0.0, %v2175
  %v2177 = vpop.f32.mrb[0].mxu0
  %v2178 = vadd.f32 0.0, %v2177
  %v2179 = vpop.f32.mrb[0].mxu0
  %v2180 = vadd.f32 0.0, %v2179
  %v2181 = vpop.f32.mrb[0].mxu0
  %v2182 = vadd.f32 0.0, %v2181
  %2183 = vmatprep.mubr.bf16.mxu0 0
  %2184 = vmatmul.mubr.bf16.gmra.mrb[0].mxu0 %v1194
  %v2185 = vpop.f32.mrb[0].mxu0
  %v2186 = vadd.f32 0.0, %v2185
  %v2187 = vpop.f32.mrb[0].mxu0
  %v2188 = vadd.f32 0.0, %v2187
  %v2189 = vpop.f32.mrb[0].mxu0
  %v2190 = vadd.f32 0.0, %v2189
  %v2191 = vpop.f32.mrb[0].mxu0
  %v2192 = vadd.f32 0.0, %v2191
  %2193 = vmatprep.mubr.bf16.mxu0 0
  %2194 = vmatmul.mubr.bf16.gmra.mrb[0].mxu0 %v1197
  %v2195 = vpop.f32.mrb[0].mxu0
  %v2196 = vadd.f32 0.0, %v2195
  %v2197 = vpop.f32.mrb[0].mxu0
  %v2198 = vadd.f32 0.0, %v2197
  %v2199 = vpop.f32.mrb[0].mxu0
  %v2200 = vadd.f32 0.0, %v2199
  %v2201 = vpop.f32.mrb[0].mxu0
  %v2202 = vadd.f32 0.0, %v2201
  %2203 = vmatprep.mubr.bf16.mxu0 0
  %2204 = vmatmul.mubr.bf16.gmra.mrb[0].mxu0 %v1200
  %v2205 = vpop.f32.mrb[0].mxu0
  %v2206 = vadd.f32 0.0, %v2205
  %v2207 = vpop.f32.mrb[0].mxu0
  %v2208 = vadd.f32 0.0, %v2207
  %v2209 = vpop.f32.mrb[0].mxu0
  %v2210 = vadd.f32 0.0, %v2209
  %v2211 = vpop.f32.mrb[0].mxu0
  %v2212 = vadd.f32 0.0, %v2211
  %2213 = vmatprep.mubr.bf16.mxu0 0
  %2214 = vmatmul.mubr.bf16.gmra.mrb[0].mxu0 %v1203
  %v2215 = vpop.f32.mrb[0].mxu0
  %v2216 = vadd.f32 0.0, %v2215
  %v2217 = vpop.f32.mrb[0].mxu0
  %v2218 = vadd.f32 0.0, %v2217
  %v2219 = vpop.f32.mrb[0].mxu0
  %v2220 = vadd.f32 0.0, %v2219
  %v2221 = vpop.f32.mrb[0].mxu0
  %v2222 = vadd.f32 0.0, %v2221
  %2223 = vmatprep.mubr.bf16.mxu0 0
  %2224 = vmatmul.mubr.bf16.gmra.mrb[0].mxu0 %v1206
  %v2225 = vpop.f32.mrb[0].mxu0
  %v2226 = vadd.f32 0.0, %v2225
  %v2227 = vpop.f32.mrb[0].mxu0
  %v2228 = vadd.f32 0.0, %v2227
  %v2229 = vpop.f32.mrb[0].mxu0
  %v2230 = vadd.f32 0.0, %v2229
  %v2231 = vpop.f32.mrb[0].mxu0
  %v2232 = vadd.f32 0.0, %v2231
  %2233 = vmatprep.mubr.bf16.mxu0 0
  %2234 = vmatmul.mubr.bf16.gmra.mrb[0].mxu0 %v1209
  %v2235 = vpop.f32.mrb[0].mxu0
  %v2236 = vadd.f32 0.0, %v2235
  %v2237 = vpop.f32.mrb[0].mxu0
  %v2238 = vadd.f32 0.0, %v2237
  %v2239 = vpop.f32.mrb[0].mxu0
  %v2240 = vadd.f32 0.0, %v2239
  %v2241 = vpop.f32.mrb[0].mxu0
  %v2242 = vadd.f32 0.0, %v2241
  %2243 = vmatprep.mubr.bf16.mxu0 0
  %2244 = vmatmul.mubr.bf16.gmra.mrb[0].mxu0 %v1212
  %v2245 = vpop.f32.mrb[0].mxu0
  %v2246 = vadd.f32 0.0, %v2245
  %v2247 = vpop.f32.mrb[0].mxu0
  %v2248 = vadd.f32 0.0, %v2247
  %v2249 = vpop.f32.mrb[0].mxu0
  %v2250 = vadd.f32 0.0, %v2249
  %v2251 = vpop.f32.mrb[0].mxu0
  %v2252 = vadd.f32 0.0, %v2251
  %2253 = vmatprep.mubr.bf16.mxu0 0
  %2254 = vmatmul.mubr.bf16.gmra.mrb[0].mxu0 %v1215
  %v2255 = vpop.f32.mrb[0].mxu0
  %v2256 = vadd.f32 0.0, %v2255
  %v2257 = vpop.f32.mrb[0].mxu0
  %v2258 = vadd.f32 0.0, %v2257
  %v2259 = vpop.f32.mrb[0].mxu0
  %v2260 = vadd.f32 0.0, %v2259
  %v2261 = vpop.f32.mrb[0].mxu0
  %v2262 = vadd.f32 0.0, %v2261
  %2263 = vmatprep.mubr.bf16.mxu0 0
  %2264 = vmatmul.mubr.bf16.gmra.mrb[0].mxu0 %v1218
  %v2265 = vpop.f32.mrb[0].mxu0
  %v2266 = vadd.f32 0.0, %v2265
  %v2267 = vpop.f32.mrb[0].mxu0
  %v2268 = vadd.f32 0.0, %v2267
  %v2269 = vpop.f32.mrb[0].mxu0
  %v2270 = vadd.f32 0.0, %v2269
  %v2271 = vpop.f32.mrb[0].mxu0
  %v2272 = vadd.f32 0.0, %v2271
  %2273 = vmatprep.mubr.bf16.mxu0 0
  %2274 = vmatmul.mubr.bf16.gmra.mrb[0].mxu0 %v1221
  %v2275 = vpop.f32.mrb[0].mxu0
  %v2276 = vadd.f32 0.0, %v2275
  %v2277 = vpop.f32.mrb[0].mxu0
  %v2278 = vadd.f32 0.0, %v2277
  %v2279 = vpop.f32.mrb[0].mxu0
  %v2280 = vadd.f32 0.0, %v2279
  %v2281 = vpop.f32.mrb[0].mxu0
  %v2282 = vadd.f32 0.0, %v2281
  %2283 = vmatprep.mubr.bf16.mxu0 0
  %2284 = vmatmul.mubr.bf16.gmra.mrb[0].mxu0 %v1224
  %v2285 = vpop.f32.mrb[0].mxu0
  %v2286 = vadd.f32 0.0, %v2285
  %v2287 = vpop.f32.mrb[0].mxu0
  %v2288 = vadd.f32 0.0, %v2287
  %v2289 = vpop.f32.mrb[0].mxu0
  %v2290 = vadd.f32 0.0, %v2289
  %v2291 = vpop.f32.mrb[0].mxu0
  %v2292 = vadd.f32 0.0, %v2291
  %2293 = vmatprep.mubr.bf16.mxu0 0
  %2294 = vmatmul.mubr.bf16.gmra.mrb[0].mxu0 %v1227
  %v2295 = vpop.f32.mrb[0].mxu0
  %v2296 = vadd.f32 0.0, %v2295
  %v2297 = vpop.f32.mrb[0].mxu0
  %v2298 = vadd.f32 0.0, %v2297
  %v2299 = vpop.f32.mrb[0].mxu0
  %v2300 = vadd.f32 0.0, %v2299
  %v2301 = vpop.f32.mrb[0].mxu0
  %v2302 = vadd.f32 0.0, %v2301
  %2303 = vmatprep.mubr.bf16.mxu0 0
  %2304 = vmatmul.mubr.bf16.gmra.mrb[0].mxu0 %v1230
  %v2305 = vpop.f32.mrb[0].mxu0
  %v2306 = vadd.f32 0.0, %v2305
  %v2307 = vpop.f32.mrb[0].mxu0
  %v2308 = vadd.f32 0.0, %v2307
  %v2309 = vpop.f32.mrb[0].mxu0
  %v2310 = vadd.f32 0.0, %v2309
  %v2311 = vpop.f32.mrb[0].mxu0
  %v2312 = vadd.f32 0.0, %v2311
  %2313 = vmatprep.mubr.bf16.mxu0 0
  %2314 = vmatmul.mubr.bf16.gmra.mrb[0].mxu0 %v1233
  %v2315 = vpop.f32.mrb[0].mxu0
  %v2316 = vadd.f32 0.0, %v2315
  %v2317 = vpop.f32.mrb[0].mxu0
  %v2318 = vadd.f32 0.0, %v2317
  %v2319 = vpop.f32.mrb[0].mxu0
  %v2320 = vadd.f32 0.0, %v2319
  %v2321 = vpop.f32.mrb[0].mxu0
  %v2322 = vadd.f32 0.0, %v2321
  %2323 = vmatprep.mubr.bf16.mxu0 0
  %2324 = vmatmul.mubr.bf16.gmra.mrb[0].mxu0 %v1236
  %v2325 = vpop.f32.mrb[0].mxu0
  %v2326 = vadd.f32 0.0, %v2325
  %v2327 = vpop.f32.mrb[0].mxu0
  %v2328 = vadd.f32 0.0, %v2327
  %v2329 = vpop.f32.mrb[0].mxu0
  %v2330 = vadd.f32 0.0, %v2329
  %v2331 = vpop.f32.mrb[0].mxu0
  %v2332 = vadd.f32 0.0, %v2331
  %2333 = vmatprep.mubr.bf16.mxu0 0
  %2334 = vmatmul.mubr.bf16.gmra.mrb[0].mxu0 %v1239
  %v2335 = vpop.f32.mrb[0].mxu0
  %v2336 = vadd.f32 0.0, %v2335
  %v2337 = vpop.f32.mrb[0].mxu0
  %v2338 = vadd.f32 0.0, %v2337
  %v2339 = vpop.f32.mrb[0].mxu0
  %v2340 = vadd.f32 0.0, %v2339
  %v2341 = vpop.f32.mrb[0].mxu0
  %v2342 = vadd.f32 0.0, %v2341
  %2343 = vmatprep.mubr.bf16.mxu0 0
  %2344 = vmatmul.mubr.bf16.gmra.mrb[0].mxu0 %v1242
  %v2345 = vpop.f32.mrb[0].mxu0
  %v2346 = vadd.f32 0.0, %v2345
  %v2347 = vpop.f32.mrb[0].mxu0
  %v2348 = vadd.f32 0.0, %v2347
  %v2349 = vpop.f32.mrb[0].mxu0
  %v2350 = vadd.f32 0.0, %v2349
  %v2351 = vpop.f32.mrb[0].mxu0
  %v2352 = vadd.f32 0.0, %v2351
  %2353 = vmatprep.mubr.bf16.mxu0 0
  %2354 = vmatmul.mubr.bf16.gmra.mrb[0].mxu0 %v1245
  %v2355 = vpop.f32.mrb[0].mxu0
  %v2356 = vadd.f32 0.0, %v2355
  %v2357 = vpop.f32.mrb[0].mxu0
  %v2358 = vadd.f32 0.0, %v2357
  %v2359 = vpop.f32.mrb[0].mxu0
  %v2360 = vadd.f32 0.0, %v2359
  %v2361 = vpop.f32.mrb[0].mxu0
  %v2362 = vadd.f32 0.0, %v2361
  %2363 = vmatprep.mubr.bf16.mxu0 0
  %2364 = vmatmul.mubr.bf16.gmra.mrb[0].mxu0 %v1248
  %v2365 = vpop.f32.mrb[0].mxu0
  %v2366 = vadd.f32 0.0, %v2365
  %v2367 = vpop.f32.mrb[0].mxu0
  %v2368 = vadd.f32 0.0, %v2367
  %v2369 = vpop.f32.mrb[0].mxu0
  %v2370 = vadd.f32 0.0, %v2369
  %v2371 = vpop.f32.mrb[0].mxu0
  %v2372 = vadd.f32 0.0, %v2371
  %2373 = vmatprep.mubr.bf16.mxu0 0
  %2374 = vmatmul.mubr.bf16.gmra.mrb[0].mxu0 %v1251
  %v2375 = vpop.f32.mrb[0].mxu0
  %v2376 = vadd.f32 0.0, %v2375
  %v2377 = vpop.f32.mrb[0].mxu0
  %v2378 = vadd.f32 0.0, %v2377
  %v2379 = vpop.f32.mrb[0].mxu0
  %v2380 = vadd.f32 0.0, %v2379
  %v2381 = vpop.f32.mrb[0].mxu0
  %v2382 = vadd.f32 0.0, %v2381
  %2383 = vmatprep.mubr.bf16.mxu0 0
  %2384 = vmatmul.mubr.bf16.gmra.mrb[0].mxu0 %v1254
  %v2385 = vpop.f32.mrb[0].mxu0
  %v2386 = vadd.f32 0.0, %v2385
  %v2387 = vpop.f32.mrb[0].mxu0
  %v2388 = vadd.f32 0.0, %v2387
  %v2389 = vpop.f32.mrb[0].mxu0
  %v2390 = vadd.f32 0.0, %v2389
  %v2391 = vpop.f32.mrb[0].mxu0
  %v2392 = vadd.f32 0.0, %v2391
  %2393 = vmatprep.mubr.bf16.mxu0 0
  %2394 = vmatmul.mubr.bf16.gmra.mrb[0].mxu0 %v1257
  %v2395 = vpop.f32.mrb[0].mxu0
  %v2396 = vadd.f32 0.0, %v2395
  %v2397 = vpop.f32.mrb[0].mxu0
  %v2398 = vadd.f32 0.0, %v2397
  %v2399 = vpop.f32.mrb[0].mxu0
  %v2400 = vadd.f32 0.0, %v2399
  %v2401 = vpop.f32.mrb[0].mxu0
  %v2402 = vadd.f32 0.0, %v2401
  %2403 = vmatprep.mubr.bf16.mxu0 0
  %2404 = vmatmul.mubr.bf16.gmra.mrb[0].mxu0 %v1260
  %v2405 = vpop.f32.mrb[0].mxu0
  %v2406 = vadd.f32 0.0, %v2405
  %v2407 = vpop.f32.mrb[0].mxu0
  %v2408 = vadd.f32 0.0, %v2407
  %v2409 = vpop.f32.mrb[0].mxu0
  %v2410 = vadd.f32 0.0, %v2409
  %v2411 = vpop.f32.mrb[0].mxu0
  %v2412 = vadd.f32 0.0, %v2411
  %2413 = vmatprep.mubr.bf16.mxu0 0
  %2414 = vmatmul.mubr.bf16.gmra.mrb[0].mxu0 %v1263
  %v2415 = vpop.f32.mrb[0].mxu0
  %v2416 = vadd.f32 0.0, %v2415
  %v2417 = vpop.f32.mrb[0].mxu0
  %v2418 = vadd.f32 0.0, %v2417
  %v2419 = vpop.f32.mrb[0].mxu0
  %v2420 = vadd.f32 0.0, %v2419
  %v2421 = vpop.f32.mrb[0].mxu0
  %v2422 = vadd.f32 0.0, %v2421
  %2423 = vmatprep.mubr.bf16.mxu0 0
  %2424 = vmatmul.mubr.bf16.gmra.mrb[0].mxu0 %v1266
  %v2425 = vpop.f32.mrb[0].mxu0
  %v2426 = vadd.f32 0.0, %v2425
  %v2427 = vpop.f32.mrb[0].mxu0
  %v2428 = vadd.f32 0.0, %v2427
  %v2429 = vpop.f32.mrb[0].mxu0
  %v2430 = vadd.f32 0.0, %v2429
  %v2431 = vpop.f32.mrb[0].mxu0
  %v2432 = vadd.f32 0.0, %v2431
  %2433 = vmatprep.mubr.bf16.mxu0 0
  %2434 = vmatmul.mubr.bf16.gmra.mrb[0].mxu0 %v1269
  %v2435 = vpop.f32.mrb[0].mxu0
  %v2436 = vadd.f32 0.0, %v2435
  %v2437 = vpop.f32.mrb[0].mxu0
  %v2438 = vadd.f32 0.0, %v2437
  %v2439 = vpop.f32.mrb[0].mxu0
  %v2440 = vadd.f32 0.0, %v2439
  %v2441 = vpop.f32.mrb[0].mxu0
  %v2442 = vadd.f32 0.0, %v2441
  %2443 = vmatprep.mubr.bf16.mxu0 0
  %2444 = vmatmul.mubr.bf16.gmra.mrb[0].mxu0 %v1272
  %v2445 = vpop.f32.mrb[0].mxu0
  %v2446 = vadd.f32 0.0, %v2445
  %v2447 = vpop.f32.mrb[0].mxu0
  %v2448 = vadd.f32 0.0, %v2447
  %v2449 = vpop.f32.mrb[0].mxu0
  %v2450 = vadd.f32 0.0, %v2449
  %v2451 = vpop.f32.mrb[0].mxu0
  %v2452 = vadd.f32 0.0, %v2451
  %2453 = vmatprep.mubr.bf16.mxu0 0
  %2454 = vmatmul.mubr.bf16.gmra.mrb[0].mxu0 %v1275
  %v2455 = vpop.f32.mrb[0].mxu0
  %v2456 = vadd.f32 0.0, %v2455
  %v2457 = vpop.f32.mrb[0].mxu0
  %v2458 = vadd.f32 0.0, %v2457
  %v2459 = vpop.f32.mrb[0].mxu0
  %v2460 = vadd.f32 0.0, %v2459
  %v2461 = vpop.f32.mrb[0].mxu0
  %v2462 = vadd.f32 0.0, %v2461
  %2463 = vmatprep.mubr.bf16.mxu0 0
  %2464 = vmatmul.mubr.bf16.gmra.mrb[0].mxu0 %v1278
  %v2465 = vpop.f32.mrb[0].mxu0
  %v2466 = vadd.f32 0.0, %v2465
  %v2467 = vpop.f32.mrb[0].mxu0
  %v2468 = vadd.f32 0.0, %v2467
  %v2469 = vpop.f32.mrb[0].mxu0
  %v2470 = vadd.f32 0.0, %v2469
  %v2471 = vpop.f32.mrb[0].mxu0
  %v2472 = vadd.f32 0.0, %v2471
  %2473 = vmatprep.mubr.bf16.mxu0 0
  %2474 = vmatmul.mubr.bf16.gmra.mrb[0].mxu0 %v1281
  %v2475 = vpop.f32.mrb[0].mxu0
  %v2476 = vadd.f32 0.0, %v2475
  %v2477 = vpop.f32.mrb[0].mxu0
  %v2478 = vadd.f32 0.0, %v2477
  %v2479 = vpop.f32.mrb[0].mxu0
  %v2480 = vadd.f32 0.0, %v2479
  %v2481 = vpop.f32.mrb[0].mxu0
  %v2482 = vadd.f32 0.0, %v2481
  %2483 = vmatprep.mubr.bf16.mxu0 0
  %2484 = vmatmul.mubr.bf16.gmra.mrb[0].mxu0 %v1284
  %v2485 = vpop.f32.mrb[0].mxu0
  %v2486 = vadd.f32 0.0, %v2485
  %v2487 = vpop.f32.mrb[0].mxu0
  %v2488 = vadd.f32 0.0, %v2487
  %v2489 = vpop.f32.mrb[0].mxu0
  %v2490 = vadd.f32 0.0, %v2489
  %v2491 = vpop.f32.mrb[0].mxu0
  %v2492 = vadd.f32 0.0, %v2491
  %2493 = vmatprep.mubr.bf16.mxu0 0
  %2494 = vmatmul.mubr.bf16.gmra.mrb[0].mxu0 %v1287
  %v2495 = vpop.f32.mrb[0].mxu0
  %v2496 = vadd.f32 0.0, %v2495
  %v2497 = vpop.f32.mrb[0].mxu0
  %v2498 = vadd.f32 0.0, %v2497
  %v2499 = vpop.f32.mrb[0].mxu0
  %v2500 = vadd.f32 0.0, %v2499
  %v2501 = vpop.f32.mrb[0].mxu0
  %v2502 = vadd.f32 0.0, %v2501
  %2503 = vmatprep.mubr.bf16.mxu0 0
  %2504 = vmatmul.mubr.bf16.gmra.mrb[0].mxu0 %v1290
  %v2505 = vpop.f32.mrb[0].mxu0
  %v2506 = vadd.f32 0.0, %v2505
  %v2507 = vpop.f32.mrb[0].mxu0
  %v2508 = vadd.f32 0.0, %v2507
  %v2509 = vpop.f32.mrb[0].mxu0
  %v2510 = vadd.f32 0.0, %v2509
  %v2511 = vpop.f32.mrb[0].mxu0
  %v2512 = vadd.f32 0.0, %v2511
  %2513 = vmatprep.mubr.bf16.mxu0 0
  %2514 = vmatmul.mubr.bf16.gmra.mrb[0].mxu0 %v1293
  %v2515 = vpop.f32.mrb[0].mxu0
  %v2516 = vadd.f32 0.0, %v2515
  %v2517 = vpop.f32.mrb[0].mxu0
  %v2518 = vadd.f32 0.0, %v2517
  %v2519 = vpop.f32.mrb[0].mxu0
  %v2520 = vadd.f32 0.0, %v2519
  %v2521 = vpop.f32.mrb[0].mxu0
  %v2522 = vadd.f32 0.0, %v2521
  %2523 = vmatprep.mubr.bf16.mxu0 0
  %2524 = vmatmul.mubr.bf16.gmra.mrb[0].mxu0 %v1296
  %v2525 = vpop.f32.mrb[0].mxu0
  %v2526 = vadd.f32 0.0, %v2525
  %v2527 = vpop.f32.mrb[0].mxu0
  %v2528 = vadd.f32 0.0, %v2527
  %v2529 = vpop.f32.mrb[0].mxu0
  %v2530 = vadd.f32 0.0, %v2529
  %v2531 = vpop.f32.mrb[0].mxu0
  %v2532 = vadd.f32 0.0, %v2531
  %2533 = vmatprep.mubr.bf16.mxu0 0
  %2534 = vmatmul.mubr.bf16.gmra.mrb[0].mxu0 %v1299
  %v2535 = vpop.f32.mrb[0].mxu0
  %v2536 = vadd.f32 0.0, %v2535
  %v2537 = vpop.f32.mrb[0].mxu0
  %v2538 = vadd.f32 0.0, %v2537
  %v2539 = vpop.f32.mrb[0].mxu0
  %v2540 = vadd.f32 0.0, %v2539
  %v2541 = vpop.f32.mrb[0].mxu0
  %v2542 = vadd.f32 0.0, %v2541
  %2543 = vmatprep.mubr.bf16.mxu0 0
  %2544 = vmatmul.mubr.bf16.gmra.mrb[0].mxu0 %v1302
  %v2545 = vpop.f32.mrb[0].mxu0
  %v2546 = vadd.f32 0.0, %v2545
  %v2547 = vpop.f32.mrb[0].mxu0
  %v2548 = vadd.f32 0.0, %v2547
  %v2549 = vpop.f32.mrb[0].mxu0
  %v2550 = vadd.f32 0.0, %v2549
  %v2551 = vpop.f32.mrb[0].mxu0
  %v2552 = vadd.f32 0.0, %v2551
  %2553 = vmatprep.mubr.bf16.mxu0 0
  %2554 = vmatmul.mubr.bf16.gmra.mrb[0].mxu0 %v1305
  %v2555 = vpop.f32.mrb[0].mxu0
  %v2556 = vadd.f32 0.0, %v2555
  %v2557 = vpop.f32.mrb[0].mxu0
  %v2558 = vadd.f32 0.0, %v2557
  %v2559 = vpop.f32.mrb[0].mxu0
  %v2560 = vadd.f32 0.0, %v2559
  %v2561 = vpop.f32.mrb[0].mxu0
  %v2562 = vadd.f32 0.0, %v2561
  %2563 = vmatprep.mubr.bf16.mxu0 0
  %2564 = vmatmul.mubr.bf16.gmra.mrb[0].mxu0 %v1308
  %v2565 = vpop.f32.mrb[0].mxu0
  %v2566 = vadd.f32 0.0, %v2565
  %v2567 = vpop.f32.mrb[0].mxu0
  %v2568 = vadd.f32 0.0, %v2567
  %v2569 = vpop.f32.mrb[0].mxu0
  %v2570 = vadd.f32 0.0, %v2569
  %v2571 = vpop.f32.mrb[0].mxu0
  %v2572 = vadd.f32 0.0, %v2571
  %2573 = vmatprep.mubr.bf16.mxu0 0
  %2574 = vmatmul.mubr.bf16.gmra.mrb[0].mxu0 %v1311
  %v2575 = vpop.f32.mrb[0].mxu0
  %v2576 = vadd.f32 0.0, %v2575
  %v2577 = vpop.f32.mrb[0].mxu0
  %v2578 = vadd.f32 0.0, %v2577
  %v2579 = vpop.f32.mrb[0].mxu0
  %v2580 = vadd.f32 0.0, %v2579
  %v2581 = vpop.f32.mrb[0].mxu0
  %v2582 = vadd.f32 0.0, %v2581
  %2583 = vmatprep.mubr.bf16.mxu0 0
  %2584 = vmatmul.mubr.bf16.gmra.mrb[0].mxu0 %v1314
  %v2585 = vpop.f32.mrb[0].mxu0
  %v2586 = vadd.f32 0.0, %v2585
  %v2587 = vpop.f32.mrb[0].mxu0
  %v2588 = vadd.f32 0.0, %v2587
  %v2589 = vpop.f32.mrb[0].mxu0
  %v2590 = vadd.f32 0.0, %v2589
  %v2591 = vpop.f32.mrb[0].mxu0
  %v2592 = vadd.f32 0.0, %v2591
  %2593 = vmatprep.mubr.bf16.mxu0 0
  %2594 = vmatmul.mubr.bf16.gmra.mrb[0].mxu0 %v1317
  %v2595 = vpop.f32.mrb[0].mxu0
  %v2596 = vadd.f32 0.0, %v2595
  %v2597 = vpop.f32.mrb[0].mxu0
  %v2598 = vadd.f32 0.0, %v2597
  %v2599 = vpop.f32.mrb[0].mxu0
  %v2600 = vadd.f32 0.0, %v2599
  %v2601 = vpop.f32.mrb[0].mxu0
  %v2602 = vadd.f32 0.0, %v2601
  %2603 = vmatprep.mubr.bf16.mxu0 0
  %2604 = vmatmul.mubr.bf16.gmra.mrb[0].mxu0 %v1320
  %v2605 = vpop.f32.mrb[0].mxu0
  %v2606 = vadd.f32 0.0, %v2605
  %v2607 = vpop.f32.mrb[0].mxu0
  %v2608 = vadd.f32 0.0, %v2607
  %v2609 = vpop.f32.mrb[0].mxu0
  %v2610 = vadd.f32 0.0, %v2609
  %v2611 = vpop.f32.mrb[0].mxu0
  %v2612 = vadd.f32 0.0, %v2611
  %2613 = vmatprep.mubr.bf16.mxu0 0
  %2614 = vmatmul.mubr.bf16.gmra.mrb[0].mxu0 %v1323
  %v2615 = vpop.f32.mrb[0].mxu0
  %v2616 = vadd.f32 0.0, %v2615
  %v2617 = vpop.f32.mrb[0].mxu0
  %v2618 = vadd.f32 0.0, %v2617
  %v2619 = vpop.f32.mrb[0].mxu0
  %v2620 = vadd.f32 0.0, %v2619
  %v2621 = vpop.f32.mrb[0].mxu0
  %v2622 = vadd.f32 0.0, %v2621
  %2623 = vmatprep.mubr.bf16.mxu0 0
  %2624 = vmatmul.mubr.bf16.gmra.mrb[0].mxu0 %v1326
  %v2625 = vpop.f32.mrb[0].mxu0
  %v2626 = vadd.f32 0.0, %v2625
  %v2627 = vpop.f32.mrb[0].mxu0
  %v2628 = vadd.f32 0.0, %v2627
  %v2629 = vpop.f32.mrb[0].mxu0
  %v2630 = vadd.f32 0.0, %v2629
  %v2631 = vpop.f32.mrb[0].mxu0
  %v2632 = vadd.f32 0.0, %v2631
  %2633 = vmatprep.mubr.bf16.mxu0 0
  %2634 = vmatmul.mubr.bf16.gmra.mrb[0].mxu0 %v1329
  %v2635 = vpop.f32.mrb[0].mxu0
  %v2636 = vadd.f32 0.0, %v2635
  %v2637 = vpop.f32.mrb[0].mxu0
  %v2638 = vadd.f32 0.0, %v2637
  %v2639 = vpop.f32.mrb[0].mxu0
  %v2640 = vadd.f32 0.0, %v2639
  %v2641 = vpop.f32.mrb[0].mxu0
  %v2642 = vadd.f32 0.0, %v2641
  %2643 = vdwg.mxu0
  %v2644 = vmax.f32 %v1366, 0.0
  %v2645 = vmax.f32 %v1368, 0.0
  %v2646 = vmax.f32 %v1370, 0.0
  %v2647 = vmax.f32 %v1372, 0.0
  %v2648 = vmax.f32 %v1376, 0.0
  %v2649 = vmax.f32 %v1378, 0.0
  %v2650 = vmax.f32 %v1380, 0.0
  %v2651 = vmax.f32 %v1382, 0.0
  %v2652 = vmax.f32 %v1386, 0.0
  %v2653 = vmax.f32 %v1388, 0.0
  %v2654 = vmax.f32 %v1390, 0.0
  %v2655 = vmax.f32 %v1392, 0.0
  %v2656 = vmax.f32 %v1396, 0.0
  %v2657 = vmax.f32 %v1398, 0.0
  %v2658 = vmax.f32 %v1400, 0.0
  %v2659 = vmax.f32 %v1402, 0.0
  %v2660 = vmax.f32 %v1406, 0.0
  %v2661 = vmax.f32 %v1408, 0.0
  %v2662 = vmax.f32 %v1410, 0.0
  %v2663 = vmax.f32 %v1412, 0.0
  %v2664 = vmax.f32 %v1416, 0.0
  %v2665 = vmax.f32 %v1418, 0.0
  %v2666 = vmax.f32 %v1420, 0.0
  %v2667 = vmax.f32 %v1422, 0.0
  %v2668 = vmax.f32 %v1426, 0.0
  %v2669 = vmax.f32 %v1428, 0.0
  %v2670 = vmax.f32 %v1430, 0.0
  %v2671 = vmax.f32 %v1432, 0.0
  %v2672 = vmax.f32 %v1436, 0.0
  %v2673 = vmax.f32 %v1438, 0.0
  %v2674 = vmax.f32 %v1440, 0.0
  %v2675 = vmax.f32 %v1442, 0.0
  %v2676 = vmax.f32 %v1446, 0.0
  %v2677 = vmax.f32 %v1448, 0.0
  %v2678 = vmax.f32 %v1450, 0.0
  %v2679 = vmax.f32 %v1452, 0.0
  %v2680 = vmax.f32 %v1456, 0.0
  %v2681 = vmax.f32 %v1458, 0.0
  %v2682 = vmax.f32 %v1460, 0.0
  %v2683 = vmax.f32 %v1462, 0.0
  %v2684 = vmax.f32 %v1466, 0.0
  %v2685 = vmax.f32 %v1468, 0.0
  %v2686 = vmax.f32 %v1470, 0.0
  %v2687 = vmax.f32 %v1472, 0.0
  %v2688 = vmax.f32 %v1476, 0.0
  %v2689 = vmax.f32 %v1478, 0.0
  %v2690 = vmax.f32 %v1480, 0.0
  %v2691 = vmax.f32 %v1482, 0.0
  %v2692 = vmax.f32 %v1486, 0.0
  %v2693 = vmax.f32 %v1488, 0.0
  %v2694 = vmax.f32 %v1490, 0.0
  %v2695 = vmax.f32 %v1492, 0.0
  %v2696 = vmax.f32 %v1496, 0.0
  %v2697 = vmax.f32 %v1498, 0.0
  %v2698 = vmax.f32 %v1500, 0.0
  %v2699 = vmax.f32 %v1502, 0.0
  %v2700 = vmax.f32 %v1506, 0.0
  %v2701 = vmax.f32 %v1508, 0.0
  %v2702 = vmax.f32 %v1510, 0.0
  %v2703 = vmax.f32 %v1512, 0.0
  %v2704 = vmax.f32 %v1516, 0.0
  %v2705 = vmax.f32 %v1518, 0.0
  %v2706 = vmax.f32 %v1520, 0.0
  %v2707 = vmax.f32 %v1522, 0.0
  %v2708 = vmax.f32 %v1526, 0.0
  %v2709 = vmax.f32 %v1528, 0.0
  %v2710 = vmax.f32 %v1530, 0.0
  %v2711 = vmax.f32 %v1532, 0.0
  %v2712 = vmax.f32 %v1536, 0.0
  %v2713 = vmax.f32 %v1538, 0.0
  %v2714 = vmax.f32 %v1540, 0.0
  %v2715 = vmax.f32 %v1542, 0.0
  %v2716 = vmax.f32 %v1546, 0.0
  %v2717 = vmax.f32 %v1548, 0.0
  %v2718 = vmax.f32 %v1550, 0.0
  %v2719 = vmax.f32 %v1552, 0.0
  %v2720 = vmax.f32 %v1556, 0.0
  %v2721 = vmax.f32 %v1558, 0.0
  %v2722 = vmax.f32 %v1560, 0.0
  %v2723 = vmax.f32 %v1562, 0.0
  %v2724 = vmax.f32 %v1566, 0.0
  %v2725 = vmax.f32 %v1568, 0.0
  %v2726 = vmax.f32 %v1570, 0.0
  %v2727 = vmax.f32 %v1572, 0.0
  %v2728 = vmax.f32 %v1576, 0.0
  %v2729 = vmax.f32 %v1578, 0.0
  %v2730 = vmax.f32 %v1580, 0.0
  %v2731 = vmax.f32 %v1582, 0.0
  %v2732 = vmax.f32 %v1586, 0.0
  %v2733 = vmax.f32 %v1588, 0.0
  %v2734 = vmax.f32 %v1590, 0.0
  %v2735 = vmax.f32 %v1592, 0.0
  %v2736 = vmax.f32 %v1596, 0.0
  %v2737 = vmax.f32 %v1598, 0.0
  %v2738 = vmax.f32 %v1600, 0.0
  %v2739 = vmax.f32 %v1602, 0.0
  %v2740 = vmax.f32 %v1606, 0.0
  %v2741 = vmax.f32 %v1608, 0.0
  %v2742 = vmax.f32 %v1610, 0.0
  %v2743 = vmax.f32 %v1612, 0.0
  %v2744 = vmax.f32 %v1616, 0.0
  %v2745 = vmax.f32 %v1618, 0.0
  %v2746 = vmax.f32 %v1620, 0.0
  %v2747 = vmax.f32 %v1622, 0.0
  %v2748 = vmax.f32 %v1626, 0.0
  %v2749 = vmax.f32 %v1628, 0.0
  %v2750 = vmax.f32 %v1630, 0.0
  %v2751 = vmax.f32 %v1632, 0.0
  %v2752 = vmax.f32 %v1636, 0.0
  %v2753 = vmax.f32 %v1638, 0.0
  %v2754 = vmax.f32 %v1640, 0.0
  %v2755 = vmax.f32 %v1642, 0.0
  %v2756 = vmax.f32 %v1646, 0.0
  %v2757 = vmax.f32 %v1648, 0.0
  %v2758 = vmax.f32 %v1650, 0.0
  %v2759 = vmax.f32 %v1652, 0.0
  %v2760 = vmax.f32 %v1656, 0.0
  %v2761 = vmax.f32 %v1658, 0.0
  %v2762 = vmax.f32 %v1660, 0.0
  %v2763 = vmax.f32 %v1662, 0.0
  %v2764 = vmax.f32 %v1666, 0.0
  %v2765 = vmax.f32 %v1668, 0.0
  %v2766 = vmax.f32 %v1670, 0.0
  %v2767 = vmax.f32 %v1672, 0.0
  %v2768 = vmax.f32 %v1676, 0.0
  %v2769 = vmax.f32 %v1678, 0.0
  %v2770 = vmax.f32 %v1680, 0.0
  %v2771 = vmax.f32 %v1682, 0.0
  %v2772 = vmax.f32 %v1686, 0.0
  %v2773 = vmax.f32 %v1688, 0.0
  %v2774 = vmax.f32 %v1690, 0.0
  %v2775 = vmax.f32 %v1692, 0.0
  %v2776 = vmax.f32 %v1696, 0.0
  %v2777 = vmax.f32 %v1698, 0.0
  %v2778 = vmax.f32 %v1700, 0.0
  %v2779 = vmax.f32 %v1702, 0.0
  %v2780 = vmax.f32 %v1706, 0.0
  %v2781 = vmax.f32 %v1708, 0.0
  %v2782 = vmax.f32 %v1710, 0.0
  %v2783 = vmax.f32 %v1712, 0.0
  %v2784 = vmax.f32 %v1716, 0.0
  %v2785 = vmax.f32 %v1718, 0.0
  %v2786 = vmax.f32 %v1720, 0.0
  %v2787 = vmax.f32 %v1722, 0.0
  %v2788 = vmax.f32 %v1726, 0.0
  %v2789 = vmax.f32 %v1728, 0.0
  %v2790 = vmax.f32 %v1730, 0.0
  %v2791 = vmax.f32 %v1732, 0.0
  %v2792 = vmax.f32 %v1736, 0.0
  %v2793 = vmax.f32 %v1738, 0.0
  %v2794 = vmax.f32 %v1740, 0.0
  %v2795 = vmax.f32 %v1742, 0.0
  %v2796 = vmax.f32 %v1746, 0.0
  %v2797 = vmax.f32 %v1748, 0.0
  %v2798 = vmax.f32 %v1750, 0.0
  %v2799 = vmax.f32 %v1752, 0.0
  %v2800 = vmax.f32 %v1756, 0.0
  %v2801 = vmax.f32 %v1758, 0.0
  %v2802 = vmax.f32 %v1760, 0.0
  %v2803 = vmax.f32 %v1762, 0.0
  %v2804 = vmax.f32 %v1766, 0.0
  %v2805 = vmax.f32 %v1768, 0.0
  %v2806 = vmax.f32 %v1770, 0.0
  %v2807 = vmax.f32 %v1772, 0.0
  %v2808 = vmax.f32 %v1776, 0.0
  %v2809 = vmax.f32 %v1778, 0.0
  %v2810 = vmax.f32 %v1780, 0.0
  %v2811 = vmax.f32 %v1782, 0.0
  %v2812 = vmax.f32 %v1786, 0.0
  %v2813 = vmax.f32 %v1788, 0.0
  %v2814 = vmax.f32 %v1790, 0.0
  %v2815 = vmax.f32 %v1792, 0.0
  %v2816 = vmax.f32 %v1796, 0.0
  %v2817 = vmax.f32 %v1798, 0.0
  %v2818 = vmax.f32 %v1800, 0.0
  %v2819 = vmax.f32 %v1802, 0.0
  %v2820 = vmax.f32 %v1806, 0.0
  %v2821 = vmax.f32 %v1808, 0.0
  %v2822 = vmax.f32 %v1810, 0.0
  %v2823 = vmax.f32 %v1812, 0.0
  %v2824 = vmax.f32 %v1816, 0.0
  %v2825 = vmax.f32 %v1818, 0.0
  %v2826 = vmax.f32 %v1820, 0.0
  %v2827 = vmax.f32 %v1822, 0.0
  %v2828 = vmax.f32 %v1826, 0.0
  %v2829 = vmax.f32 %v1828, 0.0
  %v2830 = vmax.f32 %v1830, 0.0
  %v2831 = vmax.f32 %v1832, 0.0
  %v2832 = vmax.f32 %v1836, 0.0
  %v2833 = vmax.f32 %v1838, 0.0
  %v2834 = vmax.f32 %v1840, 0.0
  %v2835 = vmax.f32 %v1842, 0.0
  %v2836 = vmax.f32 %v1846, 0.0
  %v2837 = vmax.f32 %v1848, 0.0
  %v2838 = vmax.f32 %v1850, 0.0
  %v2839 = vmax.f32 %v1852, 0.0
  %v2840 = vmax.f32 %v1856, 0.0
  %v2841 = vmax.f32 %v1858, 0.0
  %v2842 = vmax.f32 %v1860, 0.0
  %v2843 = vmax.f32 %v1862, 0.0
  %v2844 = vmax.f32 %v1866, 0.0
  %v2845 = vmax.f32 %v1868, 0.0
  %v2846 = vmax.f32 %v1870, 0.0
  %v2847 = vmax.f32 %v1872, 0.0
  %v2848 = vmax.f32 %v1876, 0.0
  %v2849 = vmax.f32 %v1878, 0.0
  %v2850 = vmax.f32 %v1880, 0.0
  %v2851 = vmax.f32 %v1882, 0.0
  %v2852 = vmax.f32 %v1886, 0.0
  %v2853 = vmax.f32 %v1888, 0.0
  %v2854 = vmax.f32 %v1890, 0.0
  %v2855 = vmax.f32 %v1892, 0.0
  %v2856 = vmax.f32 %v1896, 0.0
  %v2857 = vmax.f32 %v1898, 0.0
  %v2858 = vmax.f32 %v1900, 0.0
  %v2859 = vmax.f32 %v1902, 0.0
  %v2860 = vmax.f32 %v1906, 0.0
  %v2861 = vmax.f32 %v1908, 0.0
  %v2862 = vmax.f32 %v1910, 0.0
  %v2863 = vmax.f32 %v1912, 0.0
  %v2864 = vmax.f32 %v1916, 0.0
  %v2865 = vmax.f32 %v1918, 0.0
  %v2866 = vmax.f32 %v1920, 0.0
  %v2867 = vmax.f32 %v1922, 0.0
  %v2868 = vmax.f32 %v1926, 0.0
  %v2869 = vmax.f32 %v1928, 0.0
  %v2870 = vmax.f32 %v1930, 0.0
  %v2871 = vmax.f32 %v1932, 0.0
  %v2872 = vmax.f32 %v1936, 0.0
  %v2873 = vmax.f32 %v1938, 0.0
  %v2874 = vmax.f32 %v1940, 0.0
  %v2875 = vmax.f32 %v1942, 0.0
  %v2876 = vmax.f32 %v1946, 0.0
  %v2877 = vmax.f32 %v1948, 0.0
  %v2878 = vmax.f32 %v1950, 0.0
  %v2879 = vmax.f32 %v1952, 0.0
  %v2880 = vmax.f32 %v1956, 0.0
  %v2881 = vmax.f32 %v1958, 0.0
  %v2882 = vmax.f32 %v1960, 0.0
  %v2883 = vmax.f32 %v1962, 0.0
  %v2884 = vmax.f32 %v1966, 0.0
  %v2885 = vmax.f32 %v1968, 0.0
  %v2886 = vmax.f32 %v1970, 0.0
  %v2887 = vmax.f32 %v1972, 0.0
  %v2888 = vmax.f32 %v1976, 0.0
  %v2889 = vmax.f32 %v1978, 0.0
  %v2890 = vmax.f32 %v1980, 0.0
  %v2891 = vmax.f32 %v1982, 0.0
  %v2892 = vmax.f32 %v1986, 0.0
  %v2893 = vmax.f32 %v1988, 0.0
  %v2894 = vmax.f32 %v1990, 0.0
  %v2895 = vmax.f32 %v1992, 0.0
  %v2896 = vmax.f32 %v1996, 0.0
  %v2897 = vmax.f32 %v1998, 0.0
  %v2898 = vmax.f32 %v2000, 0.0
  %v2899 = vmax.f32 %v2002, 0.0
  %v2900 = vmax.f32 %v2006, 0.0
  %v2901 = vmax.f32 %v2008, 0.0
  %v2902 = vmax.f32 %v2010, 0.0
  %v2903 = vmax.f32 %v2012, 0.0
  %v2904 = vmax.f32 %v2016, 0.0
  %v2905 = vmax.f32 %v2018, 0.0
  %v2906 = vmax.f32 %v2020, 0.0
  %v2907 = vmax.f32 %v2022, 0.0
  %v2908 = vmax.f32 %v2026, 0.0
  %v2909 = vmax.f32 %v2028, 0.0
  %v2910 = vmax.f32 %v2030, 0.0
  %v2911 = vmax.f32 %v2032, 0.0
  %v2912 = vmax.f32 %v2036, 0.0
  %v2913 = vmax.f32 %v2038, 0.0
  %v2914 = vmax.f32 %v2040, 0.0
  %v2915 = vmax.f32 %v2042, 0.0
  %v2916 = vmax.f32 %v2046, 0.0
  %v2917 = vmax.f32 %v2048, 0.0
  %v2918 = vmax.f32 %v2050, 0.0
  %v2919 = vmax.f32 %v2052, 0.0
  %v2920 = vmax.f32 %v2056, 0.0
  %v2921 = vmax.f32 %v2058, 0.0
  %v2922 = vmax.f32 %v2060, 0.0
  %v2923 = vmax.f32 %v2062, 0.0
  %v2924 = vmax.f32 %v2066, 0.0
  %v2925 = vmax.f32 %v2068, 0.0
  %v2926 = vmax.f32 %v2070, 0.0
  %v2927 = vmax.f32 %v2072, 0.0
  %v2928 = vmax.f32 %v2076, 0.0
  %v2929 = vmax.f32 %v2078, 0.0
  %v2930 = vmax.f32 %v2080, 0.0
  %v2931 = vmax.f32 %v2082, 0.0
  %v2932 = vmax.f32 %v2086, 0.0
  %v2933 = vmax.f32 %v2088, 0.0
  %v2934 = vmax.f32 %v2090, 0.0
  %v2935 = vmax.f32 %v2092, 0.0
  %v2936 = vmax.f32 %v2096, 0.0
  %v2937 = vmax.f32 %v2098, 0.0
  %v2938 = vmax.f32 %v2100, 0.0
  %v2939 = vmax.f32 %v2102, 0.0
  %v2940 = vmax.f32 %v2106, 0.0
  %v2941 = vmax.f32 %v2108, 0.0
  %v2942 = vmax.f32 %v2110, 0.0
  %v2943 = vmax.f32 %v2112, 0.0
  %v2944 = vmax.f32 %v2116, 0.0
  %v2945 = vmax.f32 %v2118, 0.0
  %v2946 = vmax.f32 %v2120, 0.0
  %v2947 = vmax.f32 %v2122, 0.0
  %v2948 = vmax.f32 %v2126, 0.0
  %v2949 = vmax.f32 %v2128, 0.0
  %v2950 = vmax.f32 %v2130, 0.0
  %v2951 = vmax.f32 %v2132, 0.0
  %v2952 = vmax.f32 %v2136, 0.0
  %v2953 = vmax.f32 %v2138, 0.0
  %v2954 = vmax.f32 %v2140, 0.0
  %v2955 = vmax.f32 %v2142, 0.0
  %v2956 = vmax.f32 %v2146, 0.0
  %v2957 = vmax.f32 %v2148, 0.0
  %v2958 = vmax.f32 %v2150, 0.0
  %v2959 = vmax.f32 %v2152, 0.0
  %v2960 = vmax.f32 %v2156, 0.0
  %v2961 = vmax.f32 %v2158, 0.0
  %v2962 = vmax.f32 %v2160, 0.0
  %v2963 = vmax.f32 %v2162, 0.0
  %v2964 = vmax.f32 %v2166, 0.0
  %v2965 = vmax.f32 %v2168, 0.0
  %v2966 = vmax.f32 %v2170, 0.0
  %v2967 = vmax.f32 %v2172, 0.0
  %v2968 = vmax.f32 %v2176, 0.0
  %v2969 = vmax.f32 %v2178, 0.0
  %v2970 = vmax.f32 %v2180, 0.0
  %v2971 = vmax.f32 %v2182, 0.0
  %v2972 = vmax.f32 %v2186, 0.0
  %v2973 = vmax.f32 %v2188, 0.0
  %v2974 = vmax.f32 %v2190, 0.0
  %v2975 = vmax.f32 %v2192, 0.0
  %v2976 = vmax.f32 %v2196, 0.0
  %v2977 = vmax.f32 %v2198, 0.0
  %v2978 = vmax.f32 %v2200, 0.0
  %v2979 = vmax.f32 %v2202, 0.0
  %v2980 = vmax.f32 %v2206, 0.0
  %v2981 = vmax.f32 %v2208, 0.0
  %v2982 = vmax.f32 %v2210, 0.0
  %v2983 = vmax.f32 %v2212, 0.0
  %v2984 = vmax.f32 %v2216, 0.0
  %v2985 = vmax.f32 %v2218, 0.0
  %v2986 = vmax.f32 %v2220, 0.0
  %v2987 = vmax.f32 %v2222, 0.0
  %v2988 = vmax.f32 %v2226, 0.0
  %v2989 = vmax.f32 %v2228, 0.0
  %v2990 = vmax.f32 %v2230, 0.0
  %v2991 = vmax.f32 %v2232, 0.0
  %v2992 = vmax.f32 %v2236, 0.0
  %v2993 = vmax.f32 %v2238, 0.0
  %v2994 = vmax.f32 %v2240, 0.0
  %v2995 = vmax.f32 %v2242, 0.0
  %v2996 = vmax.f32 %v2246, 0.0
  %v2997 = vmax.f32 %v2248, 0.0
  %v2998 = vmax.f32 %v2250, 0.0
  %v2999 = vmax.f32 %v2252, 0.0
  %v3000 = vmax.f32 %v2256, 0.0
  %v3001 = vmax.f32 %v2258, 0.0
  %v3002 = vmax.f32 %v2260, 0.0
  %v3003 = vmax.f32 %v2262, 0.0
  %v3004 = vmax.f32 %v2266, 0.0
  %v3005 = vmax.f32 %v2268, 0.0
  %v3006 = vmax.f32 %v2270, 0.0
  %v3007 = vmax.f32 %v2272, 0.0
  %v3008 = vmax.f32 %v2276, 0.0
  %v3009 = vmax.f32 %v2278, 0.0
  %v3010 = vmax.f32 %v2280, 0.0
  %v3011 = vmax.f32 %v2282, 0.0
  %v3012 = vmax.f32 %v2286, 0.0
  %v3013 = vmax.f32 %v2288, 0.0
  %v3014 = vmax.f32 %v2290, 0.0
  %v3015 = vmax.f32 %v2292, 0.0
  %v3016 = vmax.f32 %v2296, 0.0
  %v3017 = vmax.f32 %v2298, 0.0
  %v3018 = vmax.f32 %v2300, 0.0
  %v3019 = vmax.f32 %v2302, 0.0
  %v3020 = vmax.f32 %v2306, 0.0
  %v3021 = vmax.f32 %v2308, 0.0
  %v3022 = vmax.f32 %v2310, 0.0
  %v3023 = vmax.f32 %v2312, 0.0
  %v3024 = vmax.f32 %v2316, 0.0
  %v3025 = vmax.f32 %v2318, 0.0
  %v3026 = vmax.f32 %v2320, 0.0
  %v3027 = vmax.f32 %v2322, 0.0
  %v3028 = vmax.f32 %v2326, 0.0
  %v3029 = vmax.f32 %v2328, 0.0
  %v3030 = vmax.f32 %v2330, 0.0
  %v3031 = vmax.f32 %v2332, 0.0
  %v3032 = vmax.f32 %v2336, 0.0
  %v3033 = vmax.f32 %v2338, 0.0
  %v3034 = vmax.f32 %v2340, 0.0
  %v3035 = vmax.f32 %v2342, 0.0
  %v3036 = vmax.f32 %v2346, 0.0
  %v3037 = vmax.f32 %v2348, 0.0
  %v3038 = vmax.f32 %v2350, 0.0
  %v3039 = vmax.f32 %v2352, 0.0
  %v3040 = vmax.f32 %v2356, 0.0
  %v3041 = vmax.f32 %v2358, 0.0
  %v3042 = vmax.f32 %v2360, 0.0
  %v3043 = vmax.f32 %v2362, 0.0
  %v3044 = vmax.f32 %v2366, 0.0
  %v3045 = vmax.f32 %v2368, 0.0
  %v3046 = vmax.f32 %v2370, 0.0
  %v3047 = vmax.f32 %v2372, 0.0
  %v3048 = vmax.f32 %v2376, 0.0
  %v3049 = vmax.f32 %v2378, 0.0
  %v3050 = vmax.f32 %v2380, 0.0
  %v3051 = vmax.f32 %v2382, 0.0
  %v3052 = vmax.f32 %v2386, 0.0
  %v3053 = vmax.f32 %v2388, 0.0
  %v3054 = vmax.f32 %v2390, 0.0
  %v3055 = vmax.f32 %v2392, 0.0
  %v3056 = vmax.f32 %v2396, 0.0
  %v3057 = vmax.f32 %v2398, 0.0
  %v3058 = vmax.f32 %v2400, 0.0
  %v3059 = vmax.f32 %v2402, 0.0
  %v3060 = vmax.f32 %v2406, 0.0
  %v3061 = vmax.f32 %v2408, 0.0
  %v3062 = vmax.f32 %v2410, 0.0
  %v3063 = vmax.f32 %v2412, 0.0
  %v3064 = vmax.f32 %v2416, 0.0
  %v3065 = vmax.f32 %v2418, 0.0
  %v3066 = vmax.f32 %v2420, 0.0
  %v3067 = vmax.f32 %v2422, 0.0
  %v3068 = vmax.f32 %v2426, 0.0
  %v3069 = vmax.f32 %v2428, 0.0
  %v3070 = vmax.f32 %v2430, 0.0
  %v3071 = vmax.f32 %v2432, 0.0
  %v3072 = vmax.f32 %v2436, 0.0
  %v3073 = vmax.f32 %v2438, 0.0
  %v3074 = vmax.f32 %v2440, 0.0
  %v3075 = vmax.f32 %v2442, 0.0
  %v3076 = vmax.f32 %v2446, 0.0
  %v3077 = vmax.f32 %v2448, 0.0
  %v3078 = vmax.f32 %v2450, 0.0
  %v3079 = vmax.f32 %v2452, 0.0
  %v3080 = vmax.f32 %v2456, 0.0
  %v3081 = vmax.f32 %v2458, 0.0
  %v3082 = vmax.f32 %v2460, 0.0
  %v3083 = vmax.f32 %v2462, 0.0
  %v3084 = vmax.f32 %v2466, 0.0
  %v3085 = vmax.f32 %v2468, 0.0
  %v3086 = vmax.f32 %v2470, 0.0
  %v3087 = vmax.f32 %v2472, 0.0
  %v3088 = vmax.f32 %v2476, 0.0
  %v3089 = vmax.f32 %v2478, 0.0
  %v3090 = vmax.f32 %v2480, 0.0
  %v3091 = vmax.f32 %v2482, 0.0
  %v3092 = vmax.f32 %v2486, 0.0
  %v3093 = vmax.f32 %v2488, 0.0
  %v3094 = vmax.f32 %v2490, 0.0
  %v3095 = vmax.f32 %v2492, 0.0
  %v3096 = vmax.f32 %v2496, 0.0
  %v3097 = vmax.f32 %v2498, 0.0
  %v3098 = vmax.f32 %v2500, 0.0
  %v3099 = vmax.f32 %v2502, 0.0
  %v3100 = vmax.f32 %v2506, 0.0
  %v3101 = vmax.f32 %v2508, 0.0
  %v3102 = vmax.f32 %v2510, 0.0
  %v3103 = vmax.f32 %v2512, 0.0
  %v3104 = vmax.f32 %v2516, 0.0
  %v3105 = vmax.f32 %v2518, 0.0
  %v3106 = vmax.f32 %v2520, 0.0
  %v3107 = vmax.f32 %v2522, 0.0
  %v3108 = vmax.f32 %v2526, 0.0
  %v3109 = vmax.f32 %v2528, 0.0
  %v3110 = vmax.f32 %v2530, 0.0
  %v3111 = vmax.f32 %v2532, 0.0
  %v3112 = vmax.f32 %v2536, 0.0
  %v3113 = vmax.f32 %v2538, 0.0
  %v3114 = vmax.f32 %v2540, 0.0
  %v3115 = vmax.f32 %v2542, 0.0
  %v3116 = vmax.f32 %v2546, 0.0
  %v3117 = vmax.f32 %v2548, 0.0
  %v3118 = vmax.f32 %v2550, 0.0
  %v3119 = vmax.f32 %v2552, 0.0
  %v3120 = vmax.f32 %v2556, 0.0
  %v3121 = vmax.f32 %v2558, 0.0
  %v3122 = vmax.f32 %v2560, 0.0
  %v3123 = vmax.f32 %v2562, 0.0
  %v3124 = vmax.f32 %v2566, 0.0
  %v3125 = vmax.f32 %v2568, 0.0
  %v3126 = vmax.f32 %v2570, 0.0
  %v3127 = vmax.f32 %v2572, 0.0
  %v3128 = vmax.f32 %v2576, 0.0
  %v3129 = vmax.f32 %v2578, 0.0
  %v3130 = vmax.f32 %v2580, 0.0
  %v3131 = vmax.f32 %v2582, 0.0
  %v3132 = vmax.f32 %v2586, 0.0
  %v3133 = vmax.f32 %v2588, 0.0
  %v3134 = vmax.f32 %v2590, 0.0
  %v3135 = vmax.f32 %v2592, 0.0
  %v3136 = vmax.f32 %v2596, 0.0
  %v3137 = vmax.f32 %v2598, 0.0
  %v3138 = vmax.f32 %v2600, 0.0
  %v3139 = vmax.f32 %v2602, 0.0
  %v3140 = vmax.f32 %v2606, 0.0
  %v3141 = vmax.f32 %v2608, 0.0
  %v3142 = vmax.f32 %v2610, 0.0
  %v3143 = vmax.f32 %v2612, 0.0
  %v3144 = vmax.f32 %v2616, 0.0
  %v3145 = vmax.f32 %v2618, 0.0
  %v3146 = vmax.f32 %v2620, 0.0
  %v3147 = vmax.f32 %v2622, 0.0
  %v3148 = vmax.f32 %v2626, 0.0
  %v3149 = vmax.f32 %v2628, 0.0
  %v3150 = vmax.f32 %v2630, 0.0
  %v3151 = vmax.f32 %v2632, 0.0
  %v3152 = vmax.f32 %v2636, 0.0
  %v3153 = vmax.f32 %v2638, 0.0
  %v3154 = vmax.f32 %v2640, 0.0
  %v3155 = vmax.f32 %v2642, 0.0
  %v3156 = vld [vmem:[#allocation2] sm:$0xff]
  %v3157 = vld [vmem:[#allocation2 + $0x8] sm:$0xff]
  %v3158 = vadd.f32 %v2644, %v2646
  %v3159 = vadd.f32 %v3158, %v2648
  %v3160 = vadd.f32 %v3159, %v2650
  %v3161 = vadd.f32 %v3160, %v2652
  %v3162 = vadd.f32 %v3161, %v2654
  %v3163 = vadd.f32 %v3162, %v2656
  %v3164 = vadd.f32 %v3163, %v2658
  %v3165 = vadd.f32 %v3164, %v2660
  %v3166 = vadd.f32 %v3165, %v2662
  %v3167 = vadd.f32 %v3166, %v2664
  %v3168 = vadd.f32 %v3167, %v2666
  %v3169 = vadd.f32 %v3168, %v2668
  %v3170 = vadd.f32 %v3169, %v2670
  %v3171 = vadd.f32 %v3170, %v2672
  %v3172 = vadd.f32 %v3171, %v2674
  %v3173 = vadd.f32 %v3172, %v2676
  %v3174 = vadd.f32 %v3173, %v2678
  %v3175 = vadd.f32 %v3174, %v2680
  %v3176 = vadd.f32 %v3175, %v2682
  %v3177 = vadd.f32 %v3176, %v2684
  %v3178 = vadd.f32 %v3177, %v2686
  %v3179 = vadd.f32 %v3178, %v2688
  %v3180 = vadd.f32 %v3179, %v2690
  %v3181 = vadd.f32 %v3180, %v2692
  %v3182 = vadd.f32 %v3181, %v2694
  %v3183 = vadd.f32 %v3182, %v2696
  %v3184 = vadd.f32 %v3183, %v2698
  %v3185 = vadd.f32 %v3184, %v2700
  %v3186 = vadd.f32 %v3185, %v2702
  %v3187 = vadd.f32 %v3186, %v2704
  %v3188 = vadd.f32 %v3187, %v2706
  %v3189 = vrot.slane %v3188, 4
  %v3190 = vadd.f32 %v3188, %v3189
  %v3191 = vrot.slane %v3190, 2
  %v3192 = vadd.f32 %v3190, %v3191
  %v3193 = vrot.slane %v3192, 1
  %v3194 = vadd.f32 %v3192, %v3193
  %v3195 = vadd.f32 %v2645, %v2647
  %v3196 = vadd.f32 %v3195, %v2649
  %v3197 = vadd.f32 %v3196, %v2651
  %v3198 = vadd.f32 %v3197, %v2653
  %v3199 = vadd.f32 %v3198, %v2655
  %v3200 = vadd.f32 %v3199, %v2657
  %v3201 = vadd.f32 %v3200, %v2659
  %v3202 = vadd.f32 %v3201, %v2661
  %v3203 = vadd.f32 %v3202, %v2663
  %v3204 = vadd.f32 %v3203, %v2665
  %v3205 = vadd.f32 %v3204, %v2667
  %v3206 = vadd.f32 %v3205, %v2669
  %v3207 = vadd.f32 %v3206, %v2671
  %v3208 = vadd.f32 %v3207, %v2673
  %v3209 = vadd.f32 %v3208, %v2675
  %v3210 = vadd.f32 %v3209, %v2677
  %v3211 = vadd.f32 %v3210, %v2679
  %v3212 = vadd.f32 %v3211, %v2681
  %v3213 = vadd.f32 %v3212, %v2683
  %v3214 = vadd.f32 %v3213, %v2685
  %v3215 = vadd.f32 %v3214, %v2687
  %v3216 = vadd.f32 %v3215, %v2689
  %v3217 = vadd.f32 %v3216, %v2691
  %v3218 = vadd.f32 %v3217, %v2693
  %v3219 = vadd.f32 %v3218, %v2695
  %v3220 = vadd.f32 %v3219, %v2697
  %v3221 = vadd.f32 %v3220, %v2699
  %v3222 = vadd.f32 %v3221, %v2701
  %v3223 = vadd.f32 %v3222, %v2703
  %v3224 = vadd.f32 %v3223, %v2705
  %v3225 = vadd.f32 %v3224, %v2707
  %v3226 = vrot.slane %v3225, 4
  %v3227 = vadd.f32 %v3225, %v3226
  %v3228 = vrot.slane %v3227, 2
  %v3229 = vadd.f32 %v3227, %v3228
  %v3230 = vrot.slane %v3229, 1
  %v3231 = vadd.f32 %v3229, %v3230
  %v3232 = vadd.f32 %v2708, %v2710
  %v3233 = vadd.f32 %v3232, %v2712
  %v3234 = vadd.f32 %v3233, %v2714
  %v3235 = vadd.f32 %v3234, %v2716
  %v3236 = vadd.f32 %v3235, %v2718
  %v3237 = vadd.f32 %v3236, %v2720
  %v3238 = vadd.f32 %v3237, %v2722
  %v3239 = vadd.f32 %v3238, %v2724
  %v3240 = vadd.f32 %v3239, %v2726
  %v3241 = vadd.f32 %v3240, %v2728
  %v3242 = vadd.f32 %v3241, %v2730
  %v3243 = vadd.f32 %v3242, %v2732
  %v3244 = vadd.f32 %v3243, %v2734
  %v3245 = vadd.f32 %v3244, %v2736
  %v3246 = vadd.f32 %v3245, %v2738
  %v3247 = vadd.f32 %v3246, %v2740
  %v3248 = vadd.f32 %v3247, %v2742
  %v3249 = vadd.f32 %v3248, %v2744
  %v3250 = vadd.f32 %v3249, %v2746
  %v3251 = vadd.f32 %v3250, %v2748
  %v3252 = vadd.f32 %v3251, %v2750
  %v3253 = vadd.f32 %v3252, %v2752
  %v3254 = vadd.f32 %v3253, %v2754
  %v3255 = vadd.f32 %v3254, %v2756
  %v3256 = vadd.f32 %v3255, %v2758
  %v3257 = vadd.f32 %v3256, %v2760
  %v3258 = vadd.f32 %v3257, %v2762
  %v3259 = vadd.f32 %v3258, %v2764
  %v3260 = vadd.f32 %v3259, %v2766
  %v3261 = vadd.f32 %v3260, %v2768
  %v3262 = vadd.f32 %v3261, %v2770
  %v3263 = vrot.slane %v3262, 4
  %v3264 = vadd.f32 %v3262, %v3263
  %v3265 = vrot.slane %v3264, 2
  %v3266 = vadd.f32 %v3264, %v3265
  %v3267 = vrot.slane %v3266, 1
  %v3268 = vadd.f32 %v3266, %v3267
  %v3269 = vadd.f32 %v2709, %v2711
  %v3270 = vadd.f32 %v3269, %v2713
  %v3271 = vadd.f32 %v3270, %v2715
  %v3272 = vadd.f32 %v3271, %v2717
  %v3273 = vadd.f32 %v3272, %v2719
  %v3274 = vadd.f32 %v3273, %v2721
  %v3275 = vadd.f32 %v3274, %v2723
  %v3276 = vadd.f32 %v3275, %v2725
  %v3277 = vadd.f32 %v3276, %v2727
  %v3278 = vadd.f32 %v3277, %v2729
  %v3279 = vadd.f32 %v3278, %v2731
  %v3280 = vadd.f32 %v3279, %v2733
  %v3281 = vadd.f32 %v3280, %v2735
  %v3282 = vadd.f32 %v3281, %v2737
  %v3283 = vadd.f32 %v3282, %v2739
  %v3284 = vadd.f32 %v3283, %v2741
  %v3285 = vadd.f32 %v3284, %v2743
  %v3286 = vadd.f32 %v3285, %v2745
  %v3287 = vadd.f32 %v3286, %v2747
  %v3288 = vadd.f32 %v3287, %v2749
  %v3289 = vadd.f32 %v3288, %v2751
  %v3290 = vadd.f32 %v3289, %v2753
  %v3291 = vadd.f32 %v3290, %v2755
  %v3292 = vadd.f32 %v3291, %v2757
  %v3293 = vadd.f32 %v3292, %v2759
  %v3294 = vadd.f32 %v3293, %v2761
  %v3295 = vadd.f32 %v3294, %v2763
  %v3296 = vadd.f32 %v3295, %v2765
  %v3297 = vadd.f32 %v3296, %v2767
  %v3298 = vadd.f32 %v3297, %v2769
  %v3299 = vadd.f32 %v3298, %v2771
  %v3300 = vrot.slane %v3299, 4
  %v3301 = vadd.f32 %v3299, %v3300
  %v3302 = vrot.slane %v3301, 2
  %v3303 = vadd.f32 %v3301, %v3302
  %v3304 = vrot.slane %v3303, 1
  %v3305 = vadd.f32 %v3303, %v3304
  %v3306 = vadd.f32 %v2772, %v2774
  %v3307 = vadd.f32 %v3306, %v2776
  %v3308 = vadd.f32 %v3307, %v2778
  %v3309 = vadd.f32 %v3308, %v2780
  %v3310 = vadd.f32 %v3309, %v2782
  %v3311 = vadd.f32 %v3310, %v2784
  %v3312 = vadd.f32 %v3311, %v2786
  %v3313 = vadd.f32 %v3312, %v2788
  %v3314 = vadd.f32 %v3313, %v2790
  %v3315 = vadd.f32 %v3314, %v2792
  %v3316 = vadd.f32 %v3315, %v2794
  %v3317 = vadd.f32 %v3316, %v2796
  %v3318 = vadd.f32 %v3317, %v2798
  %v3319 = vadd.f32 %v3318, %v2800
  %v3320 = vadd.f32 %v3319, %v2802
  %v3321 = vadd.f32 %v3320, %v2804
  %v3322 = vadd.f32 %v3321, %v2806
  %v3323 = vadd.f32 %v3322, %v2808
  %v3324 = vadd.f32 %v3323, %v2810
  %v3325 = vadd.f32 %v3324, %v2812
  %v3326 = vadd.f32 %v3325, %v2814
  %v3327 = vadd.f32 %v3326, %v2816
  %v3328 = vadd.f32 %v3327, %v2818
  %v3329 = vadd.f32 %v3328, %v2820
  %v3330 = vadd.f32 %v3329, %v2822
  %v3331 = vadd.f32 %v3330, %v2824
  %v3332 = vadd.f32 %v3331, %v2826
  %v3333 = vadd.f32 %v3332, %v2828
  %v3334 = vadd.f32 %v3333, %v2830
  %v3335 = vadd.f32 %v3334, %v2832
  %v3336 = vadd.f32 %v3335, %v2834
  %v3337 = vrot.slane %v3336, 4
  %v3338 = vadd.f32 %v3336, %v3337
  %v3339 = vrot.slane %v3338, 2
  %v3340 = vadd.f32 %v3338, %v3339
  %v3341 = vrot.slane %v3340, 1
  %v3342 = vadd.f32 %v3340, %v3341
  %v3343 = vadd.f32 %v2773, %v2775
  %v3344 = vadd.f32 %v3343, %v2777
  %v3345 = vadd.f32 %v3344, %v2779
  %v3346 = vadd.f32 %v3345, %v2781
  %v3347 = vadd.f32 %v3346, %v2783
  %v3348 = vadd.f32 %v3347, %v2785
  %v3349 = vadd.f32 %v3348, %v2787
  %v3350 = vadd.f32 %v3349, %v2789
  %v3351 = vadd.f32 %v3350, %v2791
  %v3352 = vadd.f32 %v3351, %v2793
  %v3353 = vadd.f32 %v3352, %v2795
  %v3354 = vadd.f32 %v3353, %v2797
  %v3355 = vadd.f32 %v3354, %v2799
  %v3356 = vadd.f32 %v3355, %v2801
  %v3357 = vadd.f32 %v3356, %v2803
  %v3358 = vadd.f32 %v3357, %v2805
  %v3359 = vadd.f32 %v3358, %v2807
  %v3360 = vadd.f32 %v3359, %v2809
  %v3361 = vadd.f32 %v3360, %v2811
  %v3362 = vadd.f32 %v3361, %v2813
  %v3363 = vadd.f32 %v3362, %v2815
  %v3364 = vadd.f32 %v3363, %v2817
  %v3365 = vadd.f32 %v3364, %v2819
  %v3366 = vadd.f32 %v3365, %v2821
  %v3367 = vadd.f32 %v3366, %v2823
  %v3368 = vadd.f32 %v3367, %v2825
  %v3369 = vadd.f32 %v3368, %v2827
  %v3370 = vadd.f32 %v3369, %v2829
  %v3371 = vadd.f32 %v3370, %v2831
  %v3372 = vadd.f32 %v3371, %v2833
  %v3373 = vadd.f32 %v3372, %v2835
  %v3374 = vrot.slane %v3373, 4
  %v3375 = vadd.f32 %v3373, %v3374
  %v3376 = vrot.slane %v3375, 2
  %v3377 = vadd.f32 %v3375, %v3376
  %v3378 = vrot.slane %v3377, 1
  %v3379 = vadd.f32 %v3377, %v3378
  %v3380 = vadd.f32 %v2836, %v2838
  %v3381 = vadd.f32 %v3380, %v2840
  %v3382 = vadd.f32 %v3381, %v2842
  %v3383 = vadd.f32 %v3382, %v2844
  %v3384 = vadd.f32 %v3383, %v2846
  %v3385 = vadd.f32 %v3384, %v2848
  %v3386 = vadd.f32 %v3385, %v2850
  %v3387 = vadd.f32 %v3386, %v2852
  %v3388 = vadd.f32 %v3387, %v2854
  %v3389 = vadd.f32 %v3388, %v2856
  %v3390 = vadd.f32 %v3389, %v2858
  %v3391 = vadd.f32 %v3390, %v2860
  %v3392 = vadd.f32 %v3391, %v2862
  %v3393 = vadd.f32 %v3392, %v2864
  %v3394 = vadd.f32 %v3393, %v2866
  %v3395 = vadd.f32 %v3394, %v2868
  %v3396 = vadd.f32 %v3395, %v2870
  %v3397 = vadd.f32 %v3396, %v2872
  %v3398 = vadd.f32 %v3397, %v2874
  %v3399 = vadd.f32 %v3398, %v2876
  %v3400 = vadd.f32 %v3399, %v2878
  %v3401 = vadd.f32 %v3400, %v2880
  %v3402 = vadd.f32 %v3401, %v2882
  %v3403 = vadd.f32 %v3402, %v2884
  %v3404 = vadd.f32 %v3403, %v2886
  %v3405 = vadd.f32 %v3404, %v2888
  %v3406 = vadd.f32 %v3405, %v2890
  %v3407 = vadd.f32 %v3406, %v2892
  %v3408 = vadd.f32 %v3407, %v2894
  %v3409 = vadd.f32 %v3408, %v2896
  %v3410 = vadd.f32 %v3409, %v2898
  %v3411 = vrot.slane %v3410, 4
  %v3412 = vadd.f32 %v3410, %v3411
  %v3413 = vrot.slane %v3412, 2
  %v3414 = vadd.f32 %v3412, %v3413
  %v3415 = vrot.slane %v3414, 1
  %v3416 = vadd.f32 %v3414, %v3415
  %v3417 = vadd.f32 %v2837, %v2839
  %v3418 = vadd.f32 %v3417, %v2841
  %v3419 = vadd.f32 %v3418, %v2843
  %v3420 = vadd.f32 %v3419, %v2845
  %v3421 = vadd.f32 %v3420, %v2847
  %v3422 = vadd.f32 %v3421, %v2849
  %v3423 = vadd.f32 %v3422, %v2851
  %v3424 = vadd.f32 %v3423, %v2853
  %v3425 = vadd.f32 %v3424, %v2855
  %v3426 = vadd.f32 %v3425, %v2857
  %v3427 = vadd.f32 %v3426, %v2859
  %v3428 = vadd.f32 %v3427, %v2861
  %v3429 = vadd.f32 %v3428, %v2863
  %v3430 = vadd.f32 %v3429, %v2865
  %v3431 = vadd.f32 %v3430, %v2867
  %v3432 = vadd.f32 %v3431, %v2869
  %v3433 = vadd.f32 %v3432, %v2871
  %v3434 = vadd.f32 %v3433, %v2873
  %v3435 = vadd.f32 %v3434, %v2875
  %v3436 = vadd.f32 %v3435, %v2877
  %v3437 = vadd.f32 %v3436, %v2879
  %v3438 = vadd.f32 %v3437, %v2881
  %v3439 = vadd.f32 %v3438, %v2883
  %v3440 = vadd.f32 %v3439, %v2885
  %v3441 = vadd.f32 %v3440, %v2887
  %v3442 = vadd.f32 %v3441, %v2889
  %v3443 = vadd.f32 %v3442, %v2891
  %v3444 = vadd.f32 %v3443, %v2893
  %v3445 = vadd.f32 %v3444, %v2895
  %v3446 = vadd.f32 %v3445, %v2897
  %v3447 = vadd.f32 %v3446, %v2899
  %v3448 = vrot.slane %v3447, 4
  %v3449 = vadd.f32 %v3447, %v3448
  %v3450 = vrot.slane %v3449, 2
  %v3451 = vadd.f32 %v3449, %v3450
  %v3452 = vrot.slane %v3451, 1
  %v3453 = vadd.f32 %v3451, %v3452
  %v3454 = vadd.f32 %v2900, %v2902
  %v3455 = vadd.f32 %v3454, %v2904
  %v3456 = vadd.f32 %v3455, %v2906
  %v3457 = vadd.f32 %v3456, %v2908
  %v3458 = vadd.f32 %v3457, %v2910
  %v3459 = vadd.f32 %v3458, %v2912
  %v3460 = vadd.f32 %v3459, %v2914
  %v3461 = vadd.f32 %v3460, %v2916
  %v3462 = vadd.f32 %v3461, %v2918
  %v3463 = vadd.f32 %v3462, %v2920
  %v3464 = vadd.f32 %v3463, %v2922
  %v3465 = vadd.f32 %v3464, %v2924
  %v3466 = vadd.f32 %v3465, %v2926
  %v3467 = vadd.f32 %v3466, %v2928
  %v3468 = vadd.f32 %v3467, %v2930
  %v3469 = vadd.f32 %v3468, %v2932
  %v3470 = vadd.f32 %v3469, %v2934
  %v3471 = vadd.f32 %v3470, %v2936
  %v3472 = vadd.f32 %v3471, %v2938
  %v3473 = vadd.f32 %v3472, %v2940
  %v3474 = vadd.f32 %v3473, %v2942
  %v3475 = vadd.f32 %v3474, %v2944
  %v3476 = vadd.f32 %v3475, %v2946
  %v3477 = vadd.f32 %v3476, %v2948
  %v3478 = vadd.f32 %v3477, %v2950
  %v3479 = vadd.f32 %v3478, %v2952
  %v3480 = vadd.f32 %v3479, %v2954
  %v3481 = vadd.f32 %v3480, %v2956
  %v3482 = vadd.f32 %v3481, %v2958
  %v3483 = vadd.f32 %v3482, %v2960
  %v3484 = vadd.f32 %v3483, %v2962
  %v3485 = vrot.slane %v3484, 4
  %v3486 = vadd.f32 %v3484, %v3485
  %v3487 = vrot.slane %v3486, 2
  %v3488 = vadd.f32 %v3486, %v3487
  %v3489 = vrot.slane %v3488, 1
  %v3490 = vadd.f32 %v3488, %v3489
  %v3491 = vadd.f32 %v2901, %v2903
  %v3492 = vadd.f32 %v3491, %v2905
  %v3493 = vadd.f32 %v3492, %v2907
  %v3494 = vadd.f32 %v3493, %v2909
  %v3495 = vadd.f32 %v3494, %v2911
  %v3496 = vadd.f32 %v3495, %v2913
  %v3497 = vadd.f32 %v3496, %v2915
  %v3498 = vadd.f32 %v3497, %v2917
  %v3499 = vadd.f32 %v3498, %v2919
  %v3500 = vadd.f32 %v3499, %v2921
  %v3501 = vadd.f32 %v3500, %v2923
  %v3502 = vadd.f32 %v3501, %v2925
  %v3503 = vadd.f32 %v3502, %v2927
  %v3504 = vadd.f32 %v3503, %v2929
  %v3505 = vadd.f32 %v3504, %v2931
  %v3506 = vadd.f32 %v3505, %v2933
  %v3507 = vadd.f32 %v3506, %v2935
  %v3508 = vadd.f32 %v3507, %v2937
  %v3509 = vadd.f32 %v3508, %v2939
  %v3510 = vadd.f32 %v3509, %v2941
  %v3511 = vadd.f32 %v3510, %v2943
  %v3512 = vadd.f32 %v3511, %v2945
  %v3513 = vadd.f32 %v3512, %v2947
  %v3514 = vadd.f32 %v3513, %v2949
  %v3515 = vadd.f32 %v3514, %v2951
  %v3516 = vadd.f32 %v3515, %v2953
  %v3517 = vadd.f32 %v3516, %v2955
  %v3518 = vadd.f32 %v3517, %v2957
  %v3519 = vadd.f32 %v3518, %v2959
  %v3520 = vadd.f32 %v3519, %v2961
  %v3521 = vadd.f32 %v3520, %v2963
  %v3522 = vrot.slane %v3521, 4
  %v3523 = vadd.f32 %v3521, %v3522
  %v3524 = vrot.slane %v3523, 2
  %v3525 = vadd.f32 %v3523, %v3524
  %v3526 = vrot.slane %v3525, 1
  %v3527 = vadd.f32 %v3525, %v3526
  %v3528 = vadd.f32 %v2964, %v2966
  %v3529 = vadd.f32 %v3528, %v2968
  %v3530 = vadd.f32 %v3529, %v2970
  %v3531 = vadd.f32 %v3530, %v2972
  %v3532 = vadd.f32 %v3531, %v2974
  %v3533 = vadd.f32 %v3532, %v2976
  %v3534 = vadd.f32 %v3533, %v2978
  %v3535 = vadd.f32 %v3534, %v2980
  %v3536 = vadd.f32 %v3535, %v2982
  %v3537 = vadd.f32 %v3536, %v2984
  %v3538 = vadd.f32 %v3537, %v2986
  %v3539 = vadd.f32 %v3538, %v2988
  %v3540 = vadd.f32 %v3539, %v2990
  %v3541 = vadd.f32 %v3540, %v2992
  %v3542 = vadd.f32 %v3541, %v2994
  %v3543 = vadd.f32 %v3542, %v2996
  %v3544 = vadd.f32 %v3543, %v2998
  %v3545 = vadd.f32 %v3544, %v3000
  %v3546 = vadd.f32 %v3545, %v3002
  %v3547 = vadd.f32 %v3546, %v3004
  %v3548 = vadd.f32 %v3547, %v3006
  %v3549 = vadd.f32 %v3548, %v3008
  %v3550 = vadd.f32 %v3549, %v3010
  %v3551 = vadd.f32 %v3550, %v3012
  %v3552 = vadd.f32 %v3551, %v3014
  %v3553 = vadd.f32 %v3552, %v3016
  %v3554 = vadd.f32 %v3553, %v3018
  %v3555 = vadd.f32 %v3554, %v3020
  %v3556 = vadd.f32 %v3555, %v3022
  %v3557 = vadd.f32 %v3556, %v3024
  %v3558 = vadd.f32 %v3557, %v3026
  %v3559 = vrot.slane %v3558, 4
  %v3560 = vadd.f32 %v3558, %v3559
  %v3561 = vrot.slane %v3560, 2
  %v3562 = vadd.f32 %v3560, %v3561
  %v3563 = vrot.slane %v3562, 1
  %v3564 = vadd.f32 %v3562, %v3563
  %v3565 = vadd.f32 %v2965, %v2967
  %v3566 = vadd.f32 %v3565, %v2969
  %v3567 = vadd.f32 %v3566, %v2971
  %v3568 = vadd.f32 %v3567, %v2973
  %v3569 = vadd.f32 %v3568, %v2975
  %v3570 = vadd.f32 %v3569, %v2977
  %v3571 = vadd.f32 %v3570, %v2979
  %v3572 = vadd.f32 %v3571, %v2981
  %v3573 = vadd.f32 %v3572, %v2983
  %v3574 = vadd.f32 %v3573, %v2985
  %v3575 = vadd.f32 %v3574, %v2987
  %v3576 = vadd.f32 %v3575, %v2989
  %v3577 = vadd.f32 %v3576, %v2991
  %v3578 = vadd.f32 %v3577, %v2993
  %v3579 = vadd.f32 %v3578, %v2995
  %v3580 = vadd.f32 %v3579, %v2997
  %v3581 = vadd.f32 %v3580, %v2999
  %v3582 = vadd.f32 %v3581, %v3001
  %v3583 = vadd.f32 %v3582, %v3003
  %v3584 = vadd.f32 %v3583, %v3005
  %v3585 = vadd.f32 %v3584, %v3007
  %v3586 = vadd.f32 %v3585, %v3009
  %v3587 = vadd.f32 %v3586, %v3011
  %v3588 = vadd.f32 %v3587, %v3013
  %v3589 = vadd.f32 %v3588, %v3015
  %v3590 = vadd.f32 %v3589, %v3017
  %v3591 = vadd.f32 %v3590, %v3019
  %v3592 = vadd.f32 %v3591, %v3021
  %v3593 = vadd.f32 %v3592, %v3023
  %v3594 = vadd.f32 %v3593, %v3025
  %v3595 = vadd.f32 %v3594, %v3027
  %v3596 = vrot.slane %v3595, 4
  %v3597 = vadd.f32 %v3595, %v3596
  %v3598 = vrot.slane %v3597, 2
  %v3599 = vadd.f32 %v3597, %v3598
  %v3600 = vrot.slane %v3599, 1
  %v3601 = vadd.f32 %v3599, %v3600
  %v3602 = vadd.f32 %v3028, %v3030
  %v3603 = vadd.f32 %v3602, %v3032
  %v3604 = vadd.f32 %v3603, %v3034
  %v3605 = vadd.f32 %v3604, %v3036
  %v3606 = vadd.f32 %v3605, %v3038
  %v3607 = vadd.f32 %v3606, %v3040
  %v3608 = vadd.f32 %v3607, %v3042
  %v3609 = vadd.f32 %v3608, %v3044
  %v3610 = vadd.f32 %v3609, %v3046
  %v3611 = vadd.f32 %v3610, %v3048
  %v3612 = vadd.f32 %v3611, %v3050
  %v3613 = vadd.f32 %v3612, %v3052
  %v3614 = vadd.f32 %v3613, %v3054
  %v3615 = vadd.f32 %v3614, %v3056
  %v3616 = vadd.f32 %v3615, %v3058
  %v3617 = vadd.f32 %v3616, %v3060
  %v3618 = vadd.f32 %v3617, %v3062
  %v3619 = vadd.f32 %v3618, %v3064
  %v3620 = vadd.f32 %v3619, %v3066
  %v3621 = vadd.f32 %v3620, %v3068
  %v3622 = vadd.f32 %v3621, %v3070
  %v3623 = vadd.f32 %v3622, %v3072
  %v3624 = vadd.f32 %v3623, %v3074
  %v3625 = vadd.f32 %v3624, %v3076
  %v3626 = vadd.f32 %v3625, %v3078
  %v3627 = vadd.f32 %v3626, %v3080
  %v3628 = vadd.f32 %v3627, %v3082
  %v3629 = vadd.f32 %v3628, %v3084
  %v3630 = vadd.f32 %v3629, %v3086
  %v3631 = vadd.f32 %v3630, %v3088
  %v3632 = vadd.f32 %v3631, %v3090
  %v3633 = vrot.slane %v3632, 4
  %v3634 = vadd.f32 %v3632, %v3633
  %v3635 = vrot.slane %v3634, 2
  %v3636 = vadd.f32 %v3634, %v3635
  %v3637 = vrot.slane %v3636, 1
  %v3638 = vadd.f32 %v3636, %v3637
  %v3639 = vadd.f32 %v3029, %v3031
  %v3640 = vadd.f32 %v3639, %v3033
  %v3641 = vadd.f32 %v3640, %v3035
  %v3642 = vadd.f32 %v3641, %v3037
  %v3643 = vadd.f32 %v3642, %v3039
  %v3644 = vadd.f32 %v3643, %v3041
  %v3645 = vadd.f32 %v3644, %v3043
  %v3646 = vadd.f32 %v3645, %v3045
  %v3647 = vadd.f32 %v3646, %v3047
  %v3648 = vadd.f32 %v3647, %v3049
  %v3649 = vadd.f32 %v3648, %v3051
  %v3650 = vadd.f32 %v3649, %v3053
  %v3651 = vadd.f32 %v3650, %v3055
  %v3652 = vadd.f32 %v3651, %v3057
  %v3653 = vadd.f32 %v3652, %v3059
  %v3654 = vadd.f32 %v3653, %v3061
  %v3655 = vadd.f32 %v3654, %v3063
  %v3656 = vadd.f32 %v3655, %v3065
  %v3657 = vadd.f32 %v3656, %v3067
  %v3658 = vadd.f32 %v3657, %v3069
  %v3659 = vadd.f32 %v3658, %v3071
  %v3660 = vadd.f32 %v3659, %v3073
  %v3661 = vadd.f32 %v3660, %v3075
  %v3662 = vadd.f32 %v3661, %v3077
  %v3663 = vadd.f32 %v3662, %v3079
  %v3664 = vadd.f32 %v3663, %v3081
  %v3665 = vadd.f32 %v3664, %v3083
  %v3666 = vadd.f32 %v3665, %v3085
  %v3667 = vadd.f32 %v3666, %v3087
  %v3668 = vadd.f32 %v3667, %v3089
  %v3669 = vadd.f32 %v3668, %v3091
  %v3670 = vrot.slane %v3669, 4
  %v3671 = vadd.f32 %v3669, %v3670
  %v3672 = vrot.slane %v3671, 2
  %v3673 = vadd.f32 %v3671, %v3672
  %v3674 = vrot.slane %v3673, 1
  %v3675 = vadd.f32 %v3673, %v3674
  %v3676 = vadd.f32 %v3092, %v3094
  %v3677 = vadd.f32 %v3676, %v3096
  %v3678 = vadd.f32 %v3677, %v3098
  %v3679 = vadd.f32 %v3678, %v3100
  %v3680 = vadd.f32 %v3679, %v3102
  %v3681 = vadd.f32 %v3680, %v3104
  %v3682 = vadd.f32 %v3681, %v3106
  %v3683 = vadd.f32 %v3682, %v3108
  %v3684 = vadd.f32 %v3683, %v3110
  %v3685 = vadd.f32 %v3684, %v3112
  %v3686 = vadd.f32 %v3685, %v3114
  %v3687 = vadd.f32 %v3686, %v3116
  %v3688 = vadd.f32 %v3687, %v3118
  %v3689 = vadd.f32 %v3688, %v3120
  %v3690 = vadd.f32 %v3689, %v3122
  %v3691 = vadd.f32 %v3690, %v3124
  %v3692 = vadd.f32 %v3691, %v3126
  %v3693 = vadd.f32 %v3692, %v3128
  %v3694 = vadd.f32 %v3693, %v3130
  %v3695 = vadd.f32 %v3694, %v3132
  %v3696 = vadd.f32 %v3695, %v3134
  %v3697 = vadd.f32 %v3696, %v3136
  %v3698 = vadd.f32 %v3697, %v3138
  %v3699 = vadd.f32 %v3698, %v3140
  %v3700 = vadd.f32 %v3699, %v3142
  %v3701 = vadd.f32 %v3700, %v3144
  %v3702 = vadd.f32 %v3701, %v3146
  %v3703 = vadd.f32 %v3702, %v3148
  %v3704 = vadd.f32 %v3703, %v3150
  %v3705 = vadd.f32 %v3704, %v3152
  %v3706 = vadd.f32 %v3705, %v3154
  %v3707 = vrot.slane %v3706, 4
  %v3708 = vadd.f32 %v3706, %v3707
  %v3709 = vrot.slane %v3708, 2
  %v3710 = vadd.f32 %v3708, %v3709
  %v3711 = vrot.slane %v3710, 1
  %v3712 = vadd.f32 %v3710, %v3711
  %v3713 = vadd.f32 %v3093, %v3095
  %v3714 = vadd.f32 %v3713, %v3097
  %v3715 = vadd.f32 %v3714, %v3099
  %v3716 = vadd.f32 %v3715, %v3101
  %v3717 = vadd.f32 %v3716, %v3103
  %v3718 = vadd.f32 %v3717, %v3105
  %v3719 = vadd.f32 %v3718, %v3107
  %v3720 = vadd.f32 %v3719, %v3109
  %v3721 = vadd.f32 %v3720, %v3111
  %v3722 = vadd.f32 %v3721, %v3113
  %v3723 = vadd.f32 %v3722, %v3115
  %v3724 = vadd.f32 %v3723, %v3117
  %v3725 = vadd.f32 %v3724, %v3119
  %v3726 = vadd.f32 %v3725, %v3121
  %v3727 = vadd.f32 %v3726, %v3123
  %v3728 = vadd.f32 %v3727, %v3125
  %v3729 = vadd.f32 %v3728, %v3127
  %v3730 = vadd.f32 %v3729, %v3129
  %v3731 = vadd.f32 %v3730, %v3131
  %v3732 = vadd.f32 %v3731, %v3133
  %v3733 = vadd.f32 %v3732, %v3135
  %v3734 = vadd.f32 %v3733, %v3137
  %v3735 = vadd.f32 %v3734, %v3139
  %v3736 = vadd.f32 %v3735, %v3141
  %v3737 = vadd.f32 %v3736, %v3143
  %v3738 = vadd.f32 %v3737, %v3145
  %v3739 = vadd.f32 %v3738, %v3147
  %v3740 = vadd.f32 %v3739, %v3149
  %v3741 = vadd.f32 %v3740, %v3151
  %v3742 = vadd.f32 %v3741, %v3153
  %v3743 = vadd.f32 %v3742, %v3155
  %v3744 = vrot.slane %v3743, 4
  %v3745 = vadd.f32 %v3743, %v3744
  %v3746 = vrot.slane %v3745, 2
  %v3747 = vadd.f32 %v3745, %v3746
  %v3748 = vrot.slane %v3747, 1
  %v3749 = vadd.f32 %v3747, %v3748
  %vm3766 = vcmask 1041409
  %v3767 = vsel %vm3766, %v3268, %v3194
  %vm3768 = vcmask 1042434
  %v3769 = vsel %vm3768, %v3342, %v3767
  %vm3770 = vcmask 1043459
  %v3771 = vsel %vm3770, %v3416, %v3769
  %vm3772 = vcmask 1044484
  %v3773 = vsel %vm3772, %v3490, %v3771
  %vm3774 = vcmask 1045509
  %v3775 = vsel %vm3774, %v3564, %v3773
  %vm3776 = vcmask 1046534
  %v3777 = vsel %vm3776, %v3638, %v3775
  %vm3778 = vcmask 1047559
  %v3779 = vsel %vm3778, %v3712, %v3777
  %v3780 = vsel %vm3766, %v3305, %v3231
  %v3781 = vsel %vm3768, %v3379, %v3780
  %v3782 = vsel %vm3770, %v3453, %v3781
  %v3783 = vsel %vm3772, %v3527, %v3782
  %v3784 = vsel %vm3774, %v3601, %v3783
  %v3785 = vsel %vm3776, %v3675, %v3784
  %v3786 = vsel %vm3778, %v3749, %v3785
  %v3789 = vadd.f32 %v3156, %v3779
  %v3790 = vadd.f32 %v3157, %v3786
  %3791 = vst [vmem:[#allocation2] sm:$0xff] %v3789
  %3792 = vst [vmem:[#allocation2 + $0x8] sm:$0xff] %v3790
  // Predicated region
  $region22: #{create_model_forward.1} parent=0 // pred_check
    %p3793 = pneg %p20
  $region23: #{create_model_forward.1} parent=0 // pred_check_branch
    %3795 = sbr.rel (%p3793) target = $region25
  $region24: #{create_model_forward.1} parent=0 // pred_region
    %v3796 = vld [vmem:[#allocation2] sm:$0xff]
    %v3797 = vld [vmem:[#allocation2 + $0x8] sm:$0xff]
    %v3798 = vmul.f32 %v3796, 0.00390625
    %v3799 = vmul.f32 %v3797, 0.00390625
    %3800 = vst [vmem:[%s4] sm:$0xff] %v3798
    %3801 = vst [vmem:[%s4 + $0x8] sm:$0xff] %v3799
    %v3802 = vpack.c.bf16 %v3798, %v3798
    %v3803 = vpack.c.bf16 %v3799, %v3799
    %v3804 = vld [vmem:[%s2] sm:$0xff]
    %v3805 = vld [vmem:[%s2 + $0x8] sm:$0xff]
    %v3806 = vld [vmem:[%s2 + $0x10] sm:$0xff]
    %v3807 = vld [vmem:[%s2 + $0x18] sm:$0xff]
    %v3808 = vld [vmem:[%s2 + $0x20] sm:$0xff]
    %v3809 = vld [vmem:[%s2 + $0x28] sm:$0xff]
    %v3810 = vld [vmem:[%s2 + $0x30] sm:$0xff]
    %v3811 = vld [vmem:[%s2 + $0x38] sm:$0xff]
    %v3812 = vld [vmem:[%s2 + $0x40] sm:$0xff]
    %v3813 = vld [vmem:[%s2 + $0x48] sm:$0xff]
    %v3814 = vld [vmem:[%s2 + $0x50] sm:$0xff]
    %v3815 = vld [vmem:[%s2 + $0x58] sm:$0xff]
    %v3816 = vld [vmem:[%s2 + $0x60] sm:$0xff]
    %v3817 = vld [vmem:[%s2 + $0x68] sm:$0xff]
    %v3818 = vld [vmem:[%s2 + $0x70] sm:$0xff]
    %v3819 = vld [vmem:[%s2 + $0x78] sm:$0xff]
    %v3820 = vld [vmem:[%s2 + $0x80] sm:$0xff]
    %v3821 = vld [vmem:[%s2 + $0x88] sm:$0xff]
    %v3822 = vld [vmem:[%s2 + $0x90] sm:$0xff]
    %v3823 = vld [vmem:[%s2 + $0x98] sm:$0xff]
    %v3824 = vld [vmem:[%s2 + $0xa0] sm:$0xff]
    %v3825 = vld [vmem:[%s2 + $0xa8] sm:$0xff]
    %v3826 = vld [vmem:[%s2 + $0xb0] sm:$0xff]
    %v3827 = vld [vmem:[%s2 + $0xb8] sm:$0xff]
    %v3828 = vld [vmem:[%s2 + $0xc0] sm:$0xff]
    %v3829 = vld [vmem:[%s2 + $0xc8] sm:$0xff]
    %v3830 = vld [vmem:[%s2 + $0xd0] sm:$0xff]
    %v3831 = vld [vmem:[%s2 + $0xd8] sm:$0xff]
    %v3832 = vld [vmem:[%s2 + $0xe0] sm:$0xff]
    %v3833 = vld [vmem:[%s2 + $0xe8] sm:$0xff]
    %v3834 = vld [vmem:[%s2 + $0xf0] sm:$0xff]
    %v3835 = vld [vmem:[%s2 + $0xf8] sm:$0xff]
    %v3868 = vunpack.c.l.b16 %v3804
    %v3869 = vunpack.c.h.b16 %v3804
    %v3870 = vunpack.c.l.b16 %v3805
    %v3871 = vunpack.c.h.b16 %v3805
    %v3872 = vunpack.c.l.b16 %v3806
    %v3873 = vunpack.c.h.b16 %v3806
    %v3874 = vunpack.c.l.b16 %v3807
    %v3875 = vunpack.c.h.b16 %v3807
    %v3876 = vunpack.c.l.b16 %v3808
    %v3877 = vunpack.c.h.b16 %v3808
    %v3878 = vunpack.c.l.b16 %v3809
    %v3879 = vunpack.c.h.b16 %v3809
    %v3880 = vunpack.c.l.b16 %v3810
    %v3881 = vunpack.c.h.b16 %v3810
    %v3882 = vunpack.c.l.b16 %v3811
    %v3883 = vunpack.c.h.b16 %v3811
    %v3884 = vunpack.c.l.b16 %v3812
    %v3885 = vunpack.c.h.b16 %v3812
    %v3886 = vunpack.c.l.b16 %v3813
    %v3887 = vunpack.c.h.b16 %v3813
    %v3888 = vunpack.c.l.b16 %v3814
    %v3889 = vunpack.c.h.b16 %v3814
    %v3890 = vunpack.c.l.b16 %v3815
    %v3891 = vunpack.c.h.b16 %v3815
    %v3892 = vunpack.c.l.b16 %v3816
    %v3893 = vunpack.c.h.b16 %v3816
    %v3894 = vunpack.c.l.b16 %v3817
    %v3895 = vunpack.c.h.b16 %v3817
    %v3896 = vunpack.c.l.b16 %v3818
    %v3897 = vunpack.c.h.b16 %v3818
    %v3898 = vunpack.c.l.b16 %v3819
    %v3899 = vunpack.c.h.b16 %v3819
    %v3900 = vunpack.c.l.b16 %v3820
    %v3901 = vunpack.c.h.b16 %v3820
    %v3902 = vunpack.c.l.b16 %v3821
    %v3903 = vunpack.c.h.b16 %v3821
    %v3904 = vunpack.c.l.b16 %v3822
    %v3905 = vunpack.c.h.b16 %v3822
    %v3906 = vunpack.c.l.b16 %v3823
    %v3907 = vunpack.c.h.b16 %v3823
    %v3908 = vunpack.c.l.b16 %v3824
    %v3909 = vunpack.c.h.b16 %v3824
    %v3910 = vunpack.c.l.b16 %v3825
    %v3911 = vunpack.c.h.b16 %v3825
    %v3912 = vunpack.c.l.b16 %v3826
    %v3913 = vunpack.c.h.b16 %v3826
    %v3914 = vunpack.c.l.b16 %v3827
    %v3915 = vunpack.c.h.b16 %v3827
    %v3916 = vunpack.c.l.b16 %v3828
    %v3917 = vunpack.c.h.b16 %v3828
    %v3918 = vunpack.c.l.b16 %v3829
    %v3919 = vunpack.c.h.b16 %v3829
    %v3920 = vunpack.c.l.b16 %v3830
    %v3921 = vunpack.c.h.b16 %v3830
    %v3922 = vunpack.c.l.b16 %v3831
    %v3923 = vunpack.c.h.b16 %v3831
    %v3924 = vunpack.c.l.b16 %v3832
    %v3925 = vunpack.c.h.b16 %v3832
    %v3926 = vunpack.c.l.b16 %v3833
    %v3927 = vunpack.c.h.b16 %v3833
    %v3928 = vunpack.c.l.b16 %v3834
    %v3929 = vunpack.c.h.b16 %v3834
    %v3930 = vunpack.c.l.b16 %v3835
    %v3931 = vunpack.c.h.b16 %v3835
    %v3932 = vpack.c.b16 %v3870, %v3868
    %v3933 = vpack.c.b16 %v3871, %v3869
    %v3934 = vpack.c.b16 %v3874, %v3872
    %v3935 = vpack.c.b16 %v3875, %v3873
    %v3936 = vpack.c.b16 %v3878, %v3876
    %v3937 = vpack.c.b16 %v3879, %v3877
    %v3938 = vpack.c.b16 %v3882, %v3880
    %v3939 = vpack.c.b16 %v3883, %v3881
    %v3940 = vpack.c.b16 %v3886, %v3884
    %v3941 = vpack.c.b16 %v3887, %v3885
    %v3942 = vpack.c.b16 %v3890, %v3888
    %v3943 = vpack.c.b16 %v3891, %v3889
    %v3944 = vpack.c.b16 %v3894, %v3892
    %v3945 = vpack.c.b16 %v3895, %v3893
    %v3946 = vpack.c.b16 %v3898, %v3896
    %v3947 = vpack.c.b16 %v3899, %v3897
    %v3948 = vpack.c.b16 %v3902, %v3900
    %v3949 = vpack.c.b16 %v3903, %v3901
    %v3950 = vpack.c.b16 %v3906, %v3904
    %v3951 = vpack.c.b16 %v3907, %v3905
    %v3952 = vpack.c.b16 %v3910, %v3908
    %v3953 = vpack.c.b16 %v3911, %v3909
    %v3954 = vpack.c.b16 %v3914, %v3912
    %v3955 = vpack.c.b16 %v3915, %v3913
    %v3956 = vpack.c.b16 %v3918, %v3916
    %v3957 = vpack.c.b16 %v3919, %v3917
    %v3958 = vpack.c.b16 %v3922, %v3920
    %v3959 = vpack.c.b16 %v3923, %v3921
    %v3960 = vpack.c.b16 %v3926, %v3924
    %v3961 = vpack.c.b16 %v3927, %v3925
    %v3962 = vpack.c.b16 %v3930, %v3928
    %v3963 = vpack.c.b16 %v3931, %v3929
    %3996 = vmatprep.subr.bf16.mxu0 %v3933
    %3997 = vmatpush1.bf16.msra.mxu0 %v3932
    %3998 = vmatprep.subr.bf16.mxu0 %v3935
    %3999 = vmatpush1.bf16.msra.mxu0 %v3934
    %4000 = vmatprep.subr.bf16.mxu0 %v3937
    %4001 = vmatpush1.bf16.msra.mxu0 %v3936
    %4002 = vmatprep.subr.bf16.mxu0 %v3939
    %4003 = vmatpush1.bf16.msra.mxu0 %v3938
    %4004 = vmatprep.subr.bf16.mxu0 %v3941
    %4005 = vmatpush1.bf16.msra.mxu0 %v3940
    %4006 = vmatprep.subr.bf16.mxu0 %v3943
    %4007 = vmatpush1.bf16.msra.mxu0 %v3942
    %4008 = vmatprep.subr.bf16.mxu0 %v3945
    %4009 = vmatpush1.bf16.msra.mxu0 %v3944
    %4010 = vmatprep.subr.bf16.mxu0 %v3947
    %4011 = vmatpush1.bf16.msra.mxu0 %v3946
    %4012 = vmatprep.subr.bf16.mxu0 %v3949
    %4013 = vmatpush1.bf16.msra.mxu0 %v3948
    %4014 = vmatprep.subr.bf16.mxu0 %v3951
    %4015 = vmatpush1.bf16.msra.mxu0 %v3950
    %4016 = vmatprep.subr.bf16.mxu0 %v3953
    %4017 = vmatpush1.bf16.msra.mxu0 %v3952
    %4018 = vmatprep.subr.bf16.mxu0 %v3955
    %4019 = vmatpush1.bf16.msra.mxu0 %v3954
    %4020 = vmatprep.subr.bf16.mxu0 %v3957
    %4021 = vmatpush1.bf16.msra.mxu0 %v3956
    %4022 = vmatprep.subr.bf16.mxu0 %v3959
    %4023 = vmatpush1.bf16.msra.mxu0 %v3958
    %4024 = vmatprep.subr.bf16.mxu0 %v3961
    %4025 = vmatpush1.bf16.msra.mxu0 %v3960
    %4026 = vmatprep.subr.bf16.mxu0 %v3963
    %4027 = vmatpush1.bf16.msra.mxu0 %v3962
    %4028 = vmatprep.mubr.bf16.mxu0 %v3803
    %4029 = vmatmul.mubr.bf16.gmra.mrb[0].mxu0 %v3802
    %v4030 = vpop.f32.mrb[0].mxu0
    %v4031 = vadd.f32 0.0, %v4030
    %v4032 = vpop.f32.mrb[0].mxu0
    %v4033 = vadd.f32 0.0, %v4032
    %v4034 = vpop.f32.mrb[0].mxu0
    %v4035 = vpop.f32.mrb[0].mxu0
    %4036 = vdwg.mxu0
    %v4037 = vmax.f32 %v4031, 0.0
    %v4038 = vmax.f32 %v4033, 0.0
    %v4039 = vpack.c.bf16 %v4037, %v4037
    %v4040 = vpack.c.bf16 %v4038, %v4038
    %v4041 = vld [vmem:[%s3] sm:$0xf]
    %v4042 = vld [vmem:[%s3 + $0x4] sm:$0xf]
    %v4043 = vld [vmem:[%s3 + $0x8] sm:$0xf]
    %v4044 = vld [vmem:[%s3 + $0xc] sm:$0xf]
    %v4045 = vld [vmem:[%s3 + $0x10] sm:$0xf]
    %v4046 = vld [vmem:[%s3 + $0x14] sm:$0xf]
    %v4047 = vld [vmem:[%s3 + $0x18] sm:$0xf]
    %v4048 = vld [vmem:[%s3 + $0x1c] sm:$0xf]
    %v4049 = vld [vmem:[%s3 + $0x20] sm:$0xf]
    %v4050 = vld [vmem:[%s3 + $0x24] sm:$0xf]
    %v4051 = vld [vmem:[%s3 + $0x28] sm:$0xf]
    %v4052 = vld [vmem:[%s3 + $0x2c] sm:$0xf]
    %v4053 = vld [vmem:[%s3 + $0x30] sm:$0xf]
    %v4054 = vld [vmem:[%s3 + $0x34] sm:$0xf]
    %v4055 = vld [vmem:[%s3 + $0x38] sm:$0xf]
    %v4056 = vld [vmem:[%s3 + $0x3c] sm:$0xf]
    %v4057 = vld [vmem:[%s3 + $0x40] sm:$0xf]
    %v4058 = vld [vmem:[%s3 + $0x44] sm:$0xf]
    %v4059 = vld [vmem:[%s3 + $0x48] sm:$0xf]
    %v4060 = vld [vmem:[%s3 + $0x4c] sm:$0xf]
    %v4061 = vld [vmem:[%s3 + $0x50] sm:$0xf]
    %v4062 = vld [vmem:[%s3 + $0x54] sm:$0xf]
    %v4063 = vld [vmem:[%s3 + $0x58] sm:$0xf]
    %v4064 = vld [vmem:[%s3 + $0x5c] sm:$0xf]
    %v4065 = vld [vmem:[%s3 + $0x60] sm:$0xf]
    %v4066 = vld [vmem:[%s3 + $0x64] sm:$0xf]
    %v4067 = vld [vmem:[%s3 + $0x68] sm:$0xf]
    %v4068 = vld [vmem:[%s3 + $0x6c] sm:$0xf]
    %v4069 = vld [vmem:[%s3 + $0x70] sm:$0xf]
    %v4070 = vld [vmem:[%s3 + $0x74] sm:$0xf]
    %v4071 = vld [vmem:[%s3 + $0x78] sm:$0xf]
    %v4072 = vld [vmem:[%s3 + $0x7c] sm:$0xf]
    %v4105 = vunpack.c.l.b16 %v4041
    %v4106 = vunpack.c.l.b16 %v4042
    %v4107 = vunpack.c.l.b16 %v4043
    %v4108 = vunpack.c.l.b16 %v4044
    %v4109 = vunpack.c.l.b16 %v4045
    %v4110 = vunpack.c.l.b16 %v4046
    %v4111 = vunpack.c.l.b16 %v4047
    %v4112 = vunpack.c.l.b16 %v4048
    %v4113 = vunpack.c.l.b16 %v4049
    %v4114 = vunpack.c.l.b16 %v4050
    %v4115 = vunpack.c.l.b16 %v4051
    %v4116 = vunpack.c.l.b16 %v4052
    %v4117 = vunpack.c.l.b16 %v4053
    %v4118 = vunpack.c.l.b16 %v4054
    %v4119 = vunpack.c.l.b16 %v4055
    %v4120 = vunpack.c.l.b16 %v4056
    %v4121 = vunpack.c.l.b16 %v4057
    %v4122 = vunpack.c.l.b16 %v4058
    %v4123 = vunpack.c.l.b16 %v4059
    %v4124 = vunpack.c.l.b16 %v4060
    %v4125 = vunpack.c.l.b16 %v4061
    %v4126 = vunpack.c.l.b16 %v4062
    %v4127 = vunpack.c.l.b16 %v4063
    %v4128 = vunpack.c.l.b16 %v4064
    %v4129 = vunpack.c.l.b16 %v4065
    %v4130 = vunpack.c.l.b16 %v4066
    %v4131 = vunpack.c.l.b16 %v4067
    %v4132 = vunpack.c.l.b16 %v4068
    %v4133 = vunpack.c.l.b16 %v4069
    %v4134 = vunpack.c.l.b16 %v4070
    %v4135 = vunpack.c.l.b16 %v4071
    %v4136 = vunpack.c.l.b16 %v4072
    %v4137 = vpack.c.b16 %v4106, %v4105
    %v4138 = vpack.c.b16 %v4108, %v4107
    %v4139 = vpack.c.b16 %v4110, %v4109
    %v4140 = vpack.c.b16 %v4112, %v4111
    %v4141 = vpack.c.b16 %v4114, %v4113
    %v4142 = vpack.c.b16 %v4116, %v4115
    %v4143 = vpack.c.b16 %v4118, %v4117
    %v4144 = vpack.c.b16 %v4120, %v4119
    %v4145 = vpack.c.b16 %v4122, %v4121
    %v4146 = vpack.c.b16 %v4124, %v4123
    %v4147 = vpack.c.b16 %v4126, %v4125
    %v4148 = vpack.c.b16 %v4128, %v4127
    %v4149 = vpack.c.b16 %v4130, %v4129
    %v4150 = vpack.c.b16 %v4132, %v4131
    %v4151 = vpack.c.b16 %v4134, %v4133
    %v4152 = vpack.c.b16 %v4136, %v4135
    %4169 = vmatprep.subr.bf16.mxu0 0
    %4170 = vmatpush1.bf16.msra.mxu0 %v4137
    %4171 = vmatprep.subr.bf16.mxu0 0
    %4172 = vmatpush1.bf16.msra.mxu0 %v4138
    %4173 = vmatprep.subr.bf16.mxu0 0
    %4174 = vmatpush1.bf16.msra.mxu0 %v4139
    %4175 = vmatprep.subr.bf16.mxu0 0
    %4176 = vmatpush1.bf16.msra.mxu0 %v4140
    %4177 = vmatprep.subr.bf16.mxu0 0
    %4178 = vmatpush1.bf16.msra.mxu0 %v4141
    %4179 = vmatprep.subr.bf16.mxu0 0
    %4180 = vmatpush1.bf16.msra.mxu0 %v4142
    %4181 = vmatprep.subr.bf16.mxu0 0
    %4182 = vmatpush1.bf16.msra.mxu0 %v4143
    %4183 = vmatprep.subr.bf16.mxu0 0
    %4184 = vmatpush1.bf16.msra.mxu0 %v4144
    %4185 = vmatprep.subr.bf16.mxu0 0
    %4186 = vmatpush1.bf16.msra.mxu0 %v4145
    %4187 = vmatprep.subr.bf16.mxu0 0
    %4188 = vmatpush1.bf16.msra.mxu0 %v4146
    %4189 = vmatprep.subr.bf16.mxu0 0
    %4190 = vmatpush1.bf16.msra.mxu0 %v4147
    %4191 = vmatprep.subr.bf16.mxu0 0
    %4192 = vmatpush1.bf16.msra.mxu0 %v4148
    %4193 = vmatprep.subr.bf16.mxu0 0
    %4194 = vmatpush1.bf16.msra.mxu0 %v4149
    %4195 = vmatprep.subr.bf16.mxu0 0
    %4196 = vmatpush1.bf16.msra.mxu0 %v4150
    %4197 = vmatprep.subr.bf16.mxu0 0
    %4198 = vmatpush1.bf16.msra.mxu0 %v4151
    %4199 = vmatprep.subr.bf16.mxu0 0
    %4200 = vmatpush1.bf16.msra.mxu0 %v4152
    %4201 = vmatprep.mubr.bf16.mxu0 %v4040
    %4202 = vmatmul.mubr.bf16.gmra.mrb[0].mxu0 %v4039
    %v4203 = vpop.f32.mrb[0].mxu0
    %v4204 = vadd.f32 0.0, %v4203
    %v4205 = vpop.f32.mrb[0].mxu0
    %v4206 = vpop.f32.mrb[0].mxu0
    %v4207 = vpop.f32.mrb[0].mxu0
    %4208 = vdwg.mxu0
    %4209 = vst [vmem:[%s5] sm:$0xff] %v4204
  $region25: #{create_model_forward.1} parent=0 // pred_fallthru
    _
  // Predicated region
  $region26: #{create_model_forward.1} parent=0 // pred_check
    _
  $region27: #{create_model_forward.1} parent=0 // pred_check_branch
    %4211 = sbr.rel (0) target = $region29
  $region28: #{create_model_forward.1} parent=0 // pred_region
    _
  $region29: #{create_model_forward.1} parent=0 // pred_fallthru
    _
  // Predicated region
  $region30: #{create_model_forward.1} parent=0 // pred_check
    _
  $region31: #{create_model_forward.1} parent=0 // pred_check_branch
    %4213 = sbr.rel (0) target = $region33
  $region32: #{create_model_forward.1} parent=0 // pred_region
    _
  $region33: #{create_model_forward.1} parent=0 // pred_fallthru
    _
  // Predicated region
  $region34: #{create_model_forward.1} parent=0 // pred_check
    _
  $region35: #{create_model_forward.1} parent=0 // pred_check_branch
    %4215 = sbr.rel (0) target = $region37
  $region36: #{create_model_forward.1} parent=0 // pred_region
    _
  $region37: #{create_model_forward.1} parent=0 // pred_fallthru
    _
  // Predicated region
  $region38: #{create_model_forward.1} parent=0 // pred_check
    _
  $region39: #{create_model_forward.1} parent=0 // pred_check_branch
    %4217 = sbr.rel (0) target = $region41
  $region40: #{create_model_forward.1} parent=0 // pred_region
    _
  $region41: #{create_model_forward.1} parent=0 // pred_fallthru
    _

</llo_original>
